<compile_context>
chip_gen: v6e
topology: v6e:2x2x1
jax: 0.10.0
libtpu: 0.0.40
codegen_flags: <defaults>
</compile_context>

<pallas_src>
import jax
import jax.numpy as jnp
from jax import lax
from jax.experimental import pallas as pl
from jax.experimental.pallas import tpu as pltpu


def _round_up(x, m):
    return ((x + m - 1) // m) * m


# ----------------------------------------------------------------------------
# Pallas kernels
# ----------------------------------------------------------------------------
def _conv_lrelu_kernel(p_ref, w_ref, shift_ref, o_ref, acc_ref):
    """(tm, tk) @ (tk, Co) accumulated over the K grid axis; folded-bias/BN
    shift + LeakyReLU(0.2) epilogue on the last K step."""
    @pl.when(pl.program_id(1) == 0)
    def _():
        acc_ref[...] = jnp.zeros_like(acc_ref)

    acc_ref[...] += jnp.dot(p_ref[...], w_ref[...],
                            preferred_element_type=jnp.float32)

    @pl.when(pl.program_id(1) == pl.num_programs(1) - 1)
    def _():
        y = acc_ref[...] + shift_ref[...]
        o_ref[...] = jnp.where(y >= 0.0, y, 0.2 * y).astype(o_ref.dtype)


def _final_fused_kernel(p_ref, w_ref, shift_ref, hw_ref, hb_ref, o_ref):
    """Layer-4 conv GEMM + shift + LeakyReLU fused with the 4x4 head conv
    (a per-batch full-spatial contraction) + numerically stable sigmoid.
    Rows of p_ref are ordered (n, oh, ow) with 16 spatial rows per batch."""
    acc = jnp.dot(p_ref[...], w_ref[...], preferred_element_type=jnp.float32)
    y = acc + shift_ref[...]
    y = jnp.where(y >= 0.0, y, 0.2 * y)                  # (M, C4), M = N*16
    z = y * hw_ref[...]                                  # head weight, pre-tiled
    m, c = z.shape
    n = m // 16
    s = jnp.sum(z.reshape(n, 16, c), axis=-1)            # (N, 16)
    logit = jnp.sum(s, axis=-1, keepdims=True) + hb_ref[...]   # (N, 1)
    e = jnp.exp(-jnp.abs(logit))                         # stable sigmoid
    o_ref[...] = jnp.where(logit >= 0.0, 1.0 / (1.0 + e), e / (1.0 + e))


# ----------------------------------------------------------------------------
# JAX glue: NHWC im2col + per-layer wrappers around pallas_call
# ----------------------------------------------------------------------------
def _im2col_nhwc(x, kh, kw, stride, pad):
    """x: (N, H, W, C) -> patches (N*Ho*Wo, kh*kw*C), feature order (kh,kw,C)."""
    n, h, w, c = x.shape
    xp = jnp.pad(x, ((0, 0), (pad, pad), (pad, pad), (0, 0)))
    ho = (h + 2 * pad - kh) // stride + 1
    wo = (w + 2 * pad - kw) // stride + 1
    cols = []
    for i in range(kh):
        for j in range(kw):
            cols.append(xp[:, i:i + stride * ho:stride,
                           j:j + stride * wo:stride, :])      # (N, Ho, Wo, C)
    patches = jnp.concatenate(cols, axis=-1)                  # (N, Ho, Wo, kh*kw*C)
    return patches.reshape(n * ho * wo, kh * kw * c), ho, wo


def _pick_tile(m, kpad, elem_bytes=2, block_budget=6 << 20):
    """Largest row tile (>=16 rows, bf16 vreg-friendly) that divides M, fits
    the VMEM budget, and (if possible) yields grid >= 2 for megacore."""
    candidates = [c for c in (1024, 512, 256, 128, 64, 32, 16)
                  if m % c == 0 and c * kpad * elem_bytes <= block_budget]
    for c in candidates:
        if m // c >= 2:
            return c
    if candidates:
        return candidates[0]
    return m   # tiny / awkward M: full extent


def _pick_k_tile(kpad, cap=2048):
    """Largest multiple of 128 that divides kpad and is <= cap."""
    for t in range(min(cap, kpad), 0, -128):
        if kpad % t == 0:
            return t
    return kpad


def conv_lrelu_layer(x, layer):
    """One Conv2d (+ folded bias/BN) + LeakyReLU.  x NHWC, real channels."""
    n = x.shape[0]
    ks, stride, pad = layer["ks"], layer["stride"], layer["pad"]
    kpad, k_real, cout = layer["kpad"], layer["k_real"], layer["cout"]

    patches, ho, wo = _im2col_nhwc(x, ks, ks, stride, pad)
    m = patches.shape[0]
    if k_real < kpad:                                  # lane-pad K only
        patches = jnp.pad(patches, ((0, 0), (0, kpad - k_real)))

    tm = _pick_tile(m, kpad)
    tk = _pick_k_tile(kpad)

    ws = 2 * (tm * tk + tk * cout + tm * cout) * 2 + tm * cout * 4 + 4 * cout
    cost = pl.CostEstimate(
        flops=2 * m * k_real * cout,
        transcendentals=0,
        bytes_accessed=(m * k_real + kpad * cout + m * cout) * 2 + 4 * cout)

    out = pl.pallas_call(
        _conv_lrelu_kernel,
        out_shape=jax.ShapeDtypeStruct((m, cout), jnp.bfloat16),
        grid=(m // tm, kpad // tk),
        in_specs=[
            pl.BlockSpec((tm, tk), lambda i, k: (i, k)),
            pl.BlockSpec((tk, cout), lambda i, k: (k, 0)),
            pl.BlockSpec((1, cout), lambda i, k: (0, 0)),
        ],
        out_specs=pl.BlockSpec((tm, cout), lambda i, k: (i, 0)),
        scratch_shapes=[pltpu.VMEM((tm, cout), jnp.float32)],
        compiler_params=pltpu.CompilerParams(
            dimension_semantics=("parallel", "arbitrary"),
            vmem_limit_bytes=int(min(max(2 * ws, 16 << 20), 48 << 20))),
        cost_estimate=cost,
    )(patches, layer["wm"], layer["shift"])

    return out.reshape(n, ho, wo, cout)                # NHWC, real channels


def final_fused_layer(x, fin):
    """Layer 4 (conv+BN+LeakyReLU) fused with the 4x4 head conv + Sigmoid."""
    n = x.shape[0]
    ks, stride, pad = fin["ks"], fin["stride"], fin["pad"]
    kpad, k_real, c4 = fin["kpad"], fin["k_real"], fin["cout"]

    patches, ho, wo = _im2col_nhwc(x, ks, ks, stride, pad)
    m = patches.shape[0]                               # N * 16 (4x4 spatial)
    if k_real < kpad:
        patches = jnp.pad(patches, ((0, 0), (0, kpad - k_real)))
    hw_tiled = jnp.tile(fin["hw"], (n, 1))             # (M, C4) f32

    cost = pl.CostEstimate(
        flops=2 * m * k_real * c4 + 3 * m * c4,
        transcendentals=n,
        bytes_accessed=(m * kpad + kpad * c4) * 2 + (m * c4 + c4 + 1 + n) * 4)

    out = pl.pallas_call(
        _final_fused_kernel,
        out_shape=jax.ShapeDtypeStruct((n, 1), jnp.float32),
        grid=(1,),
        in_specs=[
            pl.BlockSpec((m, kpad), lambda i: (0, 0)),
            pl.BlockSpec((kpad, c4), lambda i: (0, 0)),
            pl.BlockSpec((1, c4), lambda i: (0, 0)),
            pl.BlockSpec((m, c4), lambda i: (0, 0)),
            pl.BlockSpec((1, 1), lambda i: (0, 0)),
        ],
        out_specs=pl.BlockSpec((n, 1), lambda i: (0, 0)),
        compiler_params=pltpu.CompilerParams(
            dimension_semantics=("arbitrary",)),
        cost_estimate=cost,
    )(patches, fin["wm"], fin["shift"], hw_tiled, fin["hb"])

    return out.reshape(n)


# ----------------------------------------------------------------------------
# Parameters: raw (for the reference) + GEMM-ready folded matrices.
# ----------------------------------------------------------------------------
def init_discriminator_params(key, in_dim=3, dim=8):
    layer_defs = [
        (in_dim,  dim,     5, 2, 2, False),
        (dim,     dim * 2, 5, 2, 2, True),
        (dim * 2, dim * 4, 5, 2, 2, True),
        (dim * 4, dim * 8, 5, 2, 2, True),
    ]
    convs, ref_convs = [], []
    for (cin, cout, ks, st, pd, bn) in layer_defs:
        key, kw_, kb_, kg_, kbe_, km_, kv_ = jax.random.split(key, 7)
        w = 0.02 * jax.random.normal(kw_, (cout, cin, ks, ks), jnp.float32)
        b = 0.01 * jax.random.normal(kb_, (cout,), jnp.float32)
        if bn:
            # TODO(synk): BatchNorm folded in eval mode (running statistics).
            gamma = 1.0 + 0.05 * jax.random.normal(kg_, (cout,), jnp.float32)
            beta = 0.05 * jax.random.normal(kbe_, (cout,), jnp.float32)
            r_mean = 0.05 * jax.random.normal(km_, (cout,), jnp.float32)
            r_var = 1.0 + 0.05 * jax.random.uniform(kv_, (cout,), jnp.float32)
            inv = gamma / jnp.sqrt(r_var + 1e-5)
            scale = inv
            shift = (b - r_mean) * inv + beta
        else:
            scale = jnp.ones((cout,), jnp.float32)
            shift = b
        ref_convs.append(dict(w=w, scale=scale, shift=shift, stride=st, pad=pd))

        # (Co,Ci,kh,kw) -> (kh,kw,Ci,Co), fold scale, flatten K=kh*kw*Ci (real
        # channels), zero-pad K to a 128 multiple.  Output width = real Co.
        wt = jnp.transpose(w, (2, 3, 1, 0)) * scale[None, None, None, :]
        k_real = ks * ks * cin
        kpad = _round_up(k_real, 128)
        wm = wt.reshape(k_real, cout)
        wm = jnp.pad(wm, ((0, kpad - k_real), (0, 0))).astype(jnp.bfloat16)
        convs.append(dict(wm=wm,
                          shift=shift.reshape(1, cout).astype(jnp.float32),
                          ks=ks, stride=st, pad=pd,
                          kpad=kpad, k_real=k_real, cin=cin, cout=cout))

    # Head: Conv2d(dim*8, 1, 4) + Sigmoid -> fused into the last conv kernel.
    key, kw_, kb_ = jax.random.split(key, 3)
    w5 = 0.02 * jax.random.normal(kw_, (1, dim * 8, 4, 4), jnp.float32)
    b5 = 0.01 * jax.random.normal(kb_, (1,), jnp.float32)
    hw = jnp.transpose(w5[0], (1, 2, 0)).reshape(16, dim * 8)   # rows = oh*4+ow
    final = dict(convs[-1])
    final["hw"] = hw.astype(jnp.float32)
    final["hb"] = b5.reshape(1, 1).astype(jnp.float32)

    return dict(convs=convs[:-1], final=final,
                ref=dict(convs=ref_convs, head_w=w5, head_b=b5))


# ----------------------------------------------------------------------------
# Forward passes
# ----------------------------------------------------------------------------
def discriminator_forward(params, x_nchw):
    """x: (N, 3, 64, 64) NCHW float32 -> (N,) in [0, 1]."""
    x = jnp.transpose(x_nchw, (0, 2, 3, 1)).astype(jnp.bfloat16)   # NHWC once
    for layer in params["convs"]:
        x = conv_lrelu_layer(x, layer)
    return final_fused_layer(x, params["final"])


def reference_forward(params, x_nchw):
    """Pure-JAX f32 reference (same folded eval-mode BN semantics)."""
    ref = params["ref"]
    y = x_nchw
    for layer in ref["convs"]:
        y = lax.conv_general_dilated(
            y, layer["w"], (layer["stride"],) * 2,
            [(layer["pad"], layer["pad"])] * 2,
            dimension_numbers=("NCHW", "OIHW", "NCHW"))
        y = y * layer["scale"][None, :, None, None] \
            + layer["shift"][None, :, None, None]
        y = jnp.where(y >= 0.0, y, 0.2 * y)
    y = lax.conv_general_dilated(y, ref["head_w"], (1, 1), [(0, 0), (0, 0)],
                                 dimension_numbers=("NCHW", "OIHW", "NCHW"))
    y = y + ref["head_b"][None, :, None, None]
    return jax.nn.sigmoid(y).reshape(-1)


# ----------------------------------------------------------------------------
if __name__ == "__main__":
    key = jax.random.PRNGKey(0)
    k_param, k_x = jax.random.split(key)

    in_dim, dim, batch = 3, 8, 2          # small 'dim' (PyTorch default is 64)
    params = init_discriminator_params(k_param, in_dim=in_dim, dim=dim)

    # Spatial size 64 is required by the architecture (64->32->16->8->4->1).
    x = jax.random.normal(k_x, (batch, in_dim, 64, 64), jnp.float32)

    fwd = jax.jit(lambda xx: discriminator_forward(params, xx))
    y = fwd(x)
    jax.block_until_ready(y)

    y_ref = reference_forward(params, x)

    assert y.shape == (batch,), y.shape
    assert bool(jnp.all(jnp.isfinite(y)))
    assert bool(jnp.all((y >= 0.0) & (y <= 1.0)))      # sigmoid output range
    assert float(jnp.max(jnp.abs(y - y_ref))) < 2e-2, (y, y_ref)
    print("KERNEL_OK")
</pallas_src>

<mosaic_0001>
module attributes {stable_mosaic.version = 11 : i64} {
  func.func @_conv_lrelu_kernel(%arg0: i32, %arg1: i32, %arg2: memref<1024x128xbf16, #tpu.memory_space<vmem>>, %arg3: memref<128x8xbf16, #tpu.memory_space<vmem>>, %arg4: memref<1x8xf32, #tpu.memory_space<vmem>>, %arg5: memref<1024x8xbf16, #tpu.memory_space<vmem>>, %arg6: memref<1024x8xf32, #tpu.memory_space<vmem>>) attributes {dimension_semantics = [#tpu.dimension_semantics<parallel>, #tpu.dimension_semantics<arbitrary>], iteration_bounds = array<i64: 2, 1>, scalar_prefetch = 0 : i64, scratch_operands = 1 : i64, tpu.core_type = #tpu.core_type<tc>, window_params = [{transform_indices = @transform_0, window_bounds = array<i64: 1024, 128>}, {transform_indices = @transform_1, window_bounds = array<i64: 128, 8>}, {pipeline_mode = #tpu.pipeline_mode<synchronous>, transform_indices = @transform_2, window_bounds = array<i64: 1, 8>}, {transform_indices = @transform_3, window_bounds = array<i64: 1024, 8>}]} {
    %c0_i32 = arith.constant 0 : i32
    %0 = arith.cmpi eq, %arg1, %c0_i32 : i32
    %1 = arith.extui %0 : i1 to i32
    %c0_i32_0 = arith.constant 0 : i32
    %2 = arith.cmpi ne, %1, %c0_i32_0 : i32
    scf.if %2 {
      %cst_10 = arith.constant 0.000000e+00 : f32
      %12 = vector.broadcast %cst_10 : f32 to vector<1024x8xf32>
      %c0_11 = arith.constant 0 : index
      %c0_12 = arith.constant 0 : index
      %13 = vector.load %arg6[%c0_11, %c0_12] : memref<1024x8xf32, #tpu.memory_space<vmem>>, vector<1024x8xf32>
      tpu.vector_store %arg6[%c0_11, %c0_12], %12 {strides = array<i32>} : memref<1024x8xf32, #tpu.memory_space<vmem>>, vector<1024x8xf32>,
    } else {
    }
    %c0 = arith.constant 0 : index
    %c0_1 = arith.constant 0 : index
    %3 = vector.load %arg6[%c0, %c0_1] : memref<1024x8xf32, #tpu.memory_space<vmem>>, vector<1024x8xf32>
    %c0_2 = arith.constant 0 : index
    %c0_3 = arith.constant 0 : index
    %4 = vector.load %arg2[%c0_2, %c0_3] : memref<1024x128xbf16, #tpu.memory_space<vmem>>, vector<1024x128xbf16>
    %c0_4 = arith.constant 0 : index
    %c0_5 = arith.constant 0 : index
    %5 = vector.load %arg3[%c0_4, %c0_5] : memref<128x8xbf16, #tpu.memory_space<vmem>>, vector<128x8xbf16>
    %cst = arith.constant dense<0.000000e+00> : vector<1024x8xf32>
    %6 = tpu.matmul %4, %5, %cst {dimension_numbers = #tpu.dot_dimension_numbers<[1], [0], [0], [1], [0, 0, 1, 1], [], []>} : vector<1024x128xbf16>, vector<128x8xbf16>, vector<1024x8xf32> -> vector<1024x8xf32>
    %7 = arith.addf %3, %6 : vector<1024x8xf32>
    %c0_6 = arith.constant 0 : index
    %c0_7 = arith.constant 0 : index
    %8 = vector.load %arg6[%c0_6, %c0_7] : memref<1024x8xf32, #tpu.memory_space<vmem>>, vector<1024x8xf32>
    tpu.vector_store %arg6[%c0_6, %c0_7], %7 {strides = array<i32>} : memref<1024x8xf32, #tpu.memory_space<vmem>>, vector<1024x8xf32>,
    %c0_i32_8 = arith.constant 0 : i32
    %9 = arith.cmpi eq, %arg1, %c0_i32_8 : i32
    %10 = arith.extui %9 : i1 to i32
    %c0_i32_9 = arith.constant 0 : i32
    %11 = arith.cmpi ne, %10, %c0_i32_9 : i32
    scf.if %11 {
      %c0_10 = arith.constant 0 : index
      %c0_11 = arith.constant 0 : index
      %12 = vector.load %arg6[%c0_10, %c0_11] : memref<1024x8xf32, #tpu.memory_space<vmem>>, vector<1024x8xf32>
      %c0_12 = arith.constant 0 : index
      %c0_13 = arith.constant 0 : index
      %13 = vector.load %arg4[%c0_12, %c0_13] : memref<1x8xf32, #tpu.memory_space<vmem>>, vector<1x8xf32>
      %14 = vector.broadcast %13 : vector<1x8xf32> to vector<1024x8xf32>
      %15 = arith.addf %12, %14 : vector<1024x8xf32>
      %cst_14 = arith.constant 0.000000e+00 : f32
      %16 = vector.broadcast %cst_14 : f32 to vector<1024x8xf32>
      %17 = arith.cmpf oge, %15, %16 : vector<1024x8xf32>
      %cst_15 = arith.constant 2.000000e-01 : f32
      %18 = vector.broadcast %cst_15 : f32 to vector<1024x8xf32>
      %19 = arith.mulf %18, %15 : vector<1024x8xf32>
      %20 = arith.select %17, %15, %19 : vector<1024x8xi1>, vector<1024x8xf32>
      %21 = arith.truncf %20 : vector<1024x8xf32> to vector<1024x8xbf16>
      %c0_16 = arith.constant 0 : index
      %c0_17 = arith.constant 0 : index
      %22 = vector.load %arg5[%c0_16, %c0_17] : memref<1024x8xbf16, #tpu.memory_space<vmem>>, vector<1024x8xbf16>
      tpu.vector_store %arg5[%c0_16, %c0_17], %21 {strides = array<i32>} : memref<1024x8xbf16, #tpu.memory_space<vmem>>, vector<1024x8xbf16>,
    } else {
    }
    return
  }
  func.func @transform_0(%arg0: i32, %arg1: i32) -> (i32, i32) {
    %c0_i32 = arith.constant 0 : i32
    return %arg0, %arg1 : i32, i32
  }
  func.func @transform_1(%arg0: i32, %arg1: i32) -> (i32, i32) {
    %c0_i32 = arith.constant 0 : i32
    %c0_i32_0 = arith.constant 0 : i32
    return %arg1, %c0_i32 : i32, i32
  }
  func.func @transform_2(%arg0: i32, %arg1: i32) -> (i32, i32) {
    %c0_i32 = arith.constant 0 : i32
    %c0_i32_0 = arith.constant 0 : i32
    %c0_i32_1 = arith.constant 0 : i32
    return %c0_i32, %c0_i32_0 : i32, i32
  }
  func.func @transform_3(%arg0: i32, %arg1: i32) -> (i32, i32) {
    %c0_i32 = arith.constant 0 : i32
    %c0_i32_0 = arith.constant 0 : i32
    return %arg0, %c0_i32 : i32, i32
  }
}

module attributes {stable_mosaic.version = 11 : i64} {
  func.func @_conv_lrelu_kernel(%arg0: i32, %arg1: i32, %arg2: memref<256x256xbf16, #tpu.memory_space<vmem>>, %arg3: memref<256x16xbf16, #tpu.memory_space<vmem>>, %arg4: memref<1x16xf32, #tpu.memory_space<vmem>>, %arg5: memref<256x16xbf16, #tpu.memory_space<vmem>>, %arg6: memref<256x16xf32, #tpu.memory_space<vmem>>) attributes {dimension_semantics = [#tpu.dimension_semantics<parallel>, #tpu.dimension_semantics<arbitrary>], iteration_bounds = array<i64: 2, 1>, scalar_prefetch = 0 : i64, scratch_operands = 1 : i64, tpu.core_type = #tpu.core_type<tc>, window_params = [{transform_indices = @transform_0, window_bounds = array<i64: 256, 256>}, {transform_indices = @transform_1, window_bounds = array<i64: 256, 16>}, {pipeline_mode = #tpu.pipeline_mode<synchronous>, transform_indices = @transform_2, window_bounds = array<i64: 1, 16>}, {transform_indices = @transform_3, window_bounds = array<i64: 256, 16>}]} {
    %c0_i32 = arith.constant 0 : i32
    %0 = arith.cmpi eq, %arg1, %c0_i32 : i32
    %1 = arith.extui %0 : i1 to i32
    %c0_i32_0 = arith.constant 0 : i32
    %2 = arith.cmpi ne, %1, %c0_i32_0 : i32
    scf.if %2 {
      %cst_10 = arith.constant 0.000000e+00 : f32
      %12 = vector.broadcast %cst_10 : f32 to vector<256x16xf32>
      %c0_11 = arith.constant 0 : index
      %c0_12 = arith.constant 0 : index
      %13 = vector.load %arg6[%c0_11, %c0_12] : memref<256x16xf32, #tpu.memory_space<vmem>>, vector<256x16xf32>
      tpu.vector_store %arg6[%c0_11, %c0_12], %12 {strides = array<i32>} : memref<256x16xf32, #tpu.memory_space<vmem>>, vector<256x16xf32>,
    } else {
    }
    %c0 = arith.constant 0 : index
    %c0_1 = arith.constant 0 : index
    %3 = vector.load %arg6[%c0, %c0_1] : memref<256x16xf32, #tpu.memory_space<vmem>>, vector<256x16xf32>
    %c0_2 = arith.constant 0 : index
    %c0_3 = arith.constant 0 : index
    %4 = vector.load %arg2[%c0_2, %c0_3] : memref<256x256xbf16, #tpu.memory_space<vmem>>, vector<256x256xbf16>
    %c0_4 = arith.constant 0 : index
    %c0_5 = arith.constant 0 : index
    %5 = vector.load %arg3[%c0_4, %c0_5] : memref<256x16xbf16, #tpu.memory_space<vmem>>, vector<256x16xbf16>
    %cst = arith.constant dense<0.000000e+00> : vector<256x16xf32>
    %6 = tpu.matmul %4, %5, %cst {dimension_numbers = #tpu.dot_dimension_numbers<[1], [0], [0], [1], [0, 0, 1, 1], [], []>} : vector<256x256xbf16>, vector<256x16xbf16>, vector<256x16xf32> -> vector<256x16xf32>
    %7 = arith.addf %3, %6 : vector<256x16xf32>
    %c0_6 = arith.constant 0 : index
    %c0_7 = arith.constant 0 : index
    %8 = vector.load %arg6[%c0_6, %c0_7] : memref<256x16xf32, #tpu.memory_space<vmem>>, vector<256x16xf32>
    tpu.vector_store %arg6[%c0_6, %c0_7], %7 {strides = array<i32>} : memref<256x16xf32, #tpu.memory_space<vmem>>, vector<256x16xf32>,
    %c0_i32_8 = arith.constant 0 : i32
    %9 = arith.cmpi eq, %arg1, %c0_i32_8 : i32
    %10 = arith.extui %9 : i1 to i32
    %c0_i32_9 = arith.constant 0 : i32
    %11 = arith.cmpi ne, %10, %c0_i32_9 : i32
    scf.if %11 {
      %c0_10 = arith.constant 0 : index
      %c0_11 = arith.constant 0 : index
      %12 = vector.load %arg6[%c0_10, %c0_11] : memref<256x16xf32, #tpu.memory_space<vmem>>, vector<256x16xf32>
      %c0_12 = arith.constant 0 : index
      %c0_13 = arith.constant 0 : index
      %13 = vector.load %arg4[%c0_12, %c0_13] : memref<1x16xf32, #tpu.memory_space<vmem>>, vector<1x16xf32>
      %14 = vector.broadcast %13 : vector<1x16xf32> to vector<256x16xf32>
      %15 = arith.addf %12, %14 : vector<256x16xf32>
      %cst_14 = arith.constant 0.000000e+00 : f32
      %16 = vector.broadcast %cst_14 : f32 to vector<256x16xf32>
      %17 = arith.cmpf oge, %15, %16 : vector<256x16xf32>
      %cst_15 = arith.constant 2.000000e-01 : f32
      %18 = vector.broadcast %cst_15 : f32 to vector<256x16xf32>
      %19 = arith.mulf %18, %15 : vector<256x16xf32>
      %20 = arith.select %17, %15, %19 : vector<256x16xi1>, vector<256x16xf32>
      %21 = arith.truncf %20 : vector<256x16xf32> to vector<256x16xbf16>
      %c0_16 = arith.constant 0 : index
      %c0_17 = arith.constant 0 : index
      %22 = vector.load %arg5[%c0_16, %c0_17] : memref<256x16xbf16, #tpu.memory_space<vmem>>, vector<256x16xbf16>
      tpu.vector_store %arg5[%c0_16, %c0_17], %21 {strides = array<i32>} : memref<256x16xbf16, #tpu.memory_space<vmem>>, vector<256x16xbf16>,
    } else {
    }
    return
  }
  func.func @transform_0(%arg0: i32, %arg1: i32) -> (i32, i32) {
    %c0_i32 = arith.constant 0 : i32
    return %arg0, %arg1 : i32, i32
  }
  func.func @transform_1(%arg0: i32, %arg1: i32) -> (i32, i32) {
    %c0_i32 = arith.constant 0 : i32
    %c0_i32_0 = arith.constant 0 : i32
    return %arg1, %c0_i32 : i32, i32
  }
  func.func @transform_2(%arg0: i32, %arg1: i32) -> (i32, i32) {
    %c0_i32 = arith.constant 0 : i32
    %c0_i32_0 = arith.constant 0 : i32
    %c0_i32_1 = arith.constant 0 : i32
    return %c0_i32, %c0_i32_0 : i32, i32
  }
  func.func @transform_3(%arg0: i32, %arg1: i32) -> (i32, i32) {
    %c0_i32 = arith.constant 0 : i32
    %c0_i32_0 = arith.constant 0 : i32
    return %arg0, %c0_i32 : i32, i32
  }
}

module attributes {stable_mosaic.version = 11 : i64} {
  func.func @_conv_lrelu_kernel(%arg0: i32, %arg1: i32, %arg2: memref<64x512xbf16, #tpu.memory_space<vmem>>, %arg3: memref<512x32xbf16, #tpu.memory_space<vmem>>, %arg4: memref<1x32xf32, #tpu.memory_space<vmem>>, %arg5: memref<64x32xbf16, #tpu.memory_space<vmem>>, %arg6: memref<64x32xf32, #tpu.memory_space<vmem>>) attributes {dimension_semantics = [#tpu.dimension_semantics<parallel>, #tpu.dimension_semantics<arbitrary>], iteration_bounds = array<i64: 2, 1>, scalar_prefetch = 0 : i64, scratch_operands = 1 : i64, tpu.core_type = #tpu.core_type<tc>, window_params = [{transform_indices = @transform_0, window_bounds = array<i64: 64, 512>}, {transform_indices = @transform_1, window_bounds = array<i64: 512, 32>}, {pipeline_mode = #tpu.pipeline_mode<synchronous>, transform_indices = @transform_2, window_bounds = array<i64: 1, 32>}, {transform_indices = @transform_3, window_bounds = array<i64: 64, 32>}]} {
    %c0_i32 = arith.constant 0 : i32
    %0 = arith.cmpi eq, %arg1, %c0_i32 : i32
    %1 = arith.extui %0 : i1 to i32
    %c0_i32_0 = arith.constant 0 : i32
    %2 = arith.cmpi ne, %1, %c0_i32_0 : i32
    scf.if %2 {
      %cst_10 = arith.constant 0.000000e+00 : f32
      %12 = vector.broadcast %cst_10 : f32 to vector<64x32xf32>
      %c0_11 = arith.constant 0 : index
      %c0_12 = arith.constant 0 : index
      %13 = vector.load %arg6[%c0_11, %c0_12] : memref<64x32xf32, #tpu.memory_space<vmem>>, vector<64x32xf32>
      tpu.vector_store %arg6[%c0_11, %c0_12], %12 {strides = array<i32>} : memref<64x32xf32, #tpu.memory_space<vmem>>, vector<64x32xf32>,
    } else {
    }
    %c0 = arith.constant 0 : index
    %c0_1 = arith.constant 0 : index
    %3 = vector.load %arg6[%c0, %c0_1] : memref<64x32xf32, #tpu.memory_space<vmem>>, vector<64x32xf32>
    %c0_2 = arith.constant 0 : index
    %c0_3 = arith.constant 0 : index
    %4 = vector.load %arg2[%c0_2, %c0_3] : memref<64x512xbf16, #tpu.memory_space<vmem>>, vector<64x512xbf16>
    %c0_4 = arith.constant 0 : index
    %c0_5 = arith.constant 0 : index
    %5 = vector.load %arg3[%c0_4, %c0_5] : memref<512x32xbf16, #tpu.memory_space<vmem>>, vector<512x32xbf16>
    %cst = arith.constant dense<0.000000e+00> : vector<64x32xf32>
    %6 = tpu.matmul %4, %5, %cst {dimension_numbers = #tpu.dot_dimension_numbers<[1], [0], [0], [1], [0, 0, 1, 1], [], []>} : vector<64x512xbf16>, vector<512x32xbf16>, vector<64x32xf32> -> vector<64x32xf32>
    %7 = arith.addf %3, %6 : vector<64x32xf32>
    %c0_6 = arith.constant 0 : index
    %c0_7 = arith.constant 0 : index
    %8 = vector.load %arg6[%c0_6, %c0_7] : memref<64x32xf32, #tpu.memory_space<vmem>>, vector<64x32xf32>
    tpu.vector_store %arg6[%c0_6, %c0_7], %7 {strides = array<i32>} : memref<64x32xf32, #tpu.memory_space<vmem>>, vector<64x32xf32>,
    %c0_i32_8 = arith.constant 0 : i32
    %9 = arith.cmpi eq, %arg1, %c0_i32_8 : i32
    %10 = arith.extui %9 : i1 to i32
    %c0_i32_9 = arith.constant 0 : i32
    %11 = arith.cmpi ne, %10, %c0_i32_9 : i32
    scf.if %11 {
      %c0_10 = arith.constant 0 : index
      %c0_11 = arith.constant 0 : index
      %12 = vector.load %arg6[%c0_10, %c0_11] : memref<64x32xf32, #tpu.memory_space<vmem>>, vector<64x32xf32>
      %c0_12 = arith.constant 0 : index
      %c0_13 = arith.constant 0 : index
      %13 = vector.load %arg4[%c0_12, %c0_13] : memref<1x32xf32, #tpu.memory_space<vmem>>, vector<1x32xf32>
      %14 = vector.broadcast %13 : vector<1x32xf32> to vector<64x32xf32>
      %15 = arith.addf %12, %14 : vector<64x32xf32>
      %cst_14 = arith.constant 0.000000e+00 : f32
      %16 = vector.broadcast %cst_14 : f32 to vector<64x32xf32>
      %17 = arith.cmpf oge, %15, %16 : vector<64x32xf32>
      %cst_15 = arith.constant 2.000000e-01 : f32
      %18 = vector.broadcast %cst_15 : f32 to vector<64x32xf32>
      %19 = arith.mulf %18, %15 : vector<64x32xf32>
      %20 = arith.select %17, %15, %19 : vector<64x32xi1>, vector<64x32xf32>
      %21 = arith.truncf %20 : vector<64x32xf32> to vector<64x32xbf16>
      %c0_16 = arith.constant 0 : index
      %c0_17 = arith.constant 0 : index
      %22 = vector.load %arg5[%c0_16, %c0_17] : memref<64x32xbf16, #tpu.memory_space<vmem>>, vector<64x32xbf16>
      tpu.vector_store %arg5[%c0_16, %c0_17], %21 {strides = array<i32>} : memref<64x32xbf16, #tpu.memory_space<vmem>>, vector<64x32xbf16>,
    } else {
    }
    return
  }
  func.func @transform_0(%arg0: i32, %arg1: i32) -> (i32, i32) {
    %c0_i32 = arith.constant 0 : i32
    return %arg0, %arg1 : i32, i32
  }
  func.func @transform_1(%arg0: i32, %arg1: i32) -> (i32, i32) {
    %c0_i32 = arith.constant 0 : i32
    %c0_i32_0 = arith.constant 0 : i32
    return %arg1, %c0_i32 : i32, i32
  }
  func.func @transform_2(%arg0: i32, %arg1: i32) -> (i32, i32) {
    %c0_i32 = arith.constant 0 : i32
    %c0_i32_0 = arith.constant 0 : i32
    %c0_i32_1 = arith.constant 0 : i32
    return %c0_i32, %c0_i32_0 : i32, i32
  }
  func.func @transform_3(%arg0: i32, %arg1: i32) -> (i32, i32) {
    %c0_i32 = arith.constant 0 : i32
    %c0_i32_0 = arith.constant 0 : i32
    return %arg0, %c0_i32 : i32, i32
  }
}

module attributes {stable_mosaic.version = 11 : i64} {
  func.func @_final_fused_kernel(%arg0: i32, %arg1: memref<32x896xbf16, #tpu.memory_space<vmem>>, %arg2: memref<896x64xbf16, #tpu.memory_space<vmem>>, %arg3: memref<1x64xf32, #tpu.memory_space<vmem>>, %arg4: memref<32x64xf32, #tpu.memory_space<vmem>>, %arg5: memref<1x1xf32, #tpu.memory_space<vmem>>, %arg6: memref<2x1xf32, #tpu.memory_space<vmem>>) attributes {dimension_semantics = [#tpu.dimension_semantics<arbitrary>], iteration_bounds = array<i64: 1>, scalar_prefetch = 0 : i64, scratch_operands = 0 : i64, tpu.core_type = #tpu.core_type<tc>, window_params = [{pipeline_mode = #tpu.pipeline_mode<synchronous>, transform_indices = @transform_0, window_bounds = array<i64: 32, 896>}, {pipeline_mode = #tpu.pipeline_mode<synchronous>, transform_indices = @transform_1, window_bounds = array<i64: 896, 64>}, {pipeline_mode = #tpu.pipeline_mode<synchronous>, transform_indices = @transform_2, window_bounds = array<i64: 1, 64>}, {pipeline_mode = #tpu.pipeline_mode<synchronous>, transform_indices = @transform_3, window_bounds = array<i64: 32, 64>}, {pipeline_mode = #tpu.pipeline_mode<synchronous>, transform_indices = @transform_4, window_bounds = array<i64: 1, 1>}, {pipeline_mode = #tpu.pipeline_mode<synchronous>, transform_indices = @transform_5, window_bounds = array<i64: 2, 1>}]} {
    %c0 = arith.constant 0 : index
    %c0_0 = arith.constant 0 : index
    %0 = vector.load %arg1[%c0, %c0_0] : memref<32x896xbf16, #tpu.memory_space<vmem>>, vector<32x896xbf16>
    %c0_1 = arith.constant 0 : index
    %c0_2 = arith.constant 0 : index
    %1 = vector.load %arg2[%c0_1, %c0_2] : memref<896x64xbf16, #tpu.memory_space<vmem>>, vector<896x64xbf16>
    %cst = arith.constant dense<0.000000e+00> : vector<32x64xf32>
    %2 = tpu.matmul %0, %1, %cst {dimension_numbers = #tpu.dot_dimension_numbers<[1], [0], [0], [1], [0, 0, 1, 1], [], []>} : vector<32x896xbf16>, vector<896x64xbf16>, vector<32x64xf32> -> vector<32x64xf32>
    %c0_3 = arith.constant 0 : index
    %c0_4 = arith.constant 0 : index
    %3 = vector.load %arg3[%c0_3, %c0_4] : memref<1x64xf32, #tpu.memory_space<vmem>>, vector<1x64xf32>
    %4 = vector.broadcast %3 : vector<1x64xf32> to vector<32x64xf32>
    %5 = arith.addf %2, %4 : vector<32x64xf32>
    %cst_5 = arith.constant 0.000000e+00 : f32
    %6 = vector.broadcast %cst_5 : f32 to vector<32x64xf32>
    %7 = arith.cmpf oge, %5, %6 : vector<32x64xf32>
    %cst_6 = arith.constant 2.000000e-01 : f32
    %8 = vector.broadcast %cst_6 : f32 to vector<32x64xf32>
    %9 = arith.mulf %8, %5 : vector<32x64xf32>
    %10 = arith.select %7, %5, %9 : vector<32x64xi1>, vector<32x64xf32>
    %c0_7 = arith.constant 0 : index
    %c0_8 = arith.constant 0 : index
    %11 = vector.load %arg4[%c0_7, %c0_8] : memref<32x64xf32, #tpu.memory_space<vmem>>, vector<32x64xf32>
    %12 = arith.mulf %10, %11 : vector<32x64xf32>
    %13 = vector.shape_cast %12 : vector<32x64xf32> to vector<2x16x64xf32>
    %cst_9 = arith.constant dense<0.000000e+00> : vector<2x16xf32>
    %14 = vector.multi_reduction <add>, %13, %cst_9 [2] : vector<2x16x64xf32> to vector<2x16xf32>
    %cst_10 = arith.constant dense<0.000000e+00> : vector<2xf32>
    %15 = vector.multi_reduction <add>, %14, %cst_10 [1] : vector<2x16xf32> to vector<2xf32>
    %16 = vector.shape_cast %15 : vector<2xf32> to vector<2x1xf32>
    %c0_11 = arith.constant 0 : index
    %c0_12 = arith.constant 0 : index
    %17 = vector.load %arg5[%c0_11, %c0_12] : memref<1x1xf32, #tpu.memory_space<vmem>>, vector<1x1xf32>
    %18 = vector.broadcast %17 : vector<1x1xf32> to vector<2x1xf32>
    %19 = arith.addf %16, %18 : vector<2x1xf32>
    %20 = math.absf %19 : vector<2x1xf32>
    %cst_13 = arith.constant 0.000000e+00 : f32
    %21 = vector.broadcast %cst_13 : f32 to vector<2x1xf32>
    %22 = arith.subf %21, %20 : vector<2x1xf32>
    %23 = math.exp %22 : vector<2x1xf32>
    %cst_14 = arith.constant 0.000000e+00 : f32
    %24 = vector.broadcast %cst_14 : f32 to vector<2x1xf32>
    %25 = arith.cmpf oge, %19, %24 : vector<2x1xf32>
    %cst_15 = arith.constant 1.000000e+00 : f32
    %26 = vector.broadcast %cst_15 : f32 to vector<2x1xf32>
    %27 = arith.addf %26, %23 : vector<2x1xf32>
    %cst_16 = arith.constant 1.000000e+00 : f32
    %28 = vector.broadcast %cst_16 : f32 to vector<2x1xf32>
    %29 = arith.divf %28, %27 : vector<2x1xf32>
    %cst_17 = arith.constant 1.000000e+00 : f32
    %30 = vector.broadcast %cst_17 : f32 to vector<2x1xf32>
    %31 = arith.addf %30, %23 : vector<2x1xf32>
    %32 = arith.divf %23, %31 : vector<2x1xf32>
    %33 = arith.select %25, %29, %32 : vector<2x1xi1>, vector<2x1xf32>
    %c0_18 = arith.constant 0 : index
    %c0_19 = arith.constant 0 : index
    %34 = vector.load %arg6[%c0_18, %c0_19] : memref<2x1xf32, #tpu.memory_space<vmem>>, vector<2x1xf32>
    tpu.vector_store %arg6[%c0_18, %c0_19], %33 {strides = array<i32>} : memref<2x1xf32, #tpu.memory_space<vmem>>, vector<2x1xf32>,
    return
  }
  func.func @transform_0(%arg0: i32) -> (i32, i32) {
    %c0_i32 = arith.constant 0 : i32
    %c0_i32_0 = arith.constant 0 : i32
    %c0_i32_1 = arith.constant 0 : i32
    return %c0_i32, %c0_i32_0 : i32, i32
  }
  func.func @transform_1(%arg0: i32) -> (i32, i32) {
    %c0_i32 = arith.constant 0 : i32
    %c0_i32_0 = arith.constant 0 : i32
    %c0_i32_1 = arith.constant 0 : i32
    return %c0_i32, %c0_i32_0 : i32, i32
  }
  func.func @transform_2(%arg0: i32) -> (i32, i32) {
    %c0_i32 = arith.constant 0 : i32
    %c0_i32_0 = arith.constant 0 : i32
    %c0_i32_1 = arith.constant 0 : i32
    return %c0_i32, %c0_i32_0 : i32, i32
  }
  func.func @transform_3(%arg0: i32) -> (i32, i32) {
    %c0_i32 = arith.constant 0 : i32
    %c0_i32_0 = arith.constant 0 : i32
    %c0_i32_1 = arith.constant 0 : i32
    return %c0_i32, %c0_i32_0 : i32, i32
  }
  func.func @transform_4(%arg0: i32) -> (i32, i32) {
    %c0_i32 = arith.constant 0 : i32
    %c0_i32_0 = arith.constant 0 : i32
    %c0_i32_1 = arith.constant 0 : i32
    return %c0_i32, %c0_i32_0 : i32, i32
  }
  func.func @transform_5(%arg0: i32) -> (i32, i32) {
    %c0_i32 = arith.constant 0 : i32
    %c0_i32_0 = arith.constant 0 : i32
    %c0_i32_1 = arith.constant 0 : i32
    return %c0_i32, %c0_i32_0 : i32, i32
  }
}

</mosaic_0001>

<llo_original>
// kernel: _lambda_.4
$region0: #{_lambda_.4}
  #allocation0 [shape = 'u32[]', space=smem, size = 0x4, offset = 0x4, fixed_abs, tag = 'smem constant byte address 0x4 - core index']
  #allocation1 [shape = 'u32[144,128]{1,0:T(1,128)}', space=vmem, size = 0x12000, scoped, tag = 'internal scratch']
  #allocation2 [shape = 'f32[1024,8]{1,0:T(8,128)}', space=vmem, size = 0x80000, scoped, tag = 'scratch operand']
  %s0 = inlined_call_operand.vmem [shape: bf16[2048,128], index: 0, kind: input, shape index: {}]
  %s1 = inlined_call_operand.vmem [shape: bf16[128,8], index: 1, kind: input, shape index: {}]
  %s2 = inlined_call_operand.vmem [shape: f32[1,8], index: 2, kind: input, shape index: {}]
  %s3 = inlined_call_operand.vmem [shape: bf16[2048,8], index: 3, kind: output, shape index: {}]
  %s4 = sld [smem:[#allocation0]]
  $region53: #{_lambda_.4} parent=0
    _
  %s6 = ssub.s32 1, %s4
  %s7 = scalar_select 0, %s6, %s4
  loop: start=0, step=1, limit=4
  $region2: #{_lambda_.4} parent=0 // loop_pre_header
    _
  $region3: #{_lambda_.4} parent=0 // loop_header
    %s9 = sphi 0, %s13
    %p10 = scmp.ge.s32.totalorder %s9, 4
    %s16 = sphi 0, %s28
    %s17 = sphi 0, %s24
    %s18 = sphi 0, %s16
    %s19 = sphi 0, %s17
    %s20 = sphi 0, %s18
    %s21 = sphi 0, %s19
    %s33 = sphi 0, %s35
    %s36 = sphi 0, %s33
    %s37 = sphi 0, %s36
    %s53 = sphi 0, %s37
    %s59 = sphi 0, %s61
    %s62 = sphi 0, %s59
    %s63 = sphi 0, %s62
    %s79 = sphi 0, %s63
    %s83 = sphi 0, %s83
    %s85 = sphi 0, %s83
    %s86 = sphi 0, %s85
    %s100 = sphi 0, %s86
    %s106 = sphi 0, %s108
    %s109 = sphi 0, %s106
    %s110 = sphi 0, %s109
    %s126 = sphi 0, %s110
  $region4: #{_lambda_.4} parent=0 // loop_header_branch
    %12 = sbr.rel (%p10) target = $region8
  $region5: #{_lambda_.4} parent=0 // loop_body
    %s14 = ssub.s32 %s9, 1
    %s15 = ssub.s32 %s9, 2
    %s22 = sadd.s32 1, %s17
    %p23 = scmp.ge.s32.totalorder %s22, 1
    %s24 = scalar_select %p23, 0, %s22
    %s25 = sadd.s32 1, %s16
    %s26 = scalar_select %p23, %s25, %s16
    %p27 = scmp.ge.s32.totalorder %s26, 2
    %s28 = scalar_select %p27, 0, %s26
    %s29 = ssub.s32 %s16, %s28
    %s30 = ssub.s32 %s17, %s24
    %s31 = sor.u32 %s29, %s30
    %p32 = scmp.eq.s32.totalorder %s31, 0
    %s34 = sadd.s32 %s33, 1
    %s35 = scalar_select %p32, %s33, %s34
    %p38 = pneg %p32
    %p39 = scmp.eq.s32.totalorder %s9, 1
    %p40 = por %p38, %p39
    %p41 = scmp.ne.s32.totalorder %s33, %s36
    %p42 = scmp.eq.s32.totalorder %s9, 0
    %p43 = por %p41, %p42
    %p44 = scmp.ne.s32.totalorder %s33, %s36
    %p45 = scmp.eq.s32.totalorder %s14, 1
    %p46 = por %p44, %p45
    %p47 = scmp.ne.s32.totalorder %s36, %s37
    %p48 = scmp.eq.s32.totalorder %s14, 0
    %p49 = por %p47, %p48
    %p50 = scmp.ne.s32.totalorder %s36, %s37
    %p51 = scmp.eq.s32.totalorder %s15, 1
    %p52 = por %p50, %p51
    %p54 = scmp.ne.s32.totalorder %s37, %s53
    %p55 = scmp.eq.s32.totalorder %s15, 0
    %p56 = por %p54, %p55
    %s57 = ssub.s32 %s17, %s24
    %p58 = scmp.eq.s32.totalorder %s57, 0
    %s60 = sadd.s32 %s59, 1
    %s61 = scalar_select %p58, %s59, %s60
    %p64 = pneg %p58
    %p65 = scmp.eq.s32.totalorder %s9, 1
    %p66 = por %p64, %p65
    %p67 = scmp.ne.s32.totalorder %s59, %s62
    %p68 = scmp.eq.s32.totalorder %s9, 0
    %p69 = por %p67, %p68
    %p70 = scmp.ne.s32.totalorder %s59, %s62
    %p71 = scmp.eq.s32.totalorder %s14, 1
    %p72 = por %p70, %p71
    %p73 = scmp.ne.s32.totalorder %s62, %s63
    %p74 = scmp.eq.s32.totalorder %s14, 0
    %p75 = por %p73, %p74
    %p76 = scmp.ne.s32.totalorder %s62, %s63
    %p77 = scmp.eq.s32.totalorder %s15, 1
    %p78 = por %p76, %p77
    %p80 = scmp.ne.s32.totalorder %s63, %s79
    %p81 = scmp.eq.s32.totalorder %s15, 0
    %p82 = por %p80, %p81
    %s84 = sadd.s32 %s83, 1
    %p87 = scmp.eq.s32.totalorder %s9, 1
    %p88 = scmp.ne.s32.totalorder %s83, %s85
    %p89 = scmp.eq.s32.totalorder %s9, 0
    %p90 = por %p88, %p89
    %p91 = scmp.ne.s32.totalorder %s83, %s85
    %p92 = scmp.eq.s32.totalorder %s14, 1
    %p93 = por %p91, %p92
    %p94 = scmp.ne.s32.totalorder %s85, %s86
    %p95 = scmp.eq.s32.totalorder %s14, 0
    %p96 = por %p94, %p95
    %p97 = scmp.ne.s32.totalorder %s85, %s86
    %p98 = scmp.eq.s32.totalorder %s15, 1
    %p99 = por %p97, %p98
    %p101 = scmp.ne.s32.totalorder %s86, %s100
    %p102 = scmp.eq.s32.totalorder %s15, 0
    %p103 = por %p101, %p102
    %s104 = ssub.s32 %s16, %s28
    %p105 = scmp.eq.s32.totalorder %s104, 0
    %s107 = sadd.s32 %s106, 1
    %s108 = scalar_select %p105, %s106, %s107
    %p111 = pneg %p105
    %p112 = scmp.eq.s32.totalorder %s9, 1
    %p113 = por %p111, %p112
    %p114 = scmp.ne.s32.totalorder %s106, %s109
    %p115 = scmp.eq.s32.totalorder %s9, 0
    %p116 = por %p114, %p115
    %p117 = scmp.ne.s32.totalorder %s106, %s109
    %p118 = scmp.eq.s32.totalorder %s14, 1
    %p119 = por %p117, %p118
    %p120 = scmp.ne.s32.totalorder %s109, %s110
    %p121 = scmp.eq.s32.totalorder %s14, 0
    %p122 = por %p120, %p121
    %p123 = scmp.ne.s32.totalorder %s109, %s110
    %p124 = scmp.eq.s32.totalorder %s15, 1
    %p125 = por %p123, %p124
    %p127 = scmp.ne.s32.totalorder %s110, %s126
    %p128 = scmp.eq.s32.totalorder %s15, 0
    %p129 = por %p127, %p128
    %p130 = scmp.le.s32.totalorder 1, %s9
    %p131 = scmp.lt.s32.totalorder %s9, 3
    %p132 = pnand %p130, %p131
    %p133 = pneg %p132
    // Predicated region
    $region9: #{_lambda_.4} parent=5 // pred_check
      _
    $region10: #{_lambda_.4} parent=5 // pred_check_branch
      %135 = sbr.rel (%p132) target = $region12
    $region11: #{_lambda_.4} parent=5 // pred_region
      %s136 = ssub.s32 %s9, 1
      // Predicated region
      $region13: #{_lambda_.4} parent=11 // pred_check
        %p137 = pneg %p75
      $region14: #{_lambda_.4} parent=11 // pred_check_branch
        %139 = sbr.rel (%p137) target = $region16
      $region15: #{_lambda_.4} parent=11 // pred_region
        %s140 = smul.u32 16, %s19
        %p141 = scmp.lt.s32.totalorder %s140, 15
        %s142 = scalar_select %p141, %s140, 15
        %s143 = smul.addr %s142, 4
        %s144 = scalar_lea.vmem %s1, %s143
        %s145 = smul.u32 16, %s19
      $region16: #{_lambda_.4} parent=11 // pred_fallthru
        _
      // Predicated region
      $region17: #{_lambda_.4} parent=11 // pred_check
        %p146 = pneg %p96
      $region18: #{_lambda_.4} parent=11 // pred_check_branch
        %148 = sbr.rel (%p146) target = $region20
      $region19: #{_lambda_.4} parent=11 // pred_region
        _
      $region20: #{_lambda_.4} parent=11 // pred_fallthru
        _
    $region12: #{_lambda_.4} parent=5 // pred_fallthru
      _
    %p149 = scmp.lt.s32.totalorder %s9, 2
    // Predicated region
    $region21: #{_lambda_.4} parent=5 // pred_check
      %p150 = pneg %p149
    $region22: #{_lambda_.4} parent=5 // pred_check_branch
      %152 = sbr.rel (%p150) target = $region24
    $region23: #{_lambda_.4} parent=5 // pred_region
      // Predicated region
      $region25: #{_lambda_.4} parent=23 // pred_check
        %p153 = pneg %p43
      $region26: #{_lambda_.4} parent=23 // pred_check_branch
        %155 = sbr.rel (%p153) target = $region28
      $region27: #{_lambda_.4} parent=23 // pred_region
        %s156 = smul.u32 128, %s16
        %p157 = scmp.lt.s32.totalorder %s156, 255
        %s158 = scalar_select %p157, %s156, 255
        %p159 = scmp.lt.s32.totalorder %s17, 0
        %s160 = scalar_select %p159, %s17, 0
        %s161 = sadd.s32 %s160, %s158
        %s162 = smul.addr %s161, 4
        %s163 = scalar_lea.vmem %s0, %s162
        %s164 = smul.u32 128, %s16
      $region28: #{_lambda_.4} parent=23 // pred_fallthru
        _
    $region24: #{_lambda_.4} parent=5 // pred_fallthru
      _
    %p165 = scmp.le.s32.totalorder 1, %s9
    %p166 = scmp.lt.s32.totalorder %s9, 3
    %p167 = pnand %p165, %p166
    %p168 = pneg %p167
    // Predicated region
    $region29: #{_lambda_.4} parent=5 // pred_check
      _
    $region30: #{_lambda_.4} parent=5 // pred_check_branch
      %170 = sbr.rel (%p167) target = $region32
    $region31: #{_lambda_.4} parent=5 // pred_region
      %s171 = ssub.s32 %s9, 1
      %s172 = smul.u32 128, %s18
      %p173 = scmp.lt.s32.totalorder %s172, 255
      %s174 = scalar_select %p173, %s172, 255
      %p175 = scmp.lt.s32.totalorder %s19, 0
      %s176 = scalar_select %p175, %s19, 0
      %s177 = sadd.s32 %s176, %s174
      %s178 = smul.addr %s177, 4
      %s179 = scalar_lea.vmem %s0, %s178
      %p180 = pneg %p49
      %p181 = pneg %p46
      %s182 = smul.u32 16, %s19
      %p183 = scmp.lt.s32.totalorder %s182, 15
      %s184 = scalar_select %p183, %s182, 15
      %s185 = smul.addr %s184, 4
      %s186 = scalar_lea.vmem %s1, %s185
      %p187 = pneg %p75
      %p188 = pneg %p72
      %p189 = pneg %p96
      %p190 = pneg %p93
      %p191 = pneg %p122
      %p192 = pneg %p119
      %s193 = smul.u32 128, %s18
      %p194 = scmp.lt.s32.totalorder %s193, 255
      %s195 = scalar_select %p194, %s193, 255
      %s196 = smul.addr %s195, 4
      %s197 = scalar_lea.vmem %s3, %s196
      %s198 = smul.u32 128, %s18
      %p199 = scmp.lt.s32.totalorder %s198, 255
      %s200 = scalar_select %p199, %s198, 255
      %p201 = scmp.lt.s32.totalorder %s19, 0
      %s202 = scalar_select %p201, %s19, 0
      %s203 = sadd.s32 %s202, %s200
      %s204 = smul.addr %s203, 4
      %s205 = scalar_lea.vmem %s0, %s204
      %s206 = smul.u32 128, %s18
      %s207 = smul.u32 16, %s19
      %p208 = scmp.lt.s32.totalorder %s207, 15
      %s209 = scalar_select %p208, %s207, 15
      %s210 = smul.addr %s209, 4
      %s211 = scalar_lea.vmem %s1, %s210
      %s212 = smul.u32 16, %s19
      %s213 = smul.u32 128, %s18
      %p214 = scmp.lt.s32.totalorder %s213, 255
      %s215 = scalar_select %p214, %s213, 255
      %s216 = smul.addr %s215, 4
      %s217 = scalar_lea.vmem %s3, %s216
      %s218 = smul.u32 128, %s18
      %p220 = scmp.eq.s32.totalorder %s19, 0
      // Predicated region
      $region33: #{_lambda_.4} parent=31 // pred_check
        %p221 = pneg %p220
      $region34: #{_lambda_.4} parent=31 // pred_check_branch
        %223 = sbr.rel (%p221) target = $region36
      $region35: #{_lambda_.4} parent=31 // pred_region
        %vm224 = vcmask 64512
        %225 = vst.msk [vmem:[#allocation2] sm:$0xff] %vm224, 0.0
        %226 = vst.msk [vmem:[#allocation2 + $0x8] sm:$0xff] %vm224, 0.0
        %227 = vst.msk [vmem:[#allocation2 + $0x10] sm:$0xff] %vm224, 0.0
        %228 = vst.msk [vmem:[#allocation2 + $0x18] sm:$0xff] %vm224, 0.0
        %229 = vst.msk [vmem:[#allocation2 + $0x20] sm:$0xff] %vm224, 0.0
        %230 = vst.msk [vmem:[#allocation2 + $0x28] sm:$0xff] %vm224, 0.0
        %231 = vst.msk [vmem:[#allocation2 + $0x30] sm:$0xff] %vm224, 0.0
        %232 = vst.msk [vmem:[#allocation2 + $0x38] sm:$0xff] %vm224, 0.0
        %233 = vst.msk [vmem:[#allocation2 + $0x40] sm:$0xff] %vm224, 0.0
        %234 = vst.msk [vmem:[#allocation2 + $0x48] sm:$0xff] %vm224, 0.0
        %235 = vst.msk [vmem:[#allocation2 + $0x50] sm:$0xff] %vm224, 0.0
        %236 = vst.msk [vmem:[#allocation2 + $0x58] sm:$0xff] %vm224, 0.0
        %237 = vst.msk [vmem:[#allocation2 + $0x60] sm:$0xff] %vm224, 0.0
        %238 = vst.msk [vmem:[#allocation2 + $0x68] sm:$0xff] %vm224, 0.0
        %239 = vst.msk [vmem:[#allocation2 + $0x70] sm:$0xff] %vm224, 0.0
        %240 = vst.msk [vmem:[#allocation2 + $0x78] sm:$0xff] %vm224, 0.0
        %241 = vst.msk [vmem:[#allocation2 + $0x80] sm:$0xff] %vm224, 0.0
        %242 = vst.msk [vmem:[#allocation2 + $0x88] sm:$0xff] %vm224, 0.0
        %243 = vst.msk [vmem:[#allocation2 + $0x90] sm:$0xff] %vm224, 0.0
        %244 = vst.msk [vmem:[#allocation2 + $0x98] sm:$0xff] %vm224, 0.0
        %245 = vst.msk [vmem:[#allocation2 + $0xa0] sm:$0xff] %vm224, 0.0
        %246 = vst.msk [vmem:[#allocation2 + $0xa8] sm:$0xff] %vm224, 0.0
        %247 = vst.msk [vmem:[#allocation2 + $0xb0] sm:$0xff] %vm224, 0.0
        %248 = vst.msk [vmem:[#allocation2 + $0xb8] sm:$0xff] %vm224, 0.0
        %249 = vst.msk [vmem:[#allocation2 + $0xc0] sm:$0xff] %vm224, 0.0
        %250 = vst.msk [vmem:[#allocation2 + $0xc8] sm:$0xff] %vm224, 0.0
        %251 = vst.msk [vmem:[#allocation2 + $0xd0] sm:$0xff] %vm224, 0.0
        %252 = vst.msk [vmem:[#allocation2 + $0xd8] sm:$0xff] %vm224, 0.0
        %253 = vst.msk [vmem:[#allocation2 + $0xe0] sm:$0xff] %vm224, 0.0
        %254 = vst.msk [vmem:[#allocation2 + $0xe8] sm:$0xff] %vm224, 0.0
        %255 = vst.msk [vmem:[#allocation2 + $0xf0] sm:$0xff] %vm224, 0.0
        %256 = vst.msk [vmem:[#allocation2 + $0xf8] sm:$0xff] %vm224, 0.0
        %257 = vst.msk [vmem:[#allocation2 + $0x100] sm:$0xff] %vm224, 0.0
        %258 = vst.msk [vmem:[#allocation2 + $0x108] sm:$0xff] %vm224, 0.0
        %259 = vst.msk [vmem:[#allocation2 + $0x110] sm:$0xff] %vm224, 0.0
        %260 = vst.msk [vmem:[#allocation2 + $0x118] sm:$0xff] %vm224, 0.0
        %261 = vst.msk [vmem:[#allocation2 + $0x120] sm:$0xff] %vm224, 0.0
        %262 = vst.msk [vmem:[#allocation2 + $0x128] sm:$0xff] %vm224, 0.0
        %263 = vst.msk [vmem:[#allocation2 + $0x130] sm:$0xff] %vm224, 0.0
        %264 = vst.msk [vmem:[#allocation2 + $0x138] sm:$0xff] %vm224, 0.0
        %265 = vst.msk [vmem:[#allocation2 + $0x140] sm:$0xff] %vm224, 0.0
        %266 = vst.msk [vmem:[#allocation2 + $0x148] sm:$0xff] %vm224, 0.0
        %267 = vst.msk [vmem:[#allocation2 + $0x150] sm:$0xff] %vm224, 0.0
        %268 = vst.msk [vmem:[#allocation2 + $0x158] sm:$0xff] %vm224, 0.0
        %269 = vst.msk [vmem:[#allocation2 + $0x160] sm:$0xff] %vm224, 0.0
        %270 = vst.msk [vmem:[#allocation2 + $0x168] sm:$0xff] %vm224, 0.0
        %271 = vst.msk [vmem:[#allocation2 + $0x170] sm:$0xff] %vm224, 0.0
        %272 = vst.msk [vmem:[#allocation2 + $0x178] sm:$0xff] %vm224, 0.0
        %273 = vst.msk [vmem:[#allocation2 + $0x180] sm:$0xff] %vm224, 0.0
        %274 = vst.msk [vmem:[#allocation2 + $0x188] sm:$0xff] %vm224, 0.0
        %275 = vst.msk [vmem:[#allocation2 + $0x190] sm:$0xff] %vm224, 0.0
        %276 = vst.msk [vmem:[#allocation2 + $0x198] sm:$0xff] %vm224, 0.0
        %277 = vst.msk [vmem:[#allocation2 + $0x1a0] sm:$0xff] %vm224, 0.0
        %278 = vst.msk [vmem:[#allocation2 + $0x1a8] sm:$0xff] %vm224, 0.0
        %279 = vst.msk [vmem:[#allocation2 + $0x1b0] sm:$0xff] %vm224, 0.0
        %280 = vst.msk [vmem:[#allocation2 + $0x1b8] sm:$0xff] %vm224, 0.0
        %281 = vst.msk [vmem:[#allocation2 + $0x1c0] sm:$0xff] %vm224, 0.0
        %282 = vst.msk [vmem:[#allocation2 + $0x1c8] sm:$0xff] %vm224, 0.0
        %283 = vst.msk [vmem:[#allocation2 + $0x1d0] sm:$0xff] %vm224, 0.0
        %284 = vst.msk [vmem:[#allocation2 + $0x1d8] sm:$0xff] %vm224, 0.0
        %285 = vst.msk [vmem:[#allocation2 + $0x1e0] sm:$0xff] %vm224, 0.0
        %286 = vst.msk [vmem:[#allocation2 + $0x1e8] sm:$0xff] %vm224, 0.0
        %287 = vst.msk [vmem:[#allocation2 + $0x1f0] sm:$0xff] %vm224, 0.0
        %288 = vst.msk [vmem:[#allocation2 + $0x1f8] sm:$0xff] %vm224, 0.0
        %289 = vst.msk [vmem:[#allocation2 + $0x200] sm:$0xff] %vm224, 0.0
        %290 = vst.msk [vmem:[#allocation2 + $0x208] sm:$0xff] %vm224, 0.0
        %291 = vst.msk [vmem:[#allocation2 + $0x210] sm:$0xff] %vm224, 0.0
        %292 = vst.msk [vmem:[#allocation2 + $0x218] sm:$0xff] %vm224, 0.0
        %293 = vst.msk [vmem:[#allocation2 + $0x220] sm:$0xff] %vm224, 0.0
        %294 = vst.msk [vmem:[#allocation2 + $0x228] sm:$0xff] %vm224, 0.0
        %295 = vst.msk [vmem:[#allocation2 + $0x230] sm:$0xff] %vm224, 0.0
        %296 = vst.msk [vmem:[#allocation2 + $0x238] sm:$0xff] %vm224, 0.0
        %297 = vst.msk [vmem:[#allocation2 + $0x240] sm:$0xff] %vm224, 0.0
        %298 = vst.msk [vmem:[#allocation2 + $0x248] sm:$0xff] %vm224, 0.0
        %299 = vst.msk [vmem:[#allocation2 + $0x250] sm:$0xff] %vm224, 0.0
        %300 = vst.msk [vmem:[#allocation2 + $0x258] sm:$0xff] %vm224, 0.0
        %301 = vst.msk [vmem:[#allocation2 + $0x260] sm:$0xff] %vm224, 0.0
        %302 = vst.msk [vmem:[#allocation2 + $0x268] sm:$0xff] %vm224, 0.0
        %303 = vst.msk [vmem:[#allocation2 + $0x270] sm:$0xff] %vm224, 0.0
        %304 = vst.msk [vmem:[#allocation2 + $0x278] sm:$0xff] %vm224, 0.0
        %305 = vst.msk [vmem:[#allocation2 + $0x280] sm:$0xff] %vm224, 0.0
        %306 = vst.msk [vmem:[#allocation2 + $0x288] sm:$0xff] %vm224, 0.0
        %307 = vst.msk [vmem:[#allocation2 + $0x290] sm:$0xff] %vm224, 0.0
        %308 = vst.msk [vmem:[#allocation2 + $0x298] sm:$0xff] %vm224, 0.0
        %309 = vst.msk [vmem:[#allocation2 + $0x2a0] sm:$0xff] %vm224, 0.0
        %310 = vst.msk [vmem:[#allocation2 + $0x2a8] sm:$0xff] %vm224, 0.0
        %311 = vst.msk [vmem:[#allocation2 + $0x2b0] sm:$0xff] %vm224, 0.0
        %312 = vst.msk [vmem:[#allocation2 + $0x2b8] sm:$0xff] %vm224, 0.0
        %313 = vst.msk [vmem:[#allocation2 + $0x2c0] sm:$0xff] %vm224, 0.0
        %314 = vst.msk [vmem:[#allocation2 + $0x2c8] sm:$0xff] %vm224, 0.0
        %315 = vst.msk [vmem:[#allocation2 + $0x2d0] sm:$0xff] %vm224, 0.0
        %316 = vst.msk [vmem:[#allocation2 + $0x2d8] sm:$0xff] %vm224, 0.0
        %317 = vst.msk [vmem:[#allocation2 + $0x2e0] sm:$0xff] %vm224, 0.0
        %318 = vst.msk [vmem:[#allocation2 + $0x2e8] sm:$0xff] %vm224, 0.0
        %319 = vst.msk [vmem:[#allocation2 + $0x2f0] sm:$0xff] %vm224, 0.0
        %320 = vst.msk [vmem:[#allocation2 + $0x2f8] sm:$0xff] %vm224, 0.0
        %321 = vst.msk [vmem:[#allocation2 + $0x300] sm:$0xff] %vm224, 0.0
        %322 = vst.msk [vmem:[#allocation2 + $0x308] sm:$0xff] %vm224, 0.0
        %323 = vst.msk [vmem:[#allocation2 + $0x310] sm:$0xff] %vm224, 0.0
        %324 = vst.msk [vmem:[#allocation2 + $0x318] sm:$0xff] %vm224, 0.0
        %325 = vst.msk [vmem:[#allocation2 + $0x320] sm:$0xff] %vm224, 0.0
        %326 = vst.msk [vmem:[#allocation2 + $0x328] sm:$0xff] %vm224, 0.0
        %327 = vst.msk [vmem:[#allocation2 + $0x330] sm:$0xff] %vm224, 0.0
        %328 = vst.msk [vmem:[#allocation2 + $0x338] sm:$0xff] %vm224, 0.0
        %329 = vst.msk [vmem:[#allocation2 + $0x340] sm:$0xff] %vm224, 0.0
        %330 = vst.msk [vmem:[#allocation2 + $0x348] sm:$0xff] %vm224, 0.0
        %331 = vst.msk [vmem:[#allocation2 + $0x350] sm:$0xff] %vm224, 0.0
        %332 = vst.msk [vmem:[#allocation2 + $0x358] sm:$0xff] %vm224, 0.0
        %333 = vst.msk [vmem:[#allocation2 + $0x360] sm:$0xff] %vm224, 0.0
        %334 = vst.msk [vmem:[#allocation2 + $0x368] sm:$0xff] %vm224, 0.0
        %335 = vst.msk [vmem:[#allocation2 + $0x370] sm:$0xff] %vm224, 0.0
        %336 = vst.msk [vmem:[#allocation2 + $0x378] sm:$0xff] %vm224, 0.0
        %337 = vst.msk [vmem:[#allocation2 + $0x380] sm:$0xff] %vm224, 0.0
        %338 = vst.msk [vmem:[#allocation2 + $0x388] sm:$0xff] %vm224, 0.0
        %339 = vst.msk [vmem:[#allocation2 + $0x390] sm:$0xff] %vm224, 0.0
        %340 = vst.msk [vmem:[#allocation2 + $0x398] sm:$0xff] %vm224, 0.0
        %341 = vst.msk [vmem:[#allocation2 + $0x3a0] sm:$0xff] %vm224, 0.0
        %342 = vst.msk [vmem:[#allocation2 + $0x3a8] sm:$0xff] %vm224, 0.0
        %343 = vst.msk [vmem:[#allocation2 + $0x3b0] sm:$0xff] %vm224, 0.0
        %344 = vst.msk [vmem:[#allocation2 + $0x3b8] sm:$0xff] %vm224, 0.0
        %345 = vst.msk [vmem:[#allocation2 + $0x3c0] sm:$0xff] %vm224, 0.0
        %346 = vst.msk [vmem:[#allocation2 + $0x3c8] sm:$0xff] %vm224, 0.0
        %347 = vst.msk [vmem:[#allocation2 + $0x3d0] sm:$0xff] %vm224, 0.0
        %348 = vst.msk [vmem:[#allocation2 + $0x3d8] sm:$0xff] %vm224, 0.0
        %349 = vst.msk [vmem:[#allocation2 + $0x3e0] sm:$0xff] %vm224, 0.0
        %350 = vst.msk [vmem:[#allocation2 + $0x3e8] sm:$0xff] %vm224, 0.0
        %351 = vst.msk [vmem:[#allocation2 + $0x3f0] sm:$0xff] %vm224, 0.0
        %352 = vst.msk [vmem:[#allocation2 + $0x3f8] sm:$0xff] %vm224, 0.0
      $region36: #{_lambda_.4} parent=31 // pred_fallthru
        _
      %v353 = vld [vmem:[#allocation2] sm:$0xff]
      %v354 = vld [vmem:[#allocation2 + $0x8] sm:$0xff]
      %v355 = vld [vmem:[#allocation2 + $0x10] sm:$0xff]
      %v356 = vld [vmem:[#allocation2 + $0x18] sm:$0xff]
      %v357 = vld [vmem:[#allocation2 + $0x20] sm:$0xff]
      %v358 = vld [vmem:[#allocation2 + $0x28] sm:$0xff]
      %v359 = vld [vmem:[#allocation2 + $0x30] sm:$0xff]
      %v360 = vld [vmem:[#allocation2 + $0x38] sm:$0xff]
      %v361 = vld [vmem:[#allocation2 + $0x40] sm:$0xff]
      %v362 = vld [vmem:[#allocation2 + $0x48] sm:$0xff]
      %v363 = vld [vmem:[#allocation2 + $0x50] sm:$0xff]
      %v364 = vld [vmem:[#allocation2 + $0x58] sm:$0xff]
      %v365 = vld [vmem:[#allocation2 + $0x60] sm:$0xff]
      %v366 = vld [vmem:[#allocation2 + $0x68] sm:$0xff]
      %v367 = vld [vmem:[#allocation2 + $0x70] sm:$0xff]
      %v368 = vld [vmem:[#allocation2 + $0x78] sm:$0xff]
      %v369 = vld [vmem:[#allocation2 + $0x80] sm:$0xff]
      %v370 = vld [vmem:[#allocation2 + $0x88] sm:$0xff]
      %v371 = vld [vmem:[#allocation2 + $0x90] sm:$0xff]
      %v372 = vld [vmem:[#allocation2 + $0x98] sm:$0xff]
      %v373 = vld [vmem:[#allocation2 + $0xa0] sm:$0xff]
      %v374 = vld [vmem:[#allocation2 + $0xa8] sm:$0xff]
      %v375 = vld [vmem:[#allocation2 + $0xb0] sm:$0xff]
      %v376 = vld [vmem:[#allocation2 + $0xb8] sm:$0xff]
      %v377 = vld [vmem:[#allocation2 + $0xc0] sm:$0xff]
      %v378 = vld [vmem:[#allocation2 + $0xc8] sm:$0xff]
      %v379 = vld [vmem:[#allocation2 + $0xd0] sm:$0xff]
      %v380 = vld [vmem:[#allocation2 + $0xd8] sm:$0xff]
      %v381 = vld [vmem:[#allocation2 + $0xe0] sm:$0xff]
      %v382 = vld [vmem:[#allocation2 + $0xe8] sm:$0xff]
      %v383 = vld [vmem:[#allocation2 + $0xf0] sm:$0xff]
      %v384 = vld [vmem:[#allocation2 + $0xf8] sm:$0xff]
      %v385 = vld [vmem:[#allocation2 + $0x100] sm:$0xff]
      %v386 = vld [vmem:[#allocation2 + $0x108] sm:$0xff]
      %v387 = vld [vmem:[#allocation2 + $0x110] sm:$0xff]
      %v388 = vld [vmem:[#allocation2 + $0x118] sm:$0xff]
      %v389 = vld [vmem:[#allocation2 + $0x120] sm:$0xff]
      %v390 = vld [vmem:[#allocation2 + $0x128] sm:$0xff]
      %v391 = vld [vmem:[#allocation2 + $0x130] sm:$0xff]
      %v392 = vld [vmem:[#allocation2 + $0x138] sm:$0xff]
      %v393 = vld [vmem:[#allocation2 + $0x140] sm:$0xff]
      %v394 = vld [vmem:[#allocation2 + $0x148] sm:$0xff]
      %v395 = vld [vmem:[#allocation2 + $0x150] sm:$0xff]
      %v396 = vld [vmem:[#allocation2 + $0x158] sm:$0xff]
      %v397 = vld [vmem:[#allocation2 + $0x160] sm:$0xff]
      %v398 = vld [vmem:[#allocation2 + $0x168] sm:$0xff]
      %v399 = vld [vmem:[#allocation2 + $0x170] sm:$0xff]
      %v400 = vld [vmem:[#allocation2 + $0x178] sm:$0xff]
      %v401 = vld [vmem:[#allocation2 + $0x180] sm:$0xff]
      %v402 = vld [vmem:[#allocation2 + $0x188] sm:$0xff]
      %v403 = vld [vmem:[#allocation2 + $0x190] sm:$0xff]
      %v404 = vld [vmem:[#allocation2 + $0x198] sm:$0xff]
      %v405 = vld [vmem:[#allocation2 + $0x1a0] sm:$0xff]
      %v406 = vld [vmem:[#allocation2 + $0x1a8] sm:$0xff]
      %v407 = vld [vmem:[#allocation2 + $0x1b0] sm:$0xff]
      %v408 = vld [vmem:[#allocation2 + $0x1b8] sm:$0xff]
      %v409 = vld [vmem:[#allocation2 + $0x1c0] sm:$0xff]
      %v410 = vld [vmem:[#allocation2 + $0x1c8] sm:$0xff]
      %v411 = vld [vmem:[#allocation2 + $0x1d0] sm:$0xff]
      %v412 = vld [vmem:[#allocation2 + $0x1d8] sm:$0xff]
      %v413 = vld [vmem:[#allocation2 + $0x1e0] sm:$0xff]
      %v414 = vld [vmem:[#allocation2 + $0x1e8] sm:$0xff]
      %v415 = vld [vmem:[#allocation2 + $0x1f0] sm:$0xff]
      %v416 = vld [vmem:[#allocation2 + $0x1f8] sm:$0xff]
      %v417 = vld [vmem:[#allocation2 + $0x200] sm:$0xff]
      %v418 = vld [vmem:[#allocation2 + $0x208] sm:$0xff]
      %v419 = vld [vmem:[#allocation2 + $0x210] sm:$0xff]
      %v420 = vld [vmem:[#allocation2 + $0x218] sm:$0xff]
      %v421 = vld [vmem:[#allocation2 + $0x220] sm:$0xff]
      %v422 = vld [vmem:[#allocation2 + $0x228] sm:$0xff]
      %v423 = vld [vmem:[#allocation2 + $0x230] sm:$0xff]
      %v424 = vld [vmem:[#allocation2 + $0x238] sm:$0xff]
      %v425 = vld [vmem:[#allocation2 + $0x240] sm:$0xff]
      %v426 = vld [vmem:[#allocation2 + $0x248] sm:$0xff]
      %v427 = vld [vmem:[#allocation2 + $0x250] sm:$0xff]
      %v428 = vld [vmem:[#allocation2 + $0x258] sm:$0xff]
      %v429 = vld [vmem:[#allocation2 + $0x260] sm:$0xff]
      %v430 = vld [vmem:[#allocation2 + $0x268] sm:$0xff]
      %v431 = vld [vmem:[#allocation2 + $0x270] sm:$0xff]
      %v432 = vld [vmem:[#allocation2 + $0x278] sm:$0xff]
      %v433 = vld [vmem:[#allocation2 + $0x280] sm:$0xff]
      %v434 = vld [vmem:[#allocation2 + $0x288] sm:$0xff]
      %v435 = vld [vmem:[#allocation2 + $0x290] sm:$0xff]
      %v436 = vld [vmem:[#allocation2 + $0x298] sm:$0xff]
      %v437 = vld [vmem:[#allocation2 + $0x2a0] sm:$0xff]
      %v438 = vld [vmem:[#allocation2 + $0x2a8] sm:$0xff]
      %v439 = vld [vmem:[#allocation2 + $0x2b0] sm:$0xff]
      %v440 = vld [vmem:[#allocation2 + $0x2b8] sm:$0xff]
      %v441 = vld [vmem:[#allocation2 + $0x2c0] sm:$0xff]
      %v442 = vld [vmem:[#allocation2 + $0x2c8] sm:$0xff]
      %v443 = vld [vmem:[#allocation2 + $0x2d0] sm:$0xff]
      %v444 = vld [vmem:[#allocation2 + $0x2d8] sm:$0xff]
      %v445 = vld [vmem:[#allocation2 + $0x2e0] sm:$0xff]
      %v446 = vld [vmem:[#allocation2 + $0x2e8] sm:$0xff]
      %v447 = vld [vmem:[#allocation2 + $0x2f0] sm:$0xff]
      %v448 = vld [vmem:[#allocation2 + $0x2f8] sm:$0xff]
      %v449 = vld [vmem:[#allocation2 + $0x300] sm:$0xff]
      %v450 = vld [vmem:[#allocation2 + $0x308] sm:$0xff]
      %v451 = vld [vmem:[#allocation2 + $0x310] sm:$0xff]
      %v452 = vld [vmem:[#allocation2 + $0x318] sm:$0xff]
      %v453 = vld [vmem:[#allocation2 + $0x320] sm:$0xff]
      %v454 = vld [vmem:[#allocation2 + $0x328] sm:$0xff]
      %v455 = vld [vmem:[#allocation2 + $0x330] sm:$0xff]
      %v456 = vld [vmem:[#allocation2 + $0x338] sm:$0xff]
      %v457 = vld [vmem:[#allocation2 + $0x340] sm:$0xff]
      %v458 = vld [vmem:[#allocation2 + $0x348] sm:$0xff]
      %v459 = vld [vmem:[#allocation2 + $0x350] sm:$0xff]
      %v460 = vld [vmem:[#allocation2 + $0x358] sm:$0xff]
      %v461 = vld [vmem:[#allocation2 + $0x360] sm:$0xff]
      %v462 = vld [vmem:[#allocation2 + $0x368] sm:$0xff]
      %v463 = vld [vmem:[#allocation2 + $0x370] sm:$0xff]
      %v464 = vld [vmem:[#allocation2 + $0x378] sm:$0xff]
      %v465 = vld [vmem:[#allocation2 + $0x380] sm:$0xff]
      %v466 = vld [vmem:[#allocation2 + $0x388] sm:$0xff]
      %v467 = vld [vmem:[#allocation2 + $0x390] sm:$0xff]
      %v468 = vld [vmem:[#allocation2 + $0x398] sm:$0xff]
      %v469 = vld [vmem:[#allocation2 + $0x3a0] sm:$0xff]
      %v470 = vld [vmem:[#allocation2 + $0x3a8] sm:$0xff]
      %v471 = vld [vmem:[#allocation2 + $0x3b0] sm:$0xff]
      %v472 = vld [vmem:[#allocation2 + $0x3b8] sm:$0xff]
      %v473 = vld [vmem:[#allocation2 + $0x3c0] sm:$0xff]
      %v474 = vld [vmem:[#allocation2 + $0x3c8] sm:$0xff]
      %v475 = vld [vmem:[#allocation2 + $0x3d0] sm:$0xff]
      %v476 = vld [vmem:[#allocation2 + $0x3d8] sm:$0xff]
      %v477 = vld [vmem:[#allocation2 + $0x3e0] sm:$0xff]
      %v478 = vld [vmem:[#allocation2 + $0x3e8] sm:$0xff]
      %v479 = vld [vmem:[#allocation2 + $0x3f0] sm:$0xff]
      %v480 = vld [vmem:[#allocation2 + $0x3f8] sm:$0xff]
      %v481 = vld [vmem:[%s205] sm:$0xf]
      %v482 = vld [vmem:[%s205 + $0x4] sm:$0xf]
      %v483 = vld [vmem:[%s205 + $0x8] sm:$0xf]
      %v484 = vld [vmem:[%s205 + $0xc] sm:$0xf]
      %v485 = vld [vmem:[%s205 + $0x10] sm:$0xf]
      %v486 = vld [vmem:[%s205 + $0x14] sm:$0xf]
      %v487 = vld [vmem:[%s205 + $0x18] sm:$0xf]
      %v488 = vld [vmem:[%s205 + $0x1c] sm:$0xf]
      %v489 = vld [vmem:[%s205 + $0x20] sm:$0xf]
      %v490 = vld [vmem:[%s205 + $0x24] sm:$0xf]
      %v491 = vld [vmem:[%s205 + $0x28] sm:$0xf]
      %v492 = vld [vmem:[%s205 + $0x2c] sm:$0xf]
      %v493 = vld [vmem:[%s205 + $0x30] sm:$0xf]
      %v494 = vld [vmem:[%s205 + $0x34] sm:$0xf]
      %v495 = vld [vmem:[%s205 + $0x38] sm:$0xf]
      %v496 = vld [vmem:[%s205 + $0x3c] sm:$0xf]
      %v497 = vld [vmem:[%s205 + $0x40] sm:$0xf]
      %v498 = vld [vmem:[%s205 + $0x44] sm:$0xf]
      %v499 = vld [vmem:[%s205 + $0x48] sm:$0xf]
      %v500 = vld [vmem:[%s205 + $0x4c] sm:$0xf]
      %v501 = vld [vmem:[%s205 + $0x50] sm:$0xf]
      %v502 = vld [vmem:[%s205 + $0x54] sm:$0xf]
      %v503 = vld [vmem:[%s205 + $0x58] sm:$0xf]
      %v504 = vld [vmem:[%s205 + $0x5c] sm:$0xf]
      %v505 = vld [vmem:[%s205 + $0x60] sm:$0xf]
      %v506 = vld [vmem:[%s205 + $0x64] sm:$0xf]
      %v507 = vld [vmem:[%s205 + $0x68] sm:$0xf]
      %v508 = vld [vmem:[%s205 + $0x6c] sm:$0xf]
      %v509 = vld [vmem:[%s205 + $0x70] sm:$0xf]
      %v510 = vld [vmem:[%s205 + $0x74] sm:$0xf]
      %v511 = vld [vmem:[%s205 + $0x78] sm:$0xf]
      %v512 = vld [vmem:[%s205 + $0x7c] sm:$0xf]
      %v513 = vld [vmem:[%s205 + $0x80] sm:$0xf]
      %v514 = vld [vmem:[%s205 + $0x84] sm:$0xf]
      %v515 = vld [vmem:[%s205 + $0x88] sm:$0xf]
      %v516 = vld [vmem:[%s205 + $0x8c] sm:$0xf]
      %v517 = vld [vmem:[%s205 + $0x90] sm:$0xf]
      %v518 = vld [vmem:[%s205 + $0x94] sm:$0xf]
      %v519 = vld [vmem:[%s205 + $0x98] sm:$0xf]
      %v520 = vld [vmem:[%s205 + $0x9c] sm:$0xf]
      %v521 = vld [vmem:[%s205 + $0xa0] sm:$0xf]
      %v522 = vld [vmem:[%s205 + $0xa4] sm:$0xf]
      %v523 = vld [vmem:[%s205 + $0xa8] sm:$0xf]
      %v524 = vld [vmem:[%s205 + $0xac] sm:$0xf]
      %v525 = vld [vmem:[%s205 + $0xb0] sm:$0xf]
      %v526 = vld [vmem:[%s205 + $0xb4] sm:$0xf]
      %v527 = vld [vmem:[%s205 + $0xb8] sm:$0xf]
      %v528 = vld [vmem:[%s205 + $0xbc] sm:$0xf]
      %v529 = vld [vmem:[%s205 + $0xc0] sm:$0xf]
      %v530 = vld [vmem:[%s205 + $0xc4] sm:$0xf]
      %v531 = vld [vmem:[%s205 + $0xc8] sm:$0xf]
      %v532 = vld [vmem:[%s205 + $0xcc] sm:$0xf]
      %v533 = vld [vmem:[%s205 + $0xd0] sm:$0xf]
      %v534 = vld [vmem:[%s205 + $0xd4] sm:$0xf]
      %v535 = vld [vmem:[%s205 + $0xd8] sm:$0xf]
      %v536 = vld [vmem:[%s205 + $0xdc] sm:$0xf]
      %v537 = vld [vmem:[%s205 + $0xe0] sm:$0xf]
      %v538 = vld [vmem:[%s205 + $0xe4] sm:$0xf]
      %v539 = vld [vmem:[%s205 + $0xe8] sm:$0xf]
      %v540 = vld [vmem:[%s205 + $0xec] sm:$0xf]
      %v541 = vld [vmem:[%s205 + $0xf0] sm:$0xf]
      %v542 = vld [vmem:[%s205 + $0xf4] sm:$0xf]
      %v543 = vld [vmem:[%s205 + $0xf8] sm:$0xf]
      %v544 = vld [vmem:[%s205 + $0xfc] sm:$0xf]
      %v545 = vld [vmem:[%s205 + $0x100] sm:$0xf]
      %v546 = vld [vmem:[%s205 + $0x104] sm:$0xf]
      %v547 = vld [vmem:[%s205 + $0x108] sm:$0xf]
      %v548 = vld [vmem:[%s205 + $0x10c] sm:$0xf]
      %v549 = vld [vmem:[%s205 + $0x110] sm:$0xf]
      %v550 = vld [vmem:[%s205 + $0x114] sm:$0xf]
      %v551 = vld [vmem:[%s205 + $0x118] sm:$0xf]
      %v552 = vld [vmem:[%s205 + $0x11c] sm:$0xf]
      %v553 = vld [vmem:[%s205 + $0x120] sm:$0xf]
      %v554 = vld [vmem:[%s205 + $0x124] sm:$0xf]
      %v555 = vld [vmem:[%s205 + $0x128] sm:$0xf]
      %v556 = vld [vmem:[%s205 + $0x12c] sm:$0xf]
      %v557 = vld [vmem:[%s205 + $0x130] sm:$0xf]
      %v558 = vld [vmem:[%s205 + $0x134] sm:$0xf]
      %v559 = vld [vmem:[%s205 + $0x138] sm:$0xf]
      %v560 = vld [vmem:[%s205 + $0x13c] sm:$0xf]
      %v561 = vld [vmem:[%s205 + $0x140] sm:$0xf]
      %v562 = vld [vmem:[%s205 + $0x144] sm:$0xf]
      %v563 = vld [vmem:[%s205 + $0x148] sm:$0xf]
      %v564 = vld [vmem:[%s205 + $0x14c] sm:$0xf]
      %v565 = vld [vmem:[%s205 + $0x150] sm:$0xf]
      %v566 = vld [vmem:[%s205 + $0x154] sm:$0xf]
      %v567 = vld [vmem:[%s205 + $0x158] sm:$0xf]
      %v568 = vld [vmem:[%s205 + $0x15c] sm:$0xf]
      %v569 = vld [vmem:[%s205 + $0x160] sm:$0xf]
      %v570 = vld [vmem:[%s205 + $0x164] sm:$0xf]
      %v571 = vld [vmem:[%s205 + $0x168] sm:$0xf]
      %v572 = vld [vmem:[%s205 + $0x16c] sm:$0xf]
      %v573 = vld [vmem:[%s205 + $0x170] sm:$0xf]
      %v574 = vld [vmem:[%s205 + $0x174] sm:$0xf]
      %v575 = vld [vmem:[%s205 + $0x178] sm:$0xf]
      %v576 = vld [vmem:[%s205 + $0x17c] sm:$0xf]
      %v577 = vld [vmem:[%s205 + $0x180] sm:$0xf]
      %v578 = vld [vmem:[%s205 + $0x184] sm:$0xf]
      %v579 = vld [vmem:[%s205 + $0x188] sm:$0xf]
      %v580 = vld [vmem:[%s205 + $0x18c] sm:$0xf]
      %v581 = vld [vmem:[%s205 + $0x190] sm:$0xf]
      %v582 = vld [vmem:[%s205 + $0x194] sm:$0xf]
      %v583 = vld [vmem:[%s205 + $0x198] sm:$0xf]
      %v584 = vld [vmem:[%s205 + $0x19c] sm:$0xf]
      %v585 = vld [vmem:[%s205 + $0x1a0] sm:$0xf]
      %v586 = vld [vmem:[%s205 + $0x1a4] sm:$0xf]
      %v587 = vld [vmem:[%s205 + $0x1a8] sm:$0xf]
      %v588 = vld [vmem:[%s205 + $0x1ac] sm:$0xf]
      %v589 = vld [vmem:[%s205 + $0x1b0] sm:$0xf]
      %v590 = vld [vmem:[%s205 + $0x1b4] sm:$0xf]
      %v591 = vld [vmem:[%s205 + $0x1b8] sm:$0xf]
      %v592 = vld [vmem:[%s205 + $0x1bc] sm:$0xf]
      %v593 = vld [vmem:[%s205 + $0x1c0] sm:$0xf]
      %v594 = vld [vmem:[%s205 + $0x1c4] sm:$0xf]
      %v595 = vld [vmem:[%s205 + $0x1c8] sm:$0xf]
      %v596 = vld [vmem:[%s205 + $0x1cc] sm:$0xf]
      %v597 = vld [vmem:[%s205 + $0x1d0] sm:$0xf]
      %v598 = vld [vmem:[%s205 + $0x1d4] sm:$0xf]
      %v599 = vld [vmem:[%s205 + $0x1d8] sm:$0xf]
      %v600 = vld [vmem:[%s205 + $0x1dc] sm:$0xf]
      %v601 = vld [vmem:[%s205 + $0x1e0] sm:$0xf]
      %v602 = vld [vmem:[%s205 + $0x1e4] sm:$0xf]
      %v603 = vld [vmem:[%s205 + $0x1e8] sm:$0xf]
      %v604 = vld [vmem:[%s205 + $0x1ec] sm:$0xf]
      %v605 = vld [vmem:[%s205 + $0x1f0] sm:$0xf]
      %v606 = vld [vmem:[%s205 + $0x1f4] sm:$0xf]
      %v607 = vld [vmem:[%s205 + $0x1f8] sm:$0xf]
      %v608 = vld [vmem:[%s205 + $0x1fc] sm:$0xf]
      %v609 = vld [vmem:[%s211] sm:$0xf]
      %v610 = vld [vmem:[%s211 + $0x4] sm:$0xf]
      %v611 = vld [vmem:[%s211 + $0x8] sm:$0xf]
      %v612 = vld [vmem:[%s211 + $0xc] sm:$0xf]
      %v613 = vld [vmem:[%s211 + $0x10] sm:$0xf]
      %v614 = vld [vmem:[%s211 + $0x14] sm:$0xf]
      %v615 = vld [vmem:[%s211 + $0x18] sm:$0xf]
      %v616 = vld [vmem:[%s211 + $0x1c] sm:$0xf]
      %v617 = vld [vmem:[%s211 + $0x20] sm:$0xf]
      %v618 = vld [vmem:[%s211 + $0x24] sm:$0xf]
      %v619 = vld [vmem:[%s211 + $0x28] sm:$0xf]
      %v620 = vld [vmem:[%s211 + $0x2c] sm:$0xf]
      %v621 = vld [vmem:[%s211 + $0x30] sm:$0xf]
      %v622 = vld [vmem:[%s211 + $0x34] sm:$0xf]
      %v623 = vld [vmem:[%s211 + $0x38] sm:$0xf]
      %v624 = vld [vmem:[%s211 + $0x3c] sm:$0xf]
      %v753 = vunpack.c.l.b16 %v481
      %v754 = vunpack.c.l.b16 %v482
      %v755 = vunpack.c.l.b16 %v483
      %v756 = vunpack.c.l.b16 %v484
      %v757 = vunpack.c.l.b16 %v485
      %v758 = vunpack.c.l.b16 %v486
      %v759 = vunpack.c.l.b16 %v487
      %v760 = vunpack.c.l.b16 %v488
      %v761 = vunpack.c.l.b16 %v489
      %v762 = vunpack.c.l.b16 %v490
      %v763 = vunpack.c.l.b16 %v491
      %v764 = vunpack.c.l.b16 %v492
      %v765 = vunpack.c.l.b16 %v493
      %v766 = vunpack.c.l.b16 %v494
      %v767 = vunpack.c.l.b16 %v495
      %v768 = vunpack.c.l.b16 %v496
      %v769 = vunpack.c.l.b16 %v497
      %v770 = vunpack.c.l.b16 %v498
      %v771 = vunpack.c.l.b16 %v499
      %v772 = vunpack.c.l.b16 %v500
      %v773 = vunpack.c.l.b16 %v501
      %v774 = vunpack.c.l.b16 %v502
      %v775 = vunpack.c.l.b16 %v503
      %v776 = vunpack.c.l.b16 %v504
      %v777 = vunpack.c.l.b16 %v505
      %v778 = vunpack.c.l.b16 %v506
      %v779 = vunpack.c.l.b16 %v507
      %v780 = vunpack.c.l.b16 %v508
      %v781 = vunpack.c.l.b16 %v509
      %v782 = vunpack.c.l.b16 %v510
      %v783 = vunpack.c.l.b16 %v511
      %v784 = vunpack.c.l.b16 %v512
      %v785 = vunpack.c.l.b16 %v513
      %v786 = vunpack.c.l.b16 %v514
      %v787 = vunpack.c.l.b16 %v515
      %v788 = vunpack.c.l.b16 %v516
      %v789 = vunpack.c.l.b16 %v517
      %v790 = vunpack.c.l.b16 %v518
      %v791 = vunpack.c.l.b16 %v519
      %v792 = vunpack.c.l.b16 %v520
      %v793 = vunpack.c.l.b16 %v521
      %v794 = vunpack.c.l.b16 %v522
      %v795 = vunpack.c.l.b16 %v523
      %v796 = vunpack.c.l.b16 %v524
      %v797 = vunpack.c.l.b16 %v525
      %v798 = vunpack.c.l.b16 %v526
      %v799 = vunpack.c.l.b16 %v527
      %v800 = vunpack.c.l.b16 %v528
      %v801 = vunpack.c.l.b16 %v529
      %v802 = vunpack.c.l.b16 %v530
      %v803 = vunpack.c.l.b16 %v531
      %v804 = vunpack.c.l.b16 %v532
      %v805 = vunpack.c.l.b16 %v533
      %v806 = vunpack.c.l.b16 %v534
      %v807 = vunpack.c.l.b16 %v535
      %v808 = vunpack.c.l.b16 %v536
      %v809 = vunpack.c.l.b16 %v537
      %v810 = vunpack.c.l.b16 %v538
      %v811 = vunpack.c.l.b16 %v539
      %v812 = vunpack.c.l.b16 %v540
      %v813 = vunpack.c.l.b16 %v541
      %v814 = vunpack.c.l.b16 %v542
      %v815 = vunpack.c.l.b16 %v543
      %v816 = vunpack.c.l.b16 %v544
      %v817 = vunpack.c.l.b16 %v545
      %v818 = vunpack.c.l.b16 %v546
      %v819 = vunpack.c.l.b16 %v547
      %v820 = vunpack.c.l.b16 %v548
      %v821 = vunpack.c.l.b16 %v549
      %v822 = vunpack.c.l.b16 %v550
      %v823 = vunpack.c.l.b16 %v551
      %v824 = vunpack.c.l.b16 %v552
      %v825 = vunpack.c.l.b16 %v553
      %v826 = vunpack.c.l.b16 %v554
      %v827 = vunpack.c.l.b16 %v555
      %v828 = vunpack.c.l.b16 %v556
      %v829 = vunpack.c.l.b16 %v557
      %v830 = vunpack.c.l.b16 %v558
      %v831 = vunpack.c.l.b16 %v559
      %v832 = vunpack.c.l.b16 %v560
      %v833 = vunpack.c.l.b16 %v561
      %v834 = vunpack.c.l.b16 %v562
      %v835 = vunpack.c.l.b16 %v563
      %v836 = vunpack.c.l.b16 %v564
      %v837 = vunpack.c.l.b16 %v565
      %v838 = vunpack.c.l.b16 %v566
      %v839 = vunpack.c.l.b16 %v567
      %v840 = vunpack.c.l.b16 %v568
      %v841 = vunpack.c.l.b16 %v569
      %v842 = vunpack.c.l.b16 %v570
      %v843 = vunpack.c.l.b16 %v571
      %v844 = vunpack.c.l.b16 %v572
      %v845 = vunpack.c.l.b16 %v573
      %v846 = vunpack.c.l.b16 %v574
      %v847 = vunpack.c.l.b16 %v575
      %v848 = vunpack.c.l.b16 %v576
      %v849 = vunpack.c.l.b16 %v577
      %v850 = vunpack.c.l.b16 %v578
      %v851 = vunpack.c.l.b16 %v579
      %v852 = vunpack.c.l.b16 %v580
      %v853 = vunpack.c.l.b16 %v581
      %v854 = vunpack.c.l.b16 %v582
      %v855 = vunpack.c.l.b16 %v583
      %v856 = vunpack.c.l.b16 %v584
      %v857 = vunpack.c.l.b16 %v585
      %v858 = vunpack.c.l.b16 %v586
      %v859 = vunpack.c.l.b16 %v587
      %v860 = vunpack.c.l.b16 %v588
      %v861 = vunpack.c.l.b16 %v589
      %v862 = vunpack.c.l.b16 %v590
      %v863 = vunpack.c.l.b16 %v591
      %v864 = vunpack.c.l.b16 %v592
      %v865 = vunpack.c.l.b16 %v593
      %v866 = vunpack.c.l.b16 %v594
      %v867 = vunpack.c.l.b16 %v595
      %v868 = vunpack.c.l.b16 %v596
      %v869 = vunpack.c.l.b16 %v597
      %v870 = vunpack.c.l.b16 %v598
      %v871 = vunpack.c.l.b16 %v599
      %v872 = vunpack.c.l.b16 %v600
      %v873 = vunpack.c.l.b16 %v601
      %v874 = vunpack.c.l.b16 %v602
      %v875 = vunpack.c.l.b16 %v603
      %v876 = vunpack.c.l.b16 %v604
      %v877 = vunpack.c.l.b16 %v605
      %v878 = vunpack.c.l.b16 %v606
      %v879 = vunpack.c.l.b16 %v607
      %v880 = vunpack.c.l.b16 %v608
      %v881 = vpack.c.b16 %v754, %v753
      %v882 = vpack.c.b16 %v756, %v755
      %v883 = vpack.c.b16 %v758, %v757
      %v884 = vpack.c.b16 %v760, %v759
      %v885 = vpack.c.b16 %v762, %v761
      %v886 = vpack.c.b16 %v764, %v763
      %v887 = vpack.c.b16 %v766, %v765
      %v888 = vpack.c.b16 %v768, %v767
      %v889 = vpack.c.b16 %v770, %v769
      %v890 = vpack.c.b16 %v772, %v771
      %v891 = vpack.c.b16 %v774, %v773
      %v892 = vpack.c.b16 %v776, %v775
      %v893 = vpack.c.b16 %v778, %v777
      %v894 = vpack.c.b16 %v780, %v779
      %v895 = vpack.c.b16 %v782, %v781
      %v896 = vpack.c.b16 %v784, %v783
      %v897 = vpack.c.b16 %v786, %v785
      %v898 = vpack.c.b16 %v788, %v787
      %v899 = vpack.c.b16 %v790, %v789
      %v900 = vpack.c.b16 %v792, %v791
      %v901 = vpack.c.b16 %v794, %v793
      %v902 = vpack.c.b16 %v796, %v795
      %v903 = vpack.c.b16 %v798, %v797
      %v904 = vpack.c.b16 %v800, %v799
      %v905 = vpack.c.b16 %v802, %v801
      %v906 = vpack.c.b16 %v804, %v803
      %v907 = vpack.c.b16 %v806, %v805
      %v908 = vpack.c.b16 %v808, %v807
      %v909 = vpack.c.b16 %v810, %v809
      %v910 = vpack.c.b16 %v812, %v811
      %v911 = vpack.c.b16 %v814, %v813
      %v912 = vpack.c.b16 %v816, %v815
      %v913 = vpack.c.b16 %v818, %v817
      %v914 = vpack.c.b16 %v820, %v819
      %v915 = vpack.c.b16 %v822, %v821
      %v916 = vpack.c.b16 %v824, %v823
      %v917 = vpack.c.b16 %v826, %v825
      %v918 = vpack.c.b16 %v828, %v827
      %v919 = vpack.c.b16 %v830, %v829
      %v920 = vpack.c.b16 %v832, %v831
      %v921 = vpack.c.b16 %v834, %v833
      %v922 = vpack.c.b16 %v836, %v835
      %v923 = vpack.c.b16 %v838, %v837
      %v924 = vpack.c.b16 %v840, %v839
      %v925 = vpack.c.b16 %v842, %v841
      %v926 = vpack.c.b16 %v844, %v843
      %v927 = vpack.c.b16 %v846, %v845
      %v928 = vpack.c.b16 %v848, %v847
      %v929 = vpack.c.b16 %v850, %v849
      %v930 = vpack.c.b16 %v852, %v851
      %v931 = vpack.c.b16 %v854, %v853
      %v932 = vpack.c.b16 %v856, %v855
      %v933 = vpack.c.b16 %v858, %v857
      %v934 = vpack.c.b16 %v860, %v859
      %v935 = vpack.c.b16 %v862, %v861
      %v936 = vpack.c.b16 %v864, %v863
      %v937 = vpack.c.b16 %v866, %v865
      %v938 = vpack.c.b16 %v868, %v867
      %v939 = vpack.c.b16 %v870, %v869
      %v940 = vpack.c.b16 %v872, %v871
      %v941 = vpack.c.b16 %v874, %v873
      %v942 = vpack.c.b16 %v876, %v875
      %v943 = vpack.c.b16 %v878, %v877
      %v944 = vpack.c.b16 %v880, %v879
      %v1025 = vunpack.c.l.b16 %v609
      %v1026 = vunpack.c.l.b16 %v610
      %v1027 = vunpack.c.l.b16 %v611
      %v1028 = vunpack.c.l.b16 %v612
      %v1029 = vunpack.c.l.b16 %v613
      %v1030 = vunpack.c.l.b16 %v614
      %v1031 = vunpack.c.l.b16 %v615
      %v1032 = vunpack.c.l.b16 %v616
      %v1033 = vunpack.c.l.b16 %v617
      %v1034 = vunpack.c.l.b16 %v618
      %v1035 = vunpack.c.l.b16 %v619
      %v1036 = vunpack.c.l.b16 %v620
      %v1037 = vunpack.c.l.b16 %v621
      %v1038 = vunpack.c.l.b16 %v622
      %v1039 = vunpack.c.l.b16 %v623
      %v1040 = vunpack.c.l.b16 %v624
      %v1041 = vpack.c.b16 %v1026, %v1025
      %v1042 = vpack.c.b16 %v1028, %v1027
      %v1043 = vpack.c.b16 %v1030, %v1029
      %v1044 = vpack.c.b16 %v1032, %v1031
      %v1045 = vpack.c.b16 %v1034, %v1033
      %v1046 = vpack.c.b16 %v1036, %v1035
      %v1047 = vpack.c.b16 %v1038, %v1037
      %v1048 = vpack.c.b16 %v1040, %v1039
      %1057 = vmatprep.subr.bf16.mxu0 0
      %1058 = vmatpush1.bf16.msra.mxu0 %v1048
      %1059 = vmatprep.subr.bf16.mxu0 0
      %1060 = vmatpush1.bf16.msra.mxu0 %v1047
      %1061 = vmatprep.subr.bf16.mxu0 0
      %1062 = vmatpush1.bf16.msra.mxu0 %v1046
      %1063 = vmatprep.subr.bf16.mxu0 0
      %1064 = vmatpush1.bf16.msra.mxu0 %v1045
      %1065 = vmatprep.subr.bf16.mxu0 0
      %1066 = vmatpush1.bf16.msra.mxu0 %v1044
      %1067 = vmatprep.subr.bf16.mxu0 0
      %1068 = vmatpush1.bf16.msra.mxu0 %v1043
      %1069 = vmatprep.subr.bf16.mxu0 0
      %1070 = vmatpush1.bf16.msra.mxu0 %v1042
      %1071 = vmatprep.subr.bf16.mxu0 0
      %1072 = vmatpush1.bf16.msra.mxu0 %v1041
      %1073 = vmatprep.subr.bf16.mxu0 0
      %1074 = vmatpush2.bf16.msra.mxu0 0
      %1075 = vmatprep.subr.bf16.mxu0 0
      %1076 = vmatpush2.bf16.msra.mxu0 0
      %1077 = vmatprep.subr.bf16.mxu0 0
      %1078 = vmatpush2.bf16.msra.mxu0 0
      %1079 = vmatprep.subr.bf16.mxu0 0
      %1080 = vmatpush2.bf16.msra.mxu0 0
      %1081 = vmatprep.subr.bf16.mxu0 0
      %1082 = vmatpush2.bf16.msra.mxu0 0
      %1083 = vmatprep.subr.bf16.mxu0 0
      %1084 = vmatpush2.bf16.msra.mxu0 0
      %1085 = vmatprep.subr.bf16.mxu0 0
      %1086 = vmatpush2.bf16.msra.mxu0 0
      %1087 = vmatprep.subr.bf16.mxu0 0
      %1088 = vmatpush2.bf16.msra.mxu0 0
      %1089 = vmatprep.mubr.bf16.mxu0 0
      %1090 = vmatmul.mubr.bf16.gmra.mxu0 %v881
      %v1091 = vpop.f32.mrf.mxu0
      %v1092 = vadd.f32 0.0, %v1091
      %v1093 = vpop.f32.mrf.mxu0
      %v1094 = vpop.f32.mrf.mxu0
      %v1095 = vadd.f32 0.0, %v1094
      %v1096 = vpop.f32.mrf.mxu0
      %1097 = vmatprep.mubr.bf16.mxu0 0
      %1098 = vmatmul.mubr.bf16.gmra.mxu0 %v882
      %v1099 = vpop.f32.mrf.mxu0
      %v1100 = vadd.f32 0.0, %v1099
      %v1101 = vpop.f32.mrf.mxu0
      %v1102 = vpop.f32.mrf.mxu0
      %v1103 = vadd.f32 0.0, %v1102
      %v1104 = vpop.f32.mrf.mxu0
      %1105 = vmatprep.mubr.bf16.mxu0 0
      %1106 = vmatmul.mubr.bf16.gmra.mxu0 %v883
      %v1107 = vpop.f32.mrf.mxu0
      %v1108 = vadd.f32 0.0, %v1107
      %v1109 = vpop.f32.mrf.mxu0
      %v1110 = vpop.f32.mrf.mxu0
      %v1111 = vadd.f32 0.0, %v1110
      %v1112 = vpop.f32.mrf.mxu0
      %1113 = vmatprep.mubr.bf16.mxu0 0
      %1114 = vmatmul.mubr.bf16.gmra.mxu0 %v884
      %v1115 = vpop.f32.mrf.mxu0
      %v1116 = vadd.f32 0.0, %v1115
      %v1117 = vpop.f32.mrf.mxu0
      %v1118 = vpop.f32.mrf.mxu0
      %v1119 = vadd.f32 0.0, %v1118
      %v1120 = vpop.f32.mrf.mxu0
      %1121 = vmatprep.mubr.bf16.mxu0 0
      %1122 = vmatmul.mubr.bf16.gmra.mxu0 %v885
      %v1123 = vpop.f32.mrf.mxu0
      %v1124 = vadd.f32 0.0, %v1123
      %v1125 = vpop.f32.mrf.mxu0
      %v1126 = vpop.f32.mrf.mxu0
      %v1127 = vadd.f32 0.0, %v1126
      %v1128 = vpop.f32.mrf.mxu0
      %1129 = vmatprep.mubr.bf16.mxu0 0
      %1130 = vmatmul.mubr.bf16.gmra.mxu0 %v886
      %v1131 = vpop.f32.mrf.mxu0
      %v1132 = vadd.f32 0.0, %v1131
      %v1133 = vpop.f32.mrf.mxu0
      %v1134 = vpop.f32.mrf.mxu0
      %v1135 = vadd.f32 0.0, %v1134
      %v1136 = vpop.f32.mrf.mxu0
      %1137 = vmatprep.mubr.bf16.mxu0 0
      %1138 = vmatmul.mubr.bf16.gmra.mxu0 %v887
      %v1139 = vpop.f32.mrf.mxu0
      %v1140 = vadd.f32 0.0, %v1139
      %v1141 = vpop.f32.mrf.mxu0
      %v1142 = vpop.f32.mrf.mxu0
      %v1143 = vadd.f32 0.0, %v1142
      %v1144 = vpop.f32.mrf.mxu0
      %1145 = vmatprep.mubr.bf16.mxu0 0
      %1146 = vmatmul.mubr.bf16.gmra.mxu0 %v888
      %v1147 = vpop.f32.mrf.mxu0
      %v1148 = vadd.f32 0.0, %v1147
      %v1149 = vpop.f32.mrf.mxu0
      %v1150 = vpop.f32.mrf.mxu0
      %v1151 = vadd.f32 0.0, %v1150
      %v1152 = vpop.f32.mrf.mxu0
      %1153 = vmatprep.mubr.bf16.mxu0 0
      %1154 = vmatmul.mubr.bf16.gmra.mxu0 %v889
      %v1155 = vpop.f32.mrf.mxu0
      %v1156 = vadd.f32 0.0, %v1155
      %v1157 = vpop.f32.mrf.mxu0
      %v1158 = vpop.f32.mrf.mxu0
      %v1159 = vadd.f32 0.0, %v1158
      %v1160 = vpop.f32.mrf.mxu0
      %1161 = vmatprep.mubr.bf16.mxu0 0
      %1162 = vmatmul.mubr.bf16.gmra.mxu0 %v890
      %v1163 = vpop.f32.mrf.mxu0
      %v1164 = vadd.f32 0.0, %v1163
      %v1165 = vpop.f32.mrf.mxu0
      %v1166 = vpop.f32.mrf.mxu0
      %v1167 = vadd.f32 0.0, %v1166
      %v1168 = vpop.f32.mrf.mxu0
      %1169 = vmatprep.mubr.bf16.mxu0 0
      %1170 = vmatmul.mubr.bf16.gmra.mxu0 %v891
      %v1171 = vpop.f32.mrf.mxu0
      %v1172 = vadd.f32 0.0, %v1171
      %v1173 = vpop.f32.mrf.mxu0
      %v1174 = vpop.f32.mrf.mxu0
      %v1175 = vadd.f32 0.0, %v1174
      %v1176 = vpop.f32.mrf.mxu0
      %1177 = vmatprep.mubr.bf16.mxu0 0
      %1178 = vmatmul.mubr.bf16.gmra.mxu0 %v892
      %v1179 = vpop.f32.mrf.mxu0
      %v1180 = vadd.f32 0.0, %v1179
      %v1181 = vpop.f32.mrf.mxu0
      %v1182 = vpop.f32.mrf.mxu0
      %v1183 = vadd.f32 0.0, %v1182
      %v1184 = vpop.f32.mrf.mxu0
      %1185 = vmatprep.mubr.bf16.mxu0 0
      %1186 = vmatmul.mubr.bf16.gmra.mxu0 %v893
      %v1187 = vpop.f32.mrf.mxu0
      %v1188 = vadd.f32 0.0, %v1187
      %v1189 = vpop.f32.mrf.mxu0
      %v1190 = vpop.f32.mrf.mxu0
      %v1191 = vadd.f32 0.0, %v1190
      %v1192 = vpop.f32.mrf.mxu0
      %1193 = vmatprep.mubr.bf16.mxu0 0
      %1194 = vmatmul.mubr.bf16.gmra.mxu0 %v894
      %v1195 = vpop.f32.mrf.mxu0
      %v1196 = vadd.f32 0.0, %v1195
      %v1197 = vpop.f32.mrf.mxu0
      %v1198 = vpop.f32.mrf.mxu0
      %v1199 = vadd.f32 0.0, %v1198
      %v1200 = vpop.f32.mrf.mxu0
      %1201 = vmatprep.mubr.bf16.mxu0 0
      %1202 = vmatmul.mubr.bf16.gmra.mxu0 %v895
      %v1203 = vpop.f32.mrf.mxu0
      %v1204 = vadd.f32 0.0, %v1203
      %v1205 = vpop.f32.mrf.mxu0
      %v1206 = vpop.f32.mrf.mxu0
      %v1207 = vadd.f32 0.0, %v1206
      %v1208 = vpop.f32.mrf.mxu0
      %1209 = vmatprep.mubr.bf16.mxu0 0
      %1210 = vmatmul.mubr.bf16.gmra.mxu0 %v896
      %v1211 = vpop.f32.mrf.mxu0
      %v1212 = vadd.f32 0.0, %v1211
      %v1213 = vpop.f32.mrf.mxu0
      %v1214 = vpop.f32.mrf.mxu0
      %v1215 = vadd.f32 0.0, %v1214
      %v1216 = vpop.f32.mrf.mxu0
      %1217 = vmatprep.mubr.bf16.mxu0 0
      %1218 = vmatmul.mubr.bf16.gmra.mxu0 %v897
      %v1219 = vpop.f32.mrf.mxu0
      %v1220 = vadd.f32 0.0, %v1219
      %v1221 = vpop.f32.mrf.mxu0
      %v1222 = vpop.f32.mrf.mxu0
      %v1223 = vadd.f32 0.0, %v1222
      %v1224 = vpop.f32.mrf.mxu0
      %1225 = vmatprep.mubr.bf16.mxu0 0
      %1226 = vmatmul.mubr.bf16.gmra.mxu0 %v898
      %v1227 = vpop.f32.mrf.mxu0
      %v1228 = vadd.f32 0.0, %v1227
      %v1229 = vpop.f32.mrf.mxu0
      %v1230 = vpop.f32.mrf.mxu0
      %v1231 = vadd.f32 0.0, %v1230
      %v1232 = vpop.f32.mrf.mxu0
      %1233 = vmatprep.mubr.bf16.mxu0 0
      %1234 = vmatmul.mubr.bf16.gmra.mxu0 %v899
      %v1235 = vpop.f32.mrf.mxu0
      %v1236 = vadd.f32 0.0, %v1235
      %v1237 = vpop.f32.mrf.mxu0
      %v1238 = vpop.f32.mrf.mxu0
      %v1239 = vadd.f32 0.0, %v1238
      %v1240 = vpop.f32.mrf.mxu0
      %1241 = vmatprep.mubr.bf16.mxu0 0
      %1242 = vmatmul.mubr.bf16.gmra.mxu0 %v900
      %v1243 = vpop.f32.mrf.mxu0
      %v1244 = vadd.f32 0.0, %v1243
      %v1245 = vpop.f32.mrf.mxu0
      %v1246 = vpop.f32.mrf.mxu0
      %v1247 = vadd.f32 0.0, %v1246
      %v1248 = vpop.f32.mrf.mxu0
      %1249 = vmatprep.mubr.bf16.mxu0 0
      %1250 = vmatmul.mubr.bf16.gmra.mxu0 %v901
      %v1251 = vpop.f32.mrf.mxu0
      %v1252 = vadd.f32 0.0, %v1251
      %v1253 = vpop.f32.mrf.mxu0
      %v1254 = vpop.f32.mrf.mxu0
      %v1255 = vadd.f32 0.0, %v1254
      %v1256 = vpop.f32.mrf.mxu0
      %1257 = vmatprep.mubr.bf16.mxu0 0
      %1258 = vmatmul.mubr.bf16.gmra.mxu0 %v902
      %v1259 = vpop.f32.mrf.mxu0
      %v1260 = vadd.f32 0.0, %v1259
      %v1261 = vpop.f32.mrf.mxu0
      %v1262 = vpop.f32.mrf.mxu0
      %v1263 = vadd.f32 0.0, %v1262
      %v1264 = vpop.f32.mrf.mxu0
      %1265 = vmatprep.mubr.bf16.mxu0 0
      %1266 = vmatmul.mubr.bf16.gmra.mxu0 %v903
      %v1267 = vpop.f32.mrf.mxu0
      %v1268 = vadd.f32 0.0, %v1267
      %v1269 = vpop.f32.mrf.mxu0
      %v1270 = vpop.f32.mrf.mxu0
      %v1271 = vadd.f32 0.0, %v1270
      %v1272 = vpop.f32.mrf.mxu0
      %1273 = vmatprep.mubr.bf16.mxu0 0
      %1274 = vmatmul.mubr.bf16.gmra.mxu0 %v904
      %v1275 = vpop.f32.mrf.mxu0
      %v1276 = vadd.f32 0.0, %v1275
      %v1277 = vpop.f32.mrf.mxu0
      %v1278 = vpop.f32.mrf.mxu0
      %v1279 = vadd.f32 0.0, %v1278
      %v1280 = vpop.f32.mrf.mxu0
      %1281 = vmatprep.mubr.bf16.mxu0 0
      %1282 = vmatmul.mubr.bf16.gmra.mxu0 %v905
      %v1283 = vpop.f32.mrf.mxu0
      %v1284 = vadd.f32 0.0, %v1283
      %v1285 = vpop.f32.mrf.mxu0
      %v1286 = vpop.f32.mrf.mxu0
      %v1287 = vadd.f32 0.0, %v1286
      %v1288 = vpop.f32.mrf.mxu0
      %1289 = vmatprep.mubr.bf16.mxu0 0
      %1290 = vmatmul.mubr.bf16.gmra.mxu0 %v906
      %v1291 = vpop.f32.mrf.mxu0
      %v1292 = vadd.f32 0.0, %v1291
      %v1293 = vpop.f32.mrf.mxu0
      %v1294 = vpop.f32.mrf.mxu0
      %v1295 = vadd.f32 0.0, %v1294
      %v1296 = vpop.f32.mrf.mxu0
      %1297 = vmatprep.mubr.bf16.mxu0 0
      %1298 = vmatmul.mubr.bf16.gmra.mxu0 %v907
      %v1299 = vpop.f32.mrf.mxu0
      %v1300 = vadd.f32 0.0, %v1299
      %v1301 = vpop.f32.mrf.mxu0
      %v1302 = vpop.f32.mrf.mxu0
      %v1303 = vadd.f32 0.0, %v1302
      %v1304 = vpop.f32.mrf.mxu0
      %1305 = vmatprep.mubr.bf16.mxu0 0
      %1306 = vmatmul.mubr.bf16.gmra.mxu0 %v908
      %v1307 = vpop.f32.mrf.mxu0
      %v1308 = vadd.f32 0.0, %v1307
      %v1309 = vpop.f32.mrf.mxu0
      %v1310 = vpop.f32.mrf.mxu0
      %v1311 = vadd.f32 0.0, %v1310
      %v1312 = vpop.f32.mrf.mxu0
      %1313 = vmatprep.mubr.bf16.mxu0 0
      %1314 = vmatmul.mubr.bf16.gmra.mxu0 %v909
      %v1315 = vpop.f32.mrf.mxu0
      %v1316 = vadd.f32 0.0, %v1315
      %v1317 = vpop.f32.mrf.mxu0
      %v1318 = vpop.f32.mrf.mxu0
      %v1319 = vadd.f32 0.0, %v1318
      %v1320 = vpop.f32.mrf.mxu0
      %1321 = vmatprep.mubr.bf16.mxu0 0
      %1322 = vmatmul.mubr.bf16.gmra.mxu0 %v910
      %v1323 = vpop.f32.mrf.mxu0
      %v1324 = vadd.f32 0.0, %v1323
      %v1325 = vpop.f32.mrf.mxu0
      %v1326 = vpop.f32.mrf.mxu0
      %v1327 = vadd.f32 0.0, %v1326
      %v1328 = vpop.f32.mrf.mxu0
      %1329 = vmatprep.mubr.bf16.mxu0 0
      %1330 = vmatmul.mubr.bf16.gmra.mxu0 %v911
      %v1331 = vpop.f32.mrf.mxu0
      %v1332 = vadd.f32 0.0, %v1331
      %v1333 = vpop.f32.mrf.mxu0
      %v1334 = vpop.f32.mrf.mxu0
      %v1335 = vadd.f32 0.0, %v1334
      %v1336 = vpop.f32.mrf.mxu0
      %1337 = vmatprep.mubr.bf16.mxu0 0
      %1338 = vmatmul.mubr.bf16.gmra.mxu0 %v912
      %v1339 = vpop.f32.mrf.mxu0
      %v1340 = vadd.f32 0.0, %v1339
      %v1341 = vpop.f32.mrf.mxu0
      %v1342 = vpop.f32.mrf.mxu0
      %v1343 = vadd.f32 0.0, %v1342
      %v1344 = vpop.f32.mrf.mxu0
      %1345 = vmatprep.mubr.bf16.mxu0 0
      %1346 = vmatmul.mubr.bf16.gmra.mxu0 %v913
      %v1347 = vpop.f32.mrf.mxu0
      %v1348 = vadd.f32 0.0, %v1347
      %v1349 = vpop.f32.mrf.mxu0
      %v1350 = vpop.f32.mrf.mxu0
      %v1351 = vadd.f32 0.0, %v1350
      %v1352 = vpop.f32.mrf.mxu0
      %1353 = vmatprep.mubr.bf16.mxu0 0
      %1354 = vmatmul.mubr.bf16.gmra.mxu0 %v914
      %v1355 = vpop.f32.mrf.mxu0
      %v1356 = vadd.f32 0.0, %v1355
      %v1357 = vpop.f32.mrf.mxu0
      %v1358 = vpop.f32.mrf.mxu0
      %v1359 = vadd.f32 0.0, %v1358
      %v1360 = vpop.f32.mrf.mxu0
      %1361 = vmatprep.mubr.bf16.mxu0 0
      %1362 = vmatmul.mubr.bf16.gmra.mxu0 %v915
      %v1363 = vpop.f32.mrf.mxu0
      %v1364 = vadd.f32 0.0, %v1363
      %v1365 = vpop.f32.mrf.mxu0
      %v1366 = vpop.f32.mrf.mxu0
      %v1367 = vadd.f32 0.0, %v1366
      %v1368 = vpop.f32.mrf.mxu0
      %1369 = vmatprep.mubr.bf16.mxu0 0
      %1370 = vmatmul.mubr.bf16.gmra.mxu0 %v916
      %v1371 = vpop.f32.mrf.mxu0
      %v1372 = vadd.f32 0.0, %v1371
      %v1373 = vpop.f32.mrf.mxu0
      %v1374 = vpop.f32.mrf.mxu0
      %v1375 = vadd.f32 0.0, %v1374
      %v1376 = vpop.f32.mrf.mxu0
      %1377 = vmatprep.mubr.bf16.mxu0 0
      %1378 = vmatmul.mubr.bf16.gmra.mxu0 %v917
      %v1379 = vpop.f32.mrf.mxu0
      %v1380 = vadd.f32 0.0, %v1379
      %v1381 = vpop.f32.mrf.mxu0
      %v1382 = vpop.f32.mrf.mxu0
      %v1383 = vadd.f32 0.0, %v1382
      %v1384 = vpop.f32.mrf.mxu0
      %1385 = vmatprep.mubr.bf16.mxu0 0
      %1386 = vmatmul.mubr.bf16.gmra.mxu0 %v918
      %v1387 = vpop.f32.mrf.mxu0
      %v1388 = vadd.f32 0.0, %v1387
      %v1389 = vpop.f32.mrf.mxu0
      %v1390 = vpop.f32.mrf.mxu0
      %v1391 = vadd.f32 0.0, %v1390
      %v1392 = vpop.f32.mrf.mxu0
      %1393 = vmatprep.mubr.bf16.mxu0 0
      %1394 = vmatmul.mubr.bf16.gmra.mxu0 %v919
      %v1395 = vpop.f32.mrf.mxu0
      %v1396 = vadd.f32 0.0, %v1395
      %v1397 = vpop.f32.mrf.mxu0
      %v1398 = vpop.f32.mrf.mxu0
      %v1399 = vadd.f32 0.0, %v1398
      %v1400 = vpop.f32.mrf.mxu0
      %1401 = vmatprep.mubr.bf16.mxu0 0
      %1402 = vmatmul.mubr.bf16.gmra.mxu0 %v920
      %v1403 = vpop.f32.mrf.mxu0
      %v1404 = vadd.f32 0.0, %v1403
      %v1405 = vpop.f32.mrf.mxu0
      %v1406 = vpop.f32.mrf.mxu0
      %v1407 = vadd.f32 0.0, %v1406
      %v1408 = vpop.f32.mrf.mxu0
      %1409 = vmatprep.mubr.bf16.mxu0 0
      %1410 = vmatmul.mubr.bf16.gmra.mxu0 %v921
      %v1411 = vpop.f32.mrf.mxu0
      %v1412 = vadd.f32 0.0, %v1411
      %v1413 = vpop.f32.mrf.mxu0
      %v1414 = vpop.f32.mrf.mxu0
      %v1415 = vadd.f32 0.0, %v1414
      %v1416 = vpop.f32.mrf.mxu0
      %1417 = vmatprep.mubr.bf16.mxu0 0
      %1418 = vmatmul.mubr.bf16.gmra.mxu0 %v922
      %v1419 = vpop.f32.mrf.mxu0
      %v1420 = vadd.f32 0.0, %v1419
      %v1421 = vpop.f32.mrf.mxu0
      %v1422 = vpop.f32.mrf.mxu0
      %v1423 = vadd.f32 0.0, %v1422
      %v1424 = vpop.f32.mrf.mxu0
      %1425 = vmatprep.mubr.bf16.mxu0 0
      %1426 = vmatmul.mubr.bf16.gmra.mxu0 %v923
      %v1427 = vpop.f32.mrf.mxu0
      %v1428 = vadd.f32 0.0, %v1427
      %v1429 = vpop.f32.mrf.mxu0
      %v1430 = vpop.f32.mrf.mxu0
      %v1431 = vadd.f32 0.0, %v1430
      %v1432 = vpop.f32.mrf.mxu0
      %1433 = vmatprep.mubr.bf16.mxu0 0
      %1434 = vmatmul.mubr.bf16.gmra.mxu0 %v924
      %v1435 = vpop.f32.mrf.mxu0
      %v1436 = vadd.f32 0.0, %v1435
      %v1437 = vpop.f32.mrf.mxu0
      %v1438 = vpop.f32.mrf.mxu0
      %v1439 = vadd.f32 0.0, %v1438
      %v1440 = vpop.f32.mrf.mxu0
      %1441 = vmatprep.mubr.bf16.mxu0 0
      %1442 = vmatmul.mubr.bf16.gmra.mxu0 %v925
      %v1443 = vpop.f32.mrf.mxu0
      %v1444 = vadd.f32 0.0, %v1443
      %v1445 = vpop.f32.mrf.mxu0
      %v1446 = vpop.f32.mrf.mxu0
      %v1447 = vadd.f32 0.0, %v1446
      %v1448 = vpop.f32.mrf.mxu0
      %1449 = vmatprep.mubr.bf16.mxu0 0
      %1450 = vmatmul.mubr.bf16.gmra.mxu0 %v926
      %v1451 = vpop.f32.mrf.mxu0
      %v1452 = vadd.f32 0.0, %v1451
      %v1453 = vpop.f32.mrf.mxu0
      %v1454 = vpop.f32.mrf.mxu0
      %v1455 = vadd.f32 0.0, %v1454
      %v1456 = vpop.f32.mrf.mxu0
      %1457 = vmatprep.mubr.bf16.mxu0 0
      %1458 = vmatmul.mubr.bf16.gmra.mxu0 %v927
      %v1459 = vpop.f32.mrf.mxu0
      %v1460 = vadd.f32 0.0, %v1459
      %v1461 = vpop.f32.mrf.mxu0
      %v1462 = vpop.f32.mrf.mxu0
      %v1463 = vadd.f32 0.0, %v1462
      %v1464 = vpop.f32.mrf.mxu0
      %1465 = vmatprep.mubr.bf16.mxu0 0
      %1466 = vmatmul.mubr.bf16.gmra.mxu0 %v928
      %v1467 = vpop.f32.mrf.mxu0
      %v1468 = vadd.f32 0.0, %v1467
      %v1469 = vpop.f32.mrf.mxu0
      %v1470 = vpop.f32.mrf.mxu0
      %v1471 = vadd.f32 0.0, %v1470
      %v1472 = vpop.f32.mrf.mxu0
      %1473 = vmatprep.mubr.bf16.mxu0 0
      %1474 = vmatmul.mubr.bf16.gmra.mxu0 %v929
      %v1475 = vpop.f32.mrf.mxu0
      %v1476 = vadd.f32 0.0, %v1475
      %v1477 = vpop.f32.mrf.mxu0
      %v1478 = vpop.f32.mrf.mxu0
      %v1479 = vadd.f32 0.0, %v1478
      %v1480 = vpop.f32.mrf.mxu0
      %1481 = vmatprep.mubr.bf16.mxu0 0
      %1482 = vmatmul.mubr.bf16.gmra.mxu0 %v930
      %v1483 = vpop.f32.mrf.mxu0
      %v1484 = vadd.f32 0.0, %v1483
      %v1485 = vpop.f32.mrf.mxu0
      %v1486 = vpop.f32.mrf.mxu0
      %v1487 = vadd.f32 0.0, %v1486
      %v1488 = vpop.f32.mrf.mxu0
      %1489 = vmatprep.mubr.bf16.mxu0 0
      %1490 = vmatmul.mubr.bf16.gmra.mxu0 %v931
      %v1491 = vpop.f32.mrf.mxu0
      %v1492 = vadd.f32 0.0, %v1491
      %v1493 = vpop.f32.mrf.mxu0
      %v1494 = vpop.f32.mrf.mxu0
      %v1495 = vadd.f32 0.0, %v1494
      %v1496 = vpop.f32.mrf.mxu0
      %1497 = vmatprep.mubr.bf16.mxu0 0
      %1498 = vmatmul.mubr.bf16.gmra.mxu0 %v932
      %v1499 = vpop.f32.mrf.mxu0
      %v1500 = vadd.f32 0.0, %v1499
      %v1501 = vpop.f32.mrf.mxu0
      %v1502 = vpop.f32.mrf.mxu0
      %v1503 = vadd.f32 0.0, %v1502
      %v1504 = vpop.f32.mrf.mxu0
      %1505 = vmatprep.mubr.bf16.mxu0 0
      %1506 = vmatmul.mubr.bf16.gmra.mxu0 %v933
      %v1507 = vpop.f32.mrf.mxu0
      %v1508 = vadd.f32 0.0, %v1507
      %v1509 = vpop.f32.mrf.mxu0
      %v1510 = vpop.f32.mrf.mxu0
      %v1511 = vadd.f32 0.0, %v1510
      %v1512 = vpop.f32.mrf.mxu0
      %1513 = vmatprep.mubr.bf16.mxu0 0
      %1514 = vmatmul.mubr.bf16.gmra.mxu0 %v934
      %v1515 = vpop.f32.mrf.mxu0
      %v1516 = vadd.f32 0.0, %v1515
      %v1517 = vpop.f32.mrf.mxu0
      %v1518 = vpop.f32.mrf.mxu0
      %v1519 = vadd.f32 0.0, %v1518
      %v1520 = vpop.f32.mrf.mxu0
      %1521 = vmatprep.mubr.bf16.mxu0 0
      %1522 = vmatmul.mubr.bf16.gmra.mxu0 %v935
      %v1523 = vpop.f32.mrf.mxu0
      %v1524 = vadd.f32 0.0, %v1523
      %v1525 = vpop.f32.mrf.mxu0
      %v1526 = vpop.f32.mrf.mxu0
      %v1527 = vadd.f32 0.0, %v1526
      %v1528 = vpop.f32.mrf.mxu0
      %1529 = vmatprep.mubr.bf16.mxu0 0
      %1530 = vmatmul.mubr.bf16.gmra.mxu0 %v936
      %v1531 = vpop.f32.mrf.mxu0
      %v1532 = vadd.f32 0.0, %v1531
      %v1533 = vpop.f32.mrf.mxu0
      %v1534 = vpop.f32.mrf.mxu0
      %v1535 = vadd.f32 0.0, %v1534
      %v1536 = vpop.f32.mrf.mxu0
      %1537 = vmatprep.mubr.bf16.mxu0 0
      %1538 = vmatmul.mubr.bf16.gmra.mxu0 %v937
      %v1539 = vpop.f32.mrf.mxu0
      %v1540 = vadd.f32 0.0, %v1539
      %v1541 = vpop.f32.mrf.mxu0
      %v1542 = vpop.f32.mrf.mxu0
      %v1543 = vadd.f32 0.0, %v1542
      %v1544 = vpop.f32.mrf.mxu0
      %1545 = vmatprep.mubr.bf16.mxu0 0
      %1546 = vmatmul.mubr.bf16.gmra.mxu0 %v938
      %v1547 = vpop.f32.mrf.mxu0
      %v1548 = vadd.f32 0.0, %v1547
      %v1549 = vpop.f32.mrf.mxu0
      %v1550 = vpop.f32.mrf.mxu0
      %v1551 = vadd.f32 0.0, %v1550
      %v1552 = vpop.f32.mrf.mxu0
      %1553 = vmatprep.mubr.bf16.mxu0 0
      %1554 = vmatmul.mubr.bf16.gmra.mxu0 %v939
      %v1555 = vpop.f32.mrf.mxu0
      %v1556 = vadd.f32 0.0, %v1555
      %v1557 = vpop.f32.mrf.mxu0
      %v1558 = vpop.f32.mrf.mxu0
      %v1559 = vadd.f32 0.0, %v1558
      %v1560 = vpop.f32.mrf.mxu0
      %1561 = vmatprep.mubr.bf16.mxu0 0
      %1562 = vmatmul.mubr.bf16.gmra.mxu0 %v940
      %v1563 = vpop.f32.mrf.mxu0
      %v1564 = vadd.f32 0.0, %v1563
      %v1565 = vpop.f32.mrf.mxu0
      %v1566 = vpop.f32.mrf.mxu0
      %v1567 = vadd.f32 0.0, %v1566
      %v1568 = vpop.f32.mrf.mxu0
      %1569 = vmatprep.mubr.bf16.mxu0 0
      %1570 = vmatmul.mubr.bf16.gmra.mxu0 %v941
      %v1571 = vpop.f32.mrf.mxu0
      %v1572 = vadd.f32 0.0, %v1571
      %v1573 = vpop.f32.mrf.mxu0
      %v1574 = vpop.f32.mrf.mxu0
      %v1575 = vadd.f32 0.0, %v1574
      %v1576 = vpop.f32.mrf.mxu0
      %1577 = vmatprep.mubr.bf16.mxu0 0
      %1578 = vmatmul.mubr.bf16.gmra.mxu0 %v942
      %v1579 = vpop.f32.mrf.mxu0
      %v1580 = vadd.f32 0.0, %v1579
      %v1581 = vpop.f32.mrf.mxu0
      %v1582 = vpop.f32.mrf.mxu0
      %v1583 = vadd.f32 0.0, %v1582
      %v1584 = vpop.f32.mrf.mxu0
      %1585 = vmatprep.mubr.bf16.mxu0 0
      %1586 = vmatmul.mubr.bf16.gmra.mxu0 %v943
      %v1587 = vpop.f32.mrf.mxu0
      %v1588 = vadd.f32 0.0, %v1587
      %v1589 = vpop.f32.mrf.mxu0
      %v1590 = vpop.f32.mrf.mxu0
      %v1591 = vadd.f32 0.0, %v1590
      %v1592 = vpop.f32.mrf.mxu0
      %1593 = vmatprep.mubr.bf16.mxu0 0
      %1594 = vmatmul.mubr.bf16.gmra.mxu0 %v944
      %v1595 = vpop.f32.mrf.mxu0
      %v1596 = vadd.f32 0.0, %v1595
      %v1597 = vpop.f32.mrf.mxu0
      %v1598 = vpop.f32.mrf.mxu0
      %v1599 = vadd.f32 0.0, %v1598
      %v1600 = vpop.f32.mrf.mxu0
      %1601 = vdwg.mxu0
      %v1602 = vadd.f32 %v353, %v1092
      %v1603 = vadd.f32 %v354, %v1095
      %v1604 = vadd.f32 %v355, %v1100
      %v1605 = vadd.f32 %v356, %v1103
      %v1606 = vadd.f32 %v357, %v1108
      %v1607 = vadd.f32 %v358, %v1111
      %v1608 = vadd.f32 %v359, %v1116
      %v1609 = vadd.f32 %v360, %v1119
      %v1610 = vadd.f32 %v361, %v1124
      %v1611 = vadd.f32 %v362, %v1127
      %v1612 = vadd.f32 %v363, %v1132
      %v1613 = vadd.f32 %v364, %v1135
      %v1614 = vadd.f32 %v365, %v1140
      %v1615 = vadd.f32 %v366, %v1143
      %v1616 = vadd.f32 %v367, %v1148
      %v1617 = vadd.f32 %v368, %v1151
      %v1618 = vadd.f32 %v369, %v1156
      %v1619 = vadd.f32 %v370, %v1159
      %v1620 = vadd.f32 %v371, %v1164
      %v1621 = vadd.f32 %v372, %v1167
      %v1622 = vadd.f32 %v373, %v1172
      %v1623 = vadd.f32 %v374, %v1175
      %v1624 = vadd.f32 %v375, %v1180
      %v1625 = vadd.f32 %v376, %v1183
      %v1626 = vadd.f32 %v377, %v1188
      %v1627 = vadd.f32 %v378, %v1191
      %v1628 = vadd.f32 %v379, %v1196
      %v1629 = vadd.f32 %v380, %v1199
      %v1630 = vadd.f32 %v381, %v1204
      %v1631 = vadd.f32 %v382, %v1207
      %v1632 = vadd.f32 %v383, %v1212
      %v1633 = vadd.f32 %v384, %v1215
      %v1634 = vadd.f32 %v385, %v1220
      %v1635 = vadd.f32 %v386, %v1223
      %v1636 = vadd.f32 %v387, %v1228
      %v1637 = vadd.f32 %v388, %v1231
      %v1638 = vadd.f32 %v389, %v1236
      %v1639 = vadd.f32 %v390, %v1239
      %v1640 = vadd.f32 %v391, %v1244
      %v1641 = vadd.f32 %v392, %v1247
      %v1642 = vadd.f32 %v393, %v1252
      %v1643 = vadd.f32 %v394, %v1255
      %v1644 = vadd.f32 %v395, %v1260
      %v1645 = vadd.f32 %v396, %v1263
      %v1646 = vadd.f32 %v397, %v1268
      %v1647 = vadd.f32 %v398, %v1271
      %v1648 = vadd.f32 %v399, %v1276
      %v1649 = vadd.f32 %v400, %v1279
      %v1650 = vadd.f32 %v401, %v1284
      %v1651 = vadd.f32 %v402, %v1287
      %v1652 = vadd.f32 %v403, %v1292
      %v1653 = vadd.f32 %v404, %v1295
      %v1654 = vadd.f32 %v405, %v1300
      %v1655 = vadd.f32 %v406, %v1303
      %v1656 = vadd.f32 %v407, %v1308
      %v1657 = vadd.f32 %v408, %v1311
      %v1658 = vadd.f32 %v409, %v1316
      %v1659 = vadd.f32 %v410, %v1319
      %v1660 = vadd.f32 %v411, %v1324
      %v1661 = vadd.f32 %v412, %v1327
      %v1662 = vadd.f32 %v413, %v1332
      %v1663 = vadd.f32 %v414, %v1335
      %v1664 = vadd.f32 %v415, %v1340
      %v1665 = vadd.f32 %v416, %v1343
      %v1666 = vadd.f32 %v417, %v1348
      %v1667 = vadd.f32 %v418, %v1351
      %v1668 = vadd.f32 %v419, %v1356
      %v1669 = vadd.f32 %v420, %v1359
      %v1670 = vadd.f32 %v421, %v1364
      %v1671 = vadd.f32 %v422, %v1367
      %v1672 = vadd.f32 %v423, %v1372
      %v1673 = vadd.f32 %v424, %v1375
      %v1674 = vadd.f32 %v425, %v1380
      %v1675 = vadd.f32 %v426, %v1383
      %v1676 = vadd.f32 %v427, %v1388
      %v1677 = vadd.f32 %v428, %v1391
      %v1678 = vadd.f32 %v429, %v1396
      %v1679 = vadd.f32 %v430, %v1399
      %v1680 = vadd.f32 %v431, %v1404
      %v1681 = vadd.f32 %v432, %v1407
      %v1682 = vadd.f32 %v433, %v1412
      %v1683 = vadd.f32 %v434, %v1415
      %v1684 = vadd.f32 %v435, %v1420
      %v1685 = vadd.f32 %v436, %v1423
      %v1686 = vadd.f32 %v437, %v1428
      %v1687 = vadd.f32 %v438, %v1431
      %v1688 = vadd.f32 %v439, %v1436
      %v1689 = vadd.f32 %v440, %v1439
      %v1690 = vadd.f32 %v441, %v1444
      %v1691 = vadd.f32 %v442, %v1447
      %v1692 = vadd.f32 %v443, %v1452
      %v1693 = vadd.f32 %v444, %v1455
      %v1694 = vadd.f32 %v445, %v1460
      %v1695 = vadd.f32 %v446, %v1463
      %v1696 = vadd.f32 %v447, %v1468
      %v1697 = vadd.f32 %v448, %v1471
      %v1698 = vadd.f32 %v449, %v1476
      %v1699 = vadd.f32 %v450, %v1479
      %v1700 = vadd.f32 %v451, %v1484
      %v1701 = vadd.f32 %v452, %v1487
      %v1702 = vadd.f32 %v453, %v1492
      %v1703 = vadd.f32 %v454, %v1495
      %v1704 = vadd.f32 %v455, %v1500
      %v1705 = vadd.f32 %v456, %v1503
      %v1706 = vadd.f32 %v457, %v1508
      %v1707 = vadd.f32 %v458, %v1511
      %v1708 = vadd.f32 %v459, %v1516
      %v1709 = vadd.f32 %v460, %v1519
      %v1710 = vadd.f32 %v461, %v1524
      %v1711 = vadd.f32 %v462, %v1527
      %v1712 = vadd.f32 %v463, %v1532
      %v1713 = vadd.f32 %v464, %v1535
      %v1714 = vadd.f32 %v465, %v1540
      %v1715 = vadd.f32 %v466, %v1543
      %v1716 = vadd.f32 %v467, %v1548
      %v1717 = vadd.f32 %v468, %v1551
      %v1718 = vadd.f32 %v469, %v1556
      %v1719 = vadd.f32 %v470, %v1559
      %v1720 = vadd.f32 %v471, %v1564
      %v1721 = vadd.f32 %v472, %v1567
      %v1722 = vadd.f32 %v473, %v1572
      %v1723 = vadd.f32 %v474, %v1575
      %v1724 = vadd.f32 %v475, %v1580
      %v1725 = vadd.f32 %v476, %v1583
      %v1726 = vadd.f32 %v477, %v1588
      %v1727 = vadd.f32 %v478, %v1591
      %v1728 = vadd.f32 %v479, %v1596
      %v1729 = vadd.f32 %v480, %v1599
      %vm1730 = vcmask 64512
      %1731 = vst.msk [vmem:[#allocation2] sm:$0xff] %vm1730, %v1602
      %1732 = vst.msk [vmem:[#allocation2 + $0x8] sm:$0xff] %vm1730, %v1603
      %1733 = vst.msk [vmem:[#allocation2 + $0x10] sm:$0xff] %vm1730, %v1604
      %1734 = vst.msk [vmem:[#allocation2 + $0x18] sm:$0xff] %vm1730, %v1605
      %1735 = vst.msk [vmem:[#allocation2 + $0x20] sm:$0xff] %vm1730, %v1606
      %1736 = vst.msk [vmem:[#allocation2 + $0x28] sm:$0xff] %vm1730, %v1607
      %1737 = vst.msk [vmem:[#allocation2 + $0x30] sm:$0xff] %vm1730, %v1608
      %1738 = vst.msk [vmem:[#allocation2 + $0x38] sm:$0xff] %vm1730, %v1609
      %1739 = vst.msk [vmem:[#allocation2 + $0x40] sm:$0xff] %vm1730, %v1610
      %1740 = vst.msk [vmem:[#allocation2 + $0x48] sm:$0xff] %vm1730, %v1611
      %1741 = vst.msk [vmem:[#allocation2 + $0x50] sm:$0xff] %vm1730, %v1612
      %1742 = vst.msk [vmem:[#allocation2 + $0x58] sm:$0xff] %vm1730, %v1613
      %1743 = vst.msk [vmem:[#allocation2 + $0x60] sm:$0xff] %vm1730, %v1614
      %1744 = vst.msk [vmem:[#allocation2 + $0x68] sm:$0xff] %vm1730, %v1615
      %1745 = vst.msk [vmem:[#allocation2 + $0x70] sm:$0xff] %vm1730, %v1616
      %1746 = vst.msk [vmem:[#allocation2 + $0x78] sm:$0xff] %vm1730, %v1617
      %1747 = vst.msk [vmem:[#allocation2 + $0x80] sm:$0xff] %vm1730, %v1618
      %1748 = vst.msk [vmem:[#allocation2 + $0x88] sm:$0xff] %vm1730, %v1619
      %1749 = vst.msk [vmem:[#allocation2 + $0x90] sm:$0xff] %vm1730, %v1620
      %1750 = vst.msk [vmem:[#allocation2 + $0x98] sm:$0xff] %vm1730, %v1621
      %1751 = vst.msk [vmem:[#allocation2 + $0xa0] sm:$0xff] %vm1730, %v1622
      %1752 = vst.msk [vmem:[#allocation2 + $0xa8] sm:$0xff] %vm1730, %v1623
      %1753 = vst.msk [vmem:[#allocation2 + $0xb0] sm:$0xff] %vm1730, %v1624
      %1754 = vst.msk [vmem:[#allocation2 + $0xb8] sm:$0xff] %vm1730, %v1625
      %1755 = vst.msk [vmem:[#allocation2 + $0xc0] sm:$0xff] %vm1730, %v1626
      %1756 = vst.msk [vmem:[#allocation2 + $0xc8] sm:$0xff] %vm1730, %v1627
      %1757 = vst.msk [vmem:[#allocation2 + $0xd0] sm:$0xff] %vm1730, %v1628
      %1758 = vst.msk [vmem:[#allocation2 + $0xd8] sm:$0xff] %vm1730, %v1629
      %1759 = vst.msk [vmem:[#allocation2 + $0xe0] sm:$0xff] %vm1730, %v1630
      %1760 = vst.msk [vmem:[#allocation2 + $0xe8] sm:$0xff] %vm1730, %v1631
      %1761 = vst.msk [vmem:[#allocation2 + $0xf0] sm:$0xff] %vm1730, %v1632
      %1762 = vst.msk [vmem:[#allocation2 + $0xf8] sm:$0xff] %vm1730, %v1633
      %1763 = vst.msk [vmem:[#allocation2 + $0x100] sm:$0xff] %vm1730, %v1634
      %1764 = vst.msk [vmem:[#allocation2 + $0x108] sm:$0xff] %vm1730, %v1635
      %1765 = vst.msk [vmem:[#allocation2 + $0x110] sm:$0xff] %vm1730, %v1636
      %1766 = vst.msk [vmem:[#allocation2 + $0x118] sm:$0xff] %vm1730, %v1637
      %1767 = vst.msk [vmem:[#allocation2 + $0x120] sm:$0xff] %vm1730, %v1638
      %1768 = vst.msk [vmem:[#allocation2 + $0x128] sm:$0xff] %vm1730, %v1639
      %1769 = vst.msk [vmem:[#allocation2 + $0x130] sm:$0xff] %vm1730, %v1640
      %1770 = vst.msk [vmem:[#allocation2 + $0x138] sm:$0xff] %vm1730, %v1641
      %1771 = vst.msk [vmem:[#allocation2 + $0x140] sm:$0xff] %vm1730, %v1642
      %1772 = vst.msk [vmem:[#allocation2 + $0x148] sm:$0xff] %vm1730, %v1643
      %1773 = vst.msk [vmem:[#allocation2 + $0x150] sm:$0xff] %vm1730, %v1644
      %1774 = vst.msk [vmem:[#allocation2 + $0x158] sm:$0xff] %vm1730, %v1645
      %1775 = vst.msk [vmem:[#allocation2 + $0x160] sm:$0xff] %vm1730, %v1646
      %1776 = vst.msk [vmem:[#allocation2 + $0x168] sm:$0xff] %vm1730, %v1647
      %1777 = vst.msk [vmem:[#allocation2 + $0x170] sm:$0xff] %vm1730, %v1648
      %1778 = vst.msk [vmem:[#allocation2 + $0x178] sm:$0xff] %vm1730, %v1649
      %1779 = vst.msk [vmem:[#allocation2 + $0x180] sm:$0xff] %vm1730, %v1650
      %1780 = vst.msk [vmem:[#allocation2 + $0x188] sm:$0xff] %vm1730, %v1651
      %1781 = vst.msk [vmem:[#allocation2 + $0x190] sm:$0xff] %vm1730, %v1652
      %1782 = vst.msk [vmem:[#allocation2 + $0x198] sm:$0xff] %vm1730, %v1653
      %1783 = vst.msk [vmem:[#allocation2 + $0x1a0] sm:$0xff] %vm1730, %v1654
      %1784 = vst.msk [vmem:[#allocation2 + $0x1a8] sm:$0xff] %vm1730, %v1655
      %1785 = vst.msk [vmem:[#allocation2 + $0x1b0] sm:$0xff] %vm1730, %v1656
      %1786 = vst.msk [vmem:[#allocation2 + $0x1b8] sm:$0xff] %vm1730, %v1657
      %1787 = vst.msk [vmem:[#allocation2 + $0x1c0] sm:$0xff] %vm1730, %v1658
      %1788 = vst.msk [vmem:[#allocation2 + $0x1c8] sm:$0xff] %vm1730, %v1659
      %1789 = vst.msk [vmem:[#allocation2 + $0x1d0] sm:$0xff] %vm1730, %v1660
      %1790 = vst.msk [vmem:[#allocation2 + $0x1d8] sm:$0xff] %vm1730, %v1661
      %1791 = vst.msk [vmem:[#allocation2 + $0x1e0] sm:$0xff] %vm1730, %v1662
      %1792 = vst.msk [vmem:[#allocation2 + $0x1e8] sm:$0xff] %vm1730, %v1663
      %1793 = vst.msk [vmem:[#allocation2 + $0x1f0] sm:$0xff] %vm1730, %v1664
      %1794 = vst.msk [vmem:[#allocation2 + $0x1f8] sm:$0xff] %vm1730, %v1665
      %1795 = vst.msk [vmem:[#allocation2 + $0x200] sm:$0xff] %vm1730, %v1666
      %1796 = vst.msk [vmem:[#allocation2 + $0x208] sm:$0xff] %vm1730, %v1667
      %1797 = vst.msk [vmem:[#allocation2 + $0x210] sm:$0xff] %vm1730, %v1668
      %1798 = vst.msk [vmem:[#allocation2 + $0x218] sm:$0xff] %vm1730, %v1669
      %1799 = vst.msk [vmem:[#allocation2 + $0x220] sm:$0xff] %vm1730, %v1670
      %1800 = vst.msk [vmem:[#allocation2 + $0x228] sm:$0xff] %vm1730, %v1671
      %1801 = vst.msk [vmem:[#allocation2 + $0x230] sm:$0xff] %vm1730, %v1672
      %1802 = vst.msk [vmem:[#allocation2 + $0x238] sm:$0xff] %vm1730, %v1673
      %1803 = vst.msk [vmem:[#allocation2 + $0x240] sm:$0xff] %vm1730, %v1674
      %1804 = vst.msk [vmem:[#allocation2 + $0x248] sm:$0xff] %vm1730, %v1675
      %1805 = vst.msk [vmem:[#allocation2 + $0x250] sm:$0xff] %vm1730, %v1676
      %1806 = vst.msk [vmem:[#allocation2 + $0x258] sm:$0xff] %vm1730, %v1677
      %1807 = vst.msk [vmem:[#allocation2 + $0x260] sm:$0xff] %vm1730, %v1678
      %1808 = vst.msk [vmem:[#allocation2 + $0x268] sm:$0xff] %vm1730, %v1679
      %1809 = vst.msk [vmem:[#allocation2 + $0x270] sm:$0xff] %vm1730, %v1680
      %1810 = vst.msk [vmem:[#allocation2 + $0x278] sm:$0xff] %vm1730, %v1681
      %1811 = vst.msk [vmem:[#allocation2 + $0x280] sm:$0xff] %vm1730, %v1682
      %1812 = vst.msk [vmem:[#allocation2 + $0x288] sm:$0xff] %vm1730, %v1683
      %1813 = vst.msk [vmem:[#allocation2 + $0x290] sm:$0xff] %vm1730, %v1684
      %1814 = vst.msk [vmem:[#allocation2 + $0x298] sm:$0xff] %vm1730, %v1685
      %1815 = vst.msk [vmem:[#allocation2 + $0x2a0] sm:$0xff] %vm1730, %v1686
      %1816 = vst.msk [vmem:[#allocation2 + $0x2a8] sm:$0xff] %vm1730, %v1687
      %1817 = vst.msk [vmem:[#allocation2 + $0x2b0] sm:$0xff] %vm1730, %v1688
      %1818 = vst.msk [vmem:[#allocation2 + $0x2b8] sm:$0xff] %vm1730, %v1689
      %1819 = vst.msk [vmem:[#allocation2 + $0x2c0] sm:$0xff] %vm1730, %v1690
      %1820 = vst.msk [vmem:[#allocation2 + $0x2c8] sm:$0xff] %vm1730, %v1691
      %1821 = vst.msk [vmem:[#allocation2 + $0x2d0] sm:$0xff] %vm1730, %v1692
      %1822 = vst.msk [vmem:[#allocation2 + $0x2d8] sm:$0xff] %vm1730, %v1693
      %1823 = vst.msk [vmem:[#allocation2 + $0x2e0] sm:$0xff] %vm1730, %v1694
      %1824 = vst.msk [vmem:[#allocation2 + $0x2e8] sm:$0xff] %vm1730, %v1695
      %1825 = vst.msk [vmem:[#allocation2 + $0x2f0] sm:$0xff] %vm1730, %v1696
      %1826 = vst.msk [vmem:[#allocation2 + $0x2f8] sm:$0xff] %vm1730, %v1697
      %1827 = vst.msk [vmem:[#allocation2 + $0x300] sm:$0xff] %vm1730, %v1698
      %1828 = vst.msk [vmem:[#allocation2 + $0x308] sm:$0xff] %vm1730, %v1699
      %1829 = vst.msk [vmem:[#allocation2 + $0x310] sm:$0xff] %vm1730, %v1700
      %1830 = vst.msk [vmem:[#allocation2 + $0x318] sm:$0xff] %vm1730, %v1701
      %1831 = vst.msk [vmem:[#allocation2 + $0x320] sm:$0xff] %vm1730, %v1702
      %1832 = vst.msk [vmem:[#allocation2 + $0x328] sm:$0xff] %vm1730, %v1703
      %1833 = vst.msk [vmem:[#allocation2 + $0x330] sm:$0xff] %vm1730, %v1704
      %1834 = vst.msk [vmem:[#allocation2 + $0x338] sm:$0xff] %vm1730, %v1705
      %1835 = vst.msk [vmem:[#allocation2 + $0x340] sm:$0xff] %vm1730, %v1706
      %1836 = vst.msk [vmem:[#allocation2 + $0x348] sm:$0xff] %vm1730, %v1707
      %1837 = vst.msk [vmem:[#allocation2 + $0x350] sm:$0xff] %vm1730, %v1708
      %1838 = vst.msk [vmem:[#allocation2 + $0x358] sm:$0xff] %vm1730, %v1709
      %1839 = vst.msk [vmem:[#allocation2 + $0x360] sm:$0xff] %vm1730, %v1710
      %1840 = vst.msk [vmem:[#allocation2 + $0x368] sm:$0xff] %vm1730, %v1711
      %1841 = vst.msk [vmem:[#allocation2 + $0x370] sm:$0xff] %vm1730, %v1712
      %1842 = vst.msk [vmem:[#allocation2 + $0x378] sm:$0xff] %vm1730, %v1713
      %1843 = vst.msk [vmem:[#allocation2 + $0x380] sm:$0xff] %vm1730, %v1714
      %1844 = vst.msk [vmem:[#allocation2 + $0x388] sm:$0xff] %vm1730, %v1715
      %1845 = vst.msk [vmem:[#allocation2 + $0x390] sm:$0xff] %vm1730, %v1716
      %1846 = vst.msk [vmem:[#allocation2 + $0x398] sm:$0xff] %vm1730, %v1717
      %1847 = vst.msk [vmem:[#allocation2 + $0x3a0] sm:$0xff] %vm1730, %v1718
      %1848 = vst.msk [vmem:[#allocation2 + $0x3a8] sm:$0xff] %vm1730, %v1719
      %1849 = vst.msk [vmem:[#allocation2 + $0x3b0] sm:$0xff] %vm1730, %v1720
      %1850 = vst.msk [vmem:[#allocation2 + $0x3b8] sm:$0xff] %vm1730, %v1721
      %1851 = vst.msk [vmem:[#allocation2 + $0x3c0] sm:$0xff] %vm1730, %v1722
      %1852 = vst.msk [vmem:[#allocation2 + $0x3c8] sm:$0xff] %vm1730, %v1723
      %1853 = vst.msk [vmem:[#allocation2 + $0x3d0] sm:$0xff] %vm1730, %v1724
      %1854 = vst.msk [vmem:[#allocation2 + $0x3d8] sm:$0xff] %vm1730, %v1725
      %1855 = vst.msk [vmem:[#allocation2 + $0x3e0] sm:$0xff] %vm1730, %v1726
      %1856 = vst.msk [vmem:[#allocation2 + $0x3e8] sm:$0xff] %vm1730, %v1727
      %1857 = vst.msk [vmem:[#allocation2 + $0x3f0] sm:$0xff] %vm1730, %v1728
      %1858 = vst.msk [vmem:[#allocation2 + $0x3f8] sm:$0xff] %vm1730, %v1729
      // Predicated region
      $region37: #{_lambda_.4} parent=31 // pred_check
        %p1859 = pneg %p220
      $region38: #{_lambda_.4} parent=31 // pred_check_branch
        %1861 = sbr.rel (%p1859) target = $region40
      $region39: #{_lambda_.4} parent=31 // pred_region
        %v1862 = vld [vmem:[#allocation2] sm:$0xff]
        %v1863 = vld [vmem:[#allocation2 + $0x8] sm:$0xff]
        %v1864 = vld [vmem:[#allocation2 + $0x10] sm:$0xff]
        %v1865 = vld [vmem:[#allocation2 + $0x18] sm:$0xff]
        %v1866 = vld [vmem:[#allocation2 + $0x20] sm:$0xff]
        %v1867 = vld [vmem:[#allocation2 + $0x28] sm:$0xff]
        %v1868 = vld [vmem:[#allocation2 + $0x30] sm:$0xff]
        %v1869 = vld [vmem:[#allocation2 + $0x38] sm:$0xff]
        %v1870 = vld [vmem:[#allocation2 + $0x40] sm:$0xff]
        %v1871 = vld [vmem:[#allocation2 + $0x48] sm:$0xff]
        %v1872 = vld [vmem:[#allocation2 + $0x50] sm:$0xff]
        %v1873 = vld [vmem:[#allocation2 + $0x58] sm:$0xff]
        %v1874 = vld [vmem:[#allocation2 + $0x60] sm:$0xff]
        %v1875 = vld [vmem:[#allocation2 + $0x68] sm:$0xff]
        %v1876 = vld [vmem:[#allocation2 + $0x70] sm:$0xff]
        %v1877 = vld [vmem:[#allocation2 + $0x78] sm:$0xff]
        %v1878 = vld [vmem:[#allocation2 + $0x80] sm:$0xff]
        %v1879 = vld [vmem:[#allocation2 + $0x88] sm:$0xff]
        %v1880 = vld [vmem:[#allocation2 + $0x90] sm:$0xff]
        %v1881 = vld [vmem:[#allocation2 + $0x98] sm:$0xff]
        %v1882 = vld [vmem:[#allocation2 + $0xa0] sm:$0xff]
        %v1883 = vld [vmem:[#allocation2 + $0xa8] sm:$0xff]
        %v1884 = vld [vmem:[#allocation2 + $0xb0] sm:$0xff]
        %v1885 = vld [vmem:[#allocation2 + $0xb8] sm:$0xff]
        %v1886 = vld [vmem:[#allocation2 + $0xc0] sm:$0xff]
        %v1887 = vld [vmem:[#allocation2 + $0xc8] sm:$0xff]
        %v1888 = vld [vmem:[#allocation2 + $0xd0] sm:$0xff]
        %v1889 = vld [vmem:[#allocation2 + $0xd8] sm:$0xff]
        %v1890 = vld [vmem:[#allocation2 + $0xe0] sm:$0xff]
        %v1891 = vld [vmem:[#allocation2 + $0xe8] sm:$0xff]
        %v1892 = vld [vmem:[#allocation2 + $0xf0] sm:$0xff]
        %v1893 = vld [vmem:[#allocation2 + $0xf8] sm:$0xff]
        %v1894 = vld [vmem:[#allocation2 + $0x100] sm:$0xff]
        %v1895 = vld [vmem:[#allocation2 + $0x108] sm:$0xff]
        %v1896 = vld [vmem:[#allocation2 + $0x110] sm:$0xff]
        %v1897 = vld [vmem:[#allocation2 + $0x118] sm:$0xff]
        %v1898 = vld [vmem:[#allocation2 + $0x120] sm:$0xff]
        %v1899 = vld [vmem:[#allocation2 + $0x128] sm:$0xff]
        %v1900 = vld [vmem:[#allocation2 + $0x130] sm:$0xff]
        %v1901 = vld [vmem:[#allocation2 + $0x138] sm:$0xff]
        %v1902 = vld [vmem:[#allocation2 + $0x140] sm:$0xff]
        %v1903 = vld [vmem:[#allocation2 + $0x148] sm:$0xff]
        %v1904 = vld [vmem:[#allocation2 + $0x150] sm:$0xff]
        %v1905 = vld [vmem:[#allocation2 + $0x158] sm:$0xff]
        %v1906 = vld [vmem:[#allocation2 + $0x160] sm:$0xff]
        %v1907 = vld [vmem:[#allocation2 + $0x168] sm:$0xff]
        %v1908 = vld [vmem:[#allocation2 + $0x170] sm:$0xff]
        %v1909 = vld [vmem:[#allocation2 + $0x178] sm:$0xff]
        %v1910 = vld [vmem:[#allocation2 + $0x180] sm:$0xff]
        %v1911 = vld [vmem:[#allocation2 + $0x188] sm:$0xff]
        %v1912 = vld [vmem:[#allocation2 + $0x190] sm:$0xff]
        %v1913 = vld [vmem:[#allocation2 + $0x198] sm:$0xff]
        %v1914 = vld [vmem:[#allocation2 + $0x1a0] sm:$0xff]
        %v1915 = vld [vmem:[#allocation2 + $0x1a8] sm:$0xff]
        %v1916 = vld [vmem:[#allocation2 + $0x1b0] sm:$0xff]
        %v1917 = vld [vmem:[#allocation2 + $0x1b8] sm:$0xff]
        %v1918 = vld [vmem:[#allocation2 + $0x1c0] sm:$0xff]
        %v1919 = vld [vmem:[#allocation2 + $0x1c8] sm:$0xff]
        %v1920 = vld [vmem:[#allocation2 + $0x1d0] sm:$0xff]
        %v1921 = vld [vmem:[#allocation2 + $0x1d8] sm:$0xff]
        %v1922 = vld [vmem:[#allocation2 + $0x1e0] sm:$0xff]
        %v1923 = vld [vmem:[#allocation2 + $0x1e8] sm:$0xff]
        %v1924 = vld [vmem:[#allocation2 + $0x1f0] sm:$0xff]
        %v1925 = vld [vmem:[#allocation2 + $0x1f8] sm:$0xff]
        %v1926 = vld [vmem:[#allocation2 + $0x200] sm:$0xff]
        %v1927 = vld [vmem:[#allocation2 + $0x208] sm:$0xff]
        %v1928 = vld [vmem:[#allocation2 + $0x210] sm:$0xff]
        %v1929 = vld [vmem:[#allocation2 + $0x218] sm:$0xff]
        %v1930 = vld [vmem:[#allocation2 + $0x220] sm:$0xff]
        %v1931 = vld [vmem:[#allocation2 + $0x228] sm:$0xff]
        %v1932 = vld [vmem:[#allocation2 + $0x230] sm:$0xff]
        %v1933 = vld [vmem:[#allocation2 + $0x238] sm:$0xff]
        %v1934 = vld [vmem:[#allocation2 + $0x240] sm:$0xff]
        %v1935 = vld [vmem:[#allocation2 + $0x248] sm:$0xff]
        %v1936 = vld [vmem:[#allocation2 + $0x250] sm:$0xff]
        %v1937 = vld [vmem:[#allocation2 + $0x258] sm:$0xff]
        %v1938 = vld [vmem:[#allocation2 + $0x260] sm:$0xff]
        %v1939 = vld [vmem:[#allocation2 + $0x268] sm:$0xff]
        %v1940 = vld [vmem:[#allocation2 + $0x270] sm:$0xff]
        %v1941 = vld [vmem:[#allocation2 + $0x278] sm:$0xff]
        %v1942 = vld [vmem:[#allocation2 + $0x280] sm:$0xff]
        %v1943 = vld [vmem:[#allocation2 + $0x288] sm:$0xff]
        %v1944 = vld [vmem:[#allocation2 + $0x290] sm:$0xff]
        %v1945 = vld [vmem:[#allocation2 + $0x298] sm:$0xff]
        %v1946 = vld [vmem:[#allocation2 + $0x2a0] sm:$0xff]
        %v1947 = vld [vmem:[#allocation2 + $0x2a8] sm:$0xff]
        %v1948 = vld [vmem:[#allocation2 + $0x2b0] sm:$0xff]
        %v1949 = vld [vmem:[#allocation2 + $0x2b8] sm:$0xff]
        %v1950 = vld [vmem:[#allocation2 + $0x2c0] sm:$0xff]
        %v1951 = vld [vmem:[#allocation2 + $0x2c8] sm:$0xff]
        %v1952 = vld [vmem:[#allocation2 + $0x2d0] sm:$0xff]
        %v1953 = vld [vmem:[#allocation2 + $0x2d8] sm:$0xff]
        %v1954 = vld [vmem:[#allocation2 + $0x2e0] sm:$0xff]
        %v1955 = vld [vmem:[#allocation2 + $0x2e8] sm:$0xff]
        %v1956 = vld [vmem:[#allocation2 + $0x2f0] sm:$0xff]
        %v1957 = vld [vmem:[#allocation2 + $0x2f8] sm:$0xff]
        %v1958 = vld [vmem:[#allocation2 + $0x300] sm:$0xff]
        %v1959 = vld [vmem:[#allocation2 + $0x308] sm:$0xff]
        %v1960 = vld [vmem:[#allocation2 + $0x310] sm:$0xff]
        %v1961 = vld [vmem:[#allocation2 + $0x318] sm:$0xff]
        %v1962 = vld [vmem:[#allocation2 + $0x320] sm:$0xff]
        %v1963 = vld [vmem:[#allocation2 + $0x328] sm:$0xff]
        %v1964 = vld [vmem:[#allocation2 + $0x330] sm:$0xff]
        %v1965 = vld [vmem:[#allocation2 + $0x338] sm:$0xff]
        %v1966 = vld [vmem:[#allocation2 + $0x340] sm:$0xff]
        %v1967 = vld [vmem:[#allocation2 + $0x348] sm:$0xff]
        %v1968 = vld [vmem:[#allocation2 + $0x350] sm:$0xff]
        %v1969 = vld [vmem:[#allocation2 + $0x358] sm:$0xff]
        %v1970 = vld [vmem:[#allocation2 + $0x360] sm:$0xff]
        %v1971 = vld [vmem:[#allocation2 + $0x368] sm:$0xff]
        %v1972 = vld [vmem:[#allocation2 + $0x370] sm:$0xff]
        %v1973 = vld [vmem:[#allocation2 + $0x378] sm:$0xff]
        %v1974 = vld [vmem:[#allocation2 + $0x380] sm:$0xff]
        %v1975 = vld [vmem:[#allocation2 + $0x388] sm:$0xff]
        %v1976 = vld [vmem:[#allocation2 + $0x390] sm:$0xff]
        %v1977 = vld [vmem:[#allocation2 + $0x398] sm:$0xff]
        %v1978 = vld [vmem:[#allocation2 + $0x3a0] sm:$0xff]
        %v1979 = vld [vmem:[#allocation2 + $0x3a8] sm:$0xff]
        %v1980 = vld [vmem:[#allocation2 + $0x3b0] sm:$0xff]
        %v1981 = vld [vmem:[#allocation2 + $0x3b8] sm:$0xff]
        %v1982 = vld [vmem:[#allocation2 + $0x3c0] sm:$0xff]
        %v1983 = vld [vmem:[#allocation2 + $0x3c8] sm:$0xff]
        %v1984 = vld [vmem:[#allocation2 + $0x3d0] sm:$0xff]
        %v1985 = vld [vmem:[#allocation2 + $0x3d8] sm:$0xff]
        %v1986 = vld [vmem:[#allocation2 + $0x3e0] sm:$0xff]
        %v1987 = vld [vmem:[#allocation2 + $0x3e8] sm:$0xff]
        %v1988 = vld [vmem:[#allocation2 + $0x3f0] sm:$0xff]
        %v1989 = vld [vmem:[#allocation2 + $0x3f8] sm:$0xff]
        %v1990 = vld [vmem:[%s2] sm:$0x1]
        %v1992 = vlaneseq
        %v1993 = vshrl.u32 %v1992, 7
        %v1994 = vsub.s32 0, %v1993
        %v1995 = vrot.slane %v1990, %v1994
        %v1997 = vadd.f32 %v1862, %v1995
        %v1998 = vadd.f32 %v1863, %v1995
        %v1999 = vadd.f32 %v1864, %v1995
        %v2000 = vadd.f32 %v1865, %v1995
        %v2001 = vadd.f32 %v1866, %v1995
        %v2002 = vadd.f32 %v1867, %v1995
        %v2003 = vadd.f32 %v1868, %v1995
        %v2004 = vadd.f32 %v1869, %v1995
        %v2005 = vadd.f32 %v1870, %v1995
        %v2006 = vadd.f32 %v1871, %v1995
        %v2007 = vadd.f32 %v1872, %v1995
        %v2008 = vadd.f32 %v1873, %v1995
        %v2009 = vadd.f32 %v1874, %v1995
        %v2010 = vadd.f32 %v1875, %v1995
        %v2011 = vadd.f32 %v1876, %v1995
        %v2012 = vadd.f32 %v1877, %v1995
        %v2013 = vadd.f32 %v1878, %v1995
        %v2014 = vadd.f32 %v1879, %v1995
        %v2015 = vadd.f32 %v1880, %v1995
        %v2016 = vadd.f32 %v1881, %v1995
        %v2017 = vadd.f32 %v1882, %v1995
        %v2018 = vadd.f32 %v1883, %v1995
        %v2019 = vadd.f32 %v1884, %v1995
        %v2020 = vadd.f32 %v1885, %v1995
        %v2021 = vadd.f32 %v1886, %v1995
        %v2022 = vadd.f32 %v1887, %v1995
        %v2023 = vadd.f32 %v1888, %v1995
        %v2024 = vadd.f32 %v1889, %v1995
        %v2025 = vadd.f32 %v1890, %v1995
        %v2026 = vadd.f32 %v1891, %v1995
        %v2027 = vadd.f32 %v1892, %v1995
        %v2028 = vadd.f32 %v1893, %v1995
        %v2029 = vadd.f32 %v1894, %v1995
        %v2030 = vadd.f32 %v1895, %v1995
        %v2031 = vadd.f32 %v1896, %v1995
        %v2032 = vadd.f32 %v1897, %v1995
        %v2033 = vadd.f32 %v1898, %v1995
        %v2034 = vadd.f32 %v1899, %v1995
        %v2035 = vadd.f32 %v1900, %v1995
        %v2036 = vadd.f32 %v1901, %v1995
        %v2037 = vadd.f32 %v1902, %v1995
        %v2038 = vadd.f32 %v1903, %v1995
        %v2039 = vadd.f32 %v1904, %v1995
        %v2040 = vadd.f32 %v1905, %v1995
        %v2041 = vadd.f32 %v1906, %v1995
        %v2042 = vadd.f32 %v1907, %v1995
        %v2043 = vadd.f32 %v1908, %v1995
        %v2044 = vadd.f32 %v1909, %v1995
        %v2045 = vadd.f32 %v1910, %v1995
        %v2046 = vadd.f32 %v1911, %v1995
        %v2047 = vadd.f32 %v1912, %v1995
        %v2048 = vadd.f32 %v1913, %v1995
        %v2049 = vadd.f32 %v1914, %v1995
        %v2050 = vadd.f32 %v1915, %v1995
        %v2051 = vadd.f32 %v1916, %v1995
        %v2052 = vadd.f32 %v1917, %v1995
        %v2053 = vadd.f32 %v1918, %v1995
        %v2054 = vadd.f32 %v1919, %v1995
        %v2055 = vadd.f32 %v1920, %v1995
        %v2056 = vadd.f32 %v1921, %v1995
        %v2057 = vadd.f32 %v1922, %v1995
        %v2058 = vadd.f32 %v1923, %v1995
        %v2059 = vadd.f32 %v1924, %v1995
        %v2060 = vadd.f32 %v1925, %v1995
        %v2061 = vadd.f32 %v1926, %v1995
        %v2062 = vadd.f32 %v1927, %v1995
        %v2063 = vadd.f32 %v1928, %v1995
        %v2064 = vadd.f32 %v1929, %v1995
        %v2065 = vadd.f32 %v1930, %v1995
        %v2066 = vadd.f32 %v1931, %v1995
        %v2067 = vadd.f32 %v1932, %v1995
        %v2068 = vadd.f32 %v1933, %v1995
        %v2069 = vadd.f32 %v1934, %v1995
        %v2070 = vadd.f32 %v1935, %v1995
        %v2071 = vadd.f32 %v1936, %v1995
        %v2072 = vadd.f32 %v1937, %v1995
        %v2073 = vadd.f32 %v1938, %v1995
        %v2074 = vadd.f32 %v1939, %v1995
        %v2075 = vadd.f32 %v1940, %v1995
        %v2076 = vadd.f32 %v1941, %v1995
        %v2077 = vadd.f32 %v1942, %v1995
        %v2078 = vadd.f32 %v1943, %v1995
        %v2079 = vadd.f32 %v1944, %v1995
        %v2080 = vadd.f32 %v1945, %v1995
        %v2081 = vadd.f32 %v1946, %v1995
        %v2082 = vadd.f32 %v1947, %v1995
        %v2083 = vadd.f32 %v1948, %v1995
        %v2084 = vadd.f32 %v1949, %v1995
        %v2085 = vadd.f32 %v1950, %v1995
        %v2086 = vadd.f32 %v1951, %v1995
        %v2087 = vadd.f32 %v1952, %v1995
        %v2088 = vadd.f32 %v1953, %v1995
        %v2089 = vadd.f32 %v1954, %v1995
        %v2090 = vadd.f32 %v1955, %v1995
        %v2091 = vadd.f32 %v1956, %v1995
        %v2092 = vadd.f32 %v1957, %v1995
        %v2093 = vadd.f32 %v1958, %v1995
        %v2094 = vadd.f32 %v1959, %v1995
        %v2095 = vadd.f32 %v1960, %v1995
        %v2096 = vadd.f32 %v1961, %v1995
        %v2097 = vadd.f32 %v1962, %v1995
        %v2098 = vadd.f32 %v1963, %v1995
        %v2099 = vadd.f32 %v1964, %v1995
        %v2100 = vadd.f32 %v1965, %v1995
        %v2101 = vadd.f32 %v1966, %v1995
        %v2102 = vadd.f32 %v1967, %v1995
        %v2103 = vadd.f32 %v1968, %v1995
        %v2104 = vadd.f32 %v1969, %v1995
        %v2105 = vadd.f32 %v1970, %v1995
        %v2106 = vadd.f32 %v1971, %v1995
        %v2107 = vadd.f32 %v1972, %v1995
        %v2108 = vadd.f32 %v1973, %v1995
        %v2109 = vadd.f32 %v1974, %v1995
        %v2110 = vadd.f32 %v1975, %v1995
        %v2111 = vadd.f32 %v1976, %v1995
        %v2112 = vadd.f32 %v1977, %v1995
        %v2113 = vadd.f32 %v1978, %v1995
        %v2114 = vadd.f32 %v1979, %v1995
        %v2115 = vadd.f32 %v1980, %v1995
        %v2116 = vadd.f32 %v1981, %v1995
        %v2117 = vadd.f32 %v1982, %v1995
        %v2118 = vadd.f32 %v1983, %v1995
        %v2119 = vadd.f32 %v1984, %v1995
        %v2120 = vadd.f32 %v1985, %v1995
        %v2121 = vadd.f32 %v1986, %v1995
        %v2122 = vadd.f32 %v1987, %v1995
        %v2123 = vadd.f32 %v1988, %v1995
        %v2124 = vadd.f32 %v1989, %v1995
        %vm2125 = vcmp.ge.f32.partialorder %v1997, 0.0
        %vm2126 = vcmp.ge.f32.partialorder %v1998, 0.0
        %vm2127 = vcmp.ge.f32.partialorder %v1999, 0.0
        %vm2128 = vcmp.ge.f32.partialorder %v2000, 0.0
        %vm2129 = vcmp.ge.f32.partialorder %v2001, 0.0
        %vm2130 = vcmp.ge.f32.partialorder %v2002, 0.0
        %vm2131 = vcmp.ge.f32.partialorder %v2003, 0.0
        %vm2132 = vcmp.ge.f32.partialorder %v2004, 0.0
        %vm2133 = vcmp.ge.f32.partialorder %v2005, 0.0
        %vm2134 = vcmp.ge.f32.partialorder %v2006, 0.0
        %vm2135 = vcmp.ge.f32.partialorder %v2007, 0.0
        %vm2136 = vcmp.ge.f32.partialorder %v2008, 0.0
        %vm2137 = vcmp.ge.f32.partialorder %v2009, 0.0
        %vm2138 = vcmp.ge.f32.partialorder %v2010, 0.0
        %vm2139 = vcmp.ge.f32.partialorder %v2011, 0.0
        %vm2140 = vcmp.ge.f32.partialorder %v2012, 0.0
        %vm2141 = vcmp.ge.f32.partialorder %v2013, 0.0
        %vm2142 = vcmp.ge.f32.partialorder %v2014, 0.0
        %vm2143 = vcmp.ge.f32.partialorder %v2015, 0.0
        %vm2144 = vcmp.ge.f32.partialorder %v2016, 0.0
        %vm2145 = vcmp.ge.f32.partialorder %v2017, 0.0
        %vm2146 = vcmp.ge.f32.partialorder %v2018, 0.0
        %vm2147 = vcmp.ge.f32.partialorder %v2019, 0.0
        %vm2148 = vcmp.ge.f32.partialorder %v2020, 0.0
        %vm2149 = vcmp.ge.f32.partialorder %v2021, 0.0
        %vm2150 = vcmp.ge.f32.partialorder %v2022, 0.0
        %vm2151 = vcmp.ge.f32.partialorder %v2023, 0.0
        %vm2152 = vcmp.ge.f32.partialorder %v2024, 0.0
        %vm2153 = vcmp.ge.f32.partialorder %v2025, 0.0
        %vm2154 = vcmp.ge.f32.partialorder %v2026, 0.0
        %vm2155 = vcmp.ge.f32.partialorder %v2027, 0.0
        %vm2156 = vcmp.ge.f32.partialorder %v2028, 0.0
        %vm2157 = vcmp.ge.f32.partialorder %v2029, 0.0
        %vm2158 = vcmp.ge.f32.partialorder %v2030, 0.0
        %vm2159 = vcmp.ge.f32.partialorder %v2031, 0.0
        %vm2160 = vcmp.ge.f32.partialorder %v2032, 0.0
        %vm2161 = vcmp.ge.f32.partialorder %v2033, 0.0
        %vm2162 = vcmp.ge.f32.partialorder %v2034, 0.0
        %vm2163 = vcmp.ge.f32.partialorder %v2035, 0.0
        %vm2164 = vcmp.ge.f32.partialorder %v2036, 0.0
        %vm2165 = vcmp.ge.f32.partialorder %v2037, 0.0
        %vm2166 = vcmp.ge.f32.partialorder %v2038, 0.0
        %vm2167 = vcmp.ge.f32.partialorder %v2039, 0.0
        %vm2168 = vcmp.ge.f32.partialorder %v2040, 0.0
        %vm2169 = vcmp.ge.f32.partialorder %v2041, 0.0
        %vm2170 = vcmp.ge.f32.partialorder %v2042, 0.0
        %vm2171 = vcmp.ge.f32.partialorder %v2043, 0.0
        %vm2172 = vcmp.ge.f32.partialorder %v2044, 0.0
        %vm2173 = vcmp.ge.f32.partialorder %v2045, 0.0
        %vm2174 = vcmp.ge.f32.partialorder %v2046, 0.0
        %vm2175 = vcmp.ge.f32.partialorder %v2047, 0.0
        %vm2176 = vcmp.ge.f32.partialorder %v2048, 0.0
        %vm2177 = vcmp.ge.f32.partialorder %v2049, 0.0
        %vm2178 = vcmp.ge.f32.partialorder %v2050, 0.0
        %vm2179 = vcmp.ge.f32.partialorder %v2051, 0.0
        %vm2180 = vcmp.ge.f32.partialorder %v2052, 0.0
        %vm2181 = vcmp.ge.f32.partialorder %v2053, 0.0
        %vm2182 = vcmp.ge.f32.partialorder %v2054, 0.0
        %vm2183 = vcmp.ge.f32.partialorder %v2055, 0.0
        %vm2184 = vcmp.ge.f32.partialorder %v2056, 0.0
        %vm2185 = vcmp.ge.f32.partialorder %v2057, 0.0
        %vm2186 = vcmp.ge.f32.partialorder %v2058, 0.0
        %vm2187 = vcmp.ge.f32.partialorder %v2059, 0.0
        %vm2188 = vcmp.ge.f32.partialorder %v2060, 0.0
        %vm2189 = vcmp.ge.f32.partialorder %v2061, 0.0
        %vm2190 = vcmp.ge.f32.partialorder %v2062, 0.0
        %vm2191 = vcmp.ge.f32.partialorder %v2063, 0.0
        %vm2192 = vcmp.ge.f32.partialorder %v2064, 0.0
        %vm2193 = vcmp.ge.f32.partialorder %v2065, 0.0
        %vm2194 = vcmp.ge.f32.partialorder %v2066, 0.0
        %vm2195 = vcmp.ge.f32.partialorder %v2067, 0.0
        %vm2196 = vcmp.ge.f32.partialorder %v2068, 0.0
        %vm2197 = vcmp.ge.f32.partialorder %v2069, 0.0
        %vm2198 = vcmp.ge.f32.partialorder %v2070, 0.0
        %vm2199 = vcmp.ge.f32.partialorder %v2071, 0.0
        %vm2200 = vcmp.ge.f32.partialorder %v2072, 0.0
        %vm2201 = vcmp.ge.f32.partialorder %v2073, 0.0
        %vm2202 = vcmp.ge.f32.partialorder %v2074, 0.0
        %vm2203 = vcmp.ge.f32.partialorder %v2075, 0.0
        %vm2204 = vcmp.ge.f32.partialorder %v2076, 0.0
        %vm2205 = vcmp.ge.f32.partialorder %v2077, 0.0
        %vm2206 = vcmp.ge.f32.partialorder %v2078, 0.0
        %vm2207 = vcmp.ge.f32.partialorder %v2079, 0.0
        %vm2208 = vcmp.ge.f32.partialorder %v2080, 0.0
        %vm2209 = vcmp.ge.f32.partialorder %v2081, 0.0
        %vm2210 = vcmp.ge.f32.partialorder %v2082, 0.0
        %vm2211 = vcmp.ge.f32.partialorder %v2083, 0.0
        %vm2212 = vcmp.ge.f32.partialorder %v2084, 0.0
        %vm2213 = vcmp.ge.f32.partialorder %v2085, 0.0
        %vm2214 = vcmp.ge.f32.partialorder %v2086, 0.0
        %vm2215 = vcmp.ge.f32.partialorder %v2087, 0.0
        %vm2216 = vcmp.ge.f32.partialorder %v2088, 0.0
        %vm2217 = vcmp.ge.f32.partialorder %v2089, 0.0
        %vm2218 = vcmp.ge.f32.partialorder %v2090, 0.0
        %vm2219 = vcmp.ge.f32.partialorder %v2091, 0.0
        %vm2220 = vcmp.ge.f32.partialorder %v2092, 0.0
        %vm2221 = vcmp.ge.f32.partialorder %v2093, 0.0
        %vm2222 = vcmp.ge.f32.partialorder %v2094, 0.0
        %vm2223 = vcmp.ge.f32.partialorder %v2095, 0.0
        %vm2224 = vcmp.ge.f32.partialorder %v2096, 0.0
        %vm2225 = vcmp.ge.f32.partialorder %v2097, 0.0
        %vm2226 = vcmp.ge.f32.partialorder %v2098, 0.0
        %vm2227 = vcmp.ge.f32.partialorder %v2099, 0.0
        %vm2228 = vcmp.ge.f32.partialorder %v2100, 0.0
        %vm2229 = vcmp.ge.f32.partialorder %v2101, 0.0
        %vm2230 = vcmp.ge.f32.partialorder %v2102, 0.0
        %vm2231 = vcmp.ge.f32.partialorder %v2103, 0.0
        %vm2232 = vcmp.ge.f32.partialorder %v2104, 0.0
        %vm2233 = vcmp.ge.f32.partialorder %v2105, 0.0
        %vm2234 = vcmp.ge.f32.partialorder %v2106, 0.0
        %vm2235 = vcmp.ge.f32.partialorder %v2107, 0.0
        %vm2236 = vcmp.ge.f32.partialorder %v2108, 0.0
        %vm2237 = vcmp.ge.f32.partialorder %v2109, 0.0
        %vm2238 = vcmp.ge.f32.partialorder %v2110, 0.0
        %vm2239 = vcmp.ge.f32.partialorder %v2111, 0.0
        %vm2240 = vcmp.ge.f32.partialorder %v2112, 0.0
        %vm2241 = vcmp.ge.f32.partialorder %v2113, 0.0
        %vm2242 = vcmp.ge.f32.partialorder %v2114, 0.0
        %vm2243 = vcmp.ge.f32.partialorder %v2115, 0.0
        %vm2244 = vcmp.ge.f32.partialorder %v2116, 0.0
        %vm2245 = vcmp.ge.f32.partialorder %v2117, 0.0
        %vm2246 = vcmp.ge.f32.partialorder %v2118, 0.0
        %vm2247 = vcmp.ge.f32.partialorder %v2119, 0.0
        %vm2248 = vcmp.ge.f32.partialorder %v2120, 0.0
        %vm2249 = vcmp.ge.f32.partialorder %v2121, 0.0
        %vm2250 = vcmp.ge.f32.partialorder %v2122, 0.0
        %vm2251 = vcmp.ge.f32.partialorder %v2123, 0.0
        %vm2252 = vcmp.ge.f32.partialorder %v2124, 0.0
        %v2253 = vmul.f32 %v1997, 0.2
        %v2254 = vmul.f32 %v1998, 0.2
        %v2255 = vmul.f32 %v1999, 0.2
        %v2256 = vmul.f32 %v2000, 0.2
        %v2257 = vmul.f32 %v2001, 0.2
        %v2258 = vmul.f32 %v2002, 0.2
        %v2259 = vmul.f32 %v2003, 0.2
        %v2260 = vmul.f32 %v2004, 0.2
        %v2261 = vmul.f32 %v2005, 0.2
        %v2262 = vmul.f32 %v2006, 0.2
        %v2263 = vmul.f32 %v2007, 0.2
        %v2264 = vmul.f32 %v2008, 0.2
        %v2265 = vmul.f32 %v2009, 0.2
        %v2266 = vmul.f32 %v2010, 0.2
        %v2267 = vmul.f32 %v2011, 0.2
        %v2268 = vmul.f32 %v2012, 0.2
        %v2269 = vmul.f32 %v2013, 0.2
        %v2270 = vmul.f32 %v2014, 0.2
        %v2271 = vmul.f32 %v2015, 0.2
        %v2272 = vmul.f32 %v2016, 0.2
        %v2273 = vmul.f32 %v2017, 0.2
        %v2274 = vmul.f32 %v2018, 0.2
        %v2275 = vmul.f32 %v2019, 0.2
        %v2276 = vmul.f32 %v2020, 0.2
        %v2277 = vmul.f32 %v2021, 0.2
        %v2278 = vmul.f32 %v2022, 0.2
        %v2279 = vmul.f32 %v2023, 0.2
        %v2280 = vmul.f32 %v2024, 0.2
        %v2281 = vmul.f32 %v2025, 0.2
        %v2282 = vmul.f32 %v2026, 0.2
        %v2283 = vmul.f32 %v2027, 0.2
        %v2284 = vmul.f32 %v2028, 0.2
        %v2285 = vmul.f32 %v2029, 0.2
        %v2286 = vmul.f32 %v2030, 0.2
        %v2287 = vmul.f32 %v2031, 0.2
        %v2288 = vmul.f32 %v2032, 0.2
        %v2289 = vmul.f32 %v2033, 0.2
        %v2290 = vmul.f32 %v2034, 0.2
        %v2291 = vmul.f32 %v2035, 0.2
        %v2292 = vmul.f32 %v2036, 0.2
        %v2293 = vmul.f32 %v2037, 0.2
        %v2294 = vmul.f32 %v2038, 0.2
        %v2295 = vmul.f32 %v2039, 0.2
        %v2296 = vmul.f32 %v2040, 0.2
        %v2297 = vmul.f32 %v2041, 0.2
        %v2298 = vmul.f32 %v2042, 0.2
        %v2299 = vmul.f32 %v2043, 0.2
        %v2300 = vmul.f32 %v2044, 0.2
        %v2301 = vmul.f32 %v2045, 0.2
        %v2302 = vmul.f32 %v2046, 0.2
        %v2303 = vmul.f32 %v2047, 0.2
        %v2304 = vmul.f32 %v2048, 0.2
        %v2305 = vmul.f32 %v2049, 0.2
        %v2306 = vmul.f32 %v2050, 0.2
        %v2307 = vmul.f32 %v2051, 0.2
        %v2308 = vmul.f32 %v2052, 0.2
        %v2309 = vmul.f32 %v2053, 0.2
        %v2310 = vmul.f32 %v2054, 0.2
        %v2311 = vmul.f32 %v2055, 0.2
        %v2312 = vmul.f32 %v2056, 0.2
        %v2313 = vmul.f32 %v2057, 0.2
        %v2314 = vmul.f32 %v2058, 0.2
        %v2315 = vmul.f32 %v2059, 0.2
        %v2316 = vmul.f32 %v2060, 0.2
        %v2317 = vmul.f32 %v2061, 0.2
        %v2318 = vmul.f32 %v2062, 0.2
        %v2319 = vmul.f32 %v2063, 0.2
        %v2320 = vmul.f32 %v2064, 0.2
        %v2321 = vmul.f32 %v2065, 0.2
        %v2322 = vmul.f32 %v2066, 0.2
        %v2323 = vmul.f32 %v2067, 0.2
        %v2324 = vmul.f32 %v2068, 0.2
        %v2325 = vmul.f32 %v2069, 0.2
        %v2326 = vmul.f32 %v2070, 0.2
        %v2327 = vmul.f32 %v2071, 0.2
        %v2328 = vmul.f32 %v2072, 0.2
        %v2329 = vmul.f32 %v2073, 0.2
        %v2330 = vmul.f32 %v2074, 0.2
        %v2331 = vmul.f32 %v2075, 0.2
        %v2332 = vmul.f32 %v2076, 0.2
        %v2333 = vmul.f32 %v2077, 0.2
        %v2334 = vmul.f32 %v2078, 0.2
        %v2335 = vmul.f32 %v2079, 0.2
        %v2336 = vmul.f32 %v2080, 0.2
        %v2337 = vmul.f32 %v2081, 0.2
        %v2338 = vmul.f32 %v2082, 0.2
        %v2339 = vmul.f32 %v2083, 0.2
        %v2340 = vmul.f32 %v2084, 0.2
        %v2341 = vmul.f32 %v2085, 0.2
        %v2342 = vmul.f32 %v2086, 0.2
        %v2343 = vmul.f32 %v2087, 0.2
        %v2344 = vmul.f32 %v2088, 0.2
        %v2345 = vmul.f32 %v2089, 0.2
        %v2346 = vmul.f32 %v2090, 0.2
        %v2347 = vmul.f32 %v2091, 0.2
        %v2348 = vmul.f32 %v2092, 0.2
        %v2349 = vmul.f32 %v2093, 0.2
        %v2350 = vmul.f32 %v2094, 0.2
        %v2351 = vmul.f32 %v2095, 0.2
        %v2352 = vmul.f32 %v2096, 0.2
        %v2353 = vmul.f32 %v2097, 0.2
        %v2354 = vmul.f32 %v2098, 0.2
        %v2355 = vmul.f32 %v2099, 0.2
        %v2356 = vmul.f32 %v2100, 0.2
        %v2357 = vmul.f32 %v2101, 0.2
        %v2358 = vmul.f32 %v2102, 0.2
        %v2359 = vmul.f32 %v2103, 0.2
        %v2360 = vmul.f32 %v2104, 0.2
        %v2361 = vmul.f32 %v2105, 0.2
        %v2362 = vmul.f32 %v2106, 0.2
        %v2363 = vmul.f32 %v2107, 0.2
        %v2364 = vmul.f32 %v2108, 0.2
        %v2365 = vmul.f32 %v2109, 0.2
        %v2366 = vmul.f32 %v2110, 0.2
        %v2367 = vmul.f32 %v2111, 0.2
        %v2368 = vmul.f32 %v2112, 0.2
        %v2369 = vmul.f32 %v2113, 0.2
        %v2370 = vmul.f32 %v2114, 0.2
        %v2371 = vmul.f32 %v2115, 0.2
        %v2372 = vmul.f32 %v2116, 0.2
        %v2373 = vmul.f32 %v2117, 0.2
        %v2374 = vmul.f32 %v2118, 0.2
        %v2375 = vmul.f32 %v2119, 0.2
        %v2376 = vmul.f32 %v2120, 0.2
        %v2377 = vmul.f32 %v2121, 0.2
        %v2378 = vmul.f32 %v2122, 0.2
        %v2379 = vmul.f32 %v2123, 0.2
        %v2380 = vmul.f32 %v2124, 0.2
        %v2381 = vsel %vm2125, %v1997, %v2253
        %v2382 = vsel %vm2126, %v1998, %v2254
        %v2383 = vsel %vm2127, %v1999, %v2255
        %v2384 = vsel %vm2128, %v2000, %v2256
        %v2385 = vsel %vm2129, %v2001, %v2257
        %v2386 = vsel %vm2130, %v2002, %v2258
        %v2387 = vsel %vm2131, %v2003, %v2259
        %v2388 = vsel %vm2132, %v2004, %v2260
        %v2389 = vsel %vm2133, %v2005, %v2261
        %v2390 = vsel %vm2134, %v2006, %v2262
        %v2391 = vsel %vm2135, %v2007, %v2263
        %v2392 = vsel %vm2136, %v2008, %v2264
        %v2393 = vsel %vm2137, %v2009, %v2265
        %v2394 = vsel %vm2138, %v2010, %v2266
        %v2395 = vsel %vm2139, %v2011, %v2267
        %v2396 = vsel %vm2140, %v2012, %v2268
        %v2397 = vsel %vm2141, %v2013, %v2269
        %v2398 = vsel %vm2142, %v2014, %v2270
        %v2399 = vsel %vm2143, %v2015, %v2271
        %v2400 = vsel %vm2144, %v2016, %v2272
        %v2401 = vsel %vm2145, %v2017, %v2273
        %v2402 = vsel %vm2146, %v2018, %v2274
        %v2403 = vsel %vm2147, %v2019, %v2275
        %v2404 = vsel %vm2148, %v2020, %v2276
        %v2405 = vsel %vm2149, %v2021, %v2277
        %v2406 = vsel %vm2150, %v2022, %v2278
        %v2407 = vsel %vm2151, %v2023, %v2279
        %v2408 = vsel %vm2152, %v2024, %v2280
        %v2409 = vsel %vm2153, %v2025, %v2281
        %v2410 = vsel %vm2154, %v2026, %v2282
        %v2411 = vsel %vm2155, %v2027, %v2283
        %v2412 = vsel %vm2156, %v2028, %v2284
        %v2413 = vsel %vm2157, %v2029, %v2285
        %v2414 = vsel %vm2158, %v2030, %v2286
        %v2415 = vsel %vm2159, %v2031, %v2287
        %v2416 = vsel %vm2160, %v2032, %v2288
        %v2417 = vsel %vm2161, %v2033, %v2289
        %v2418 = vsel %vm2162, %v2034, %v2290
        %v2419 = vsel %vm2163, %v2035, %v2291
        %v2420 = vsel %vm2164, %v2036, %v2292
        %v2421 = vsel %vm2165, %v2037, %v2293
        %v2422 = vsel %vm2166, %v2038, %v2294
        %v2423 = vsel %vm2167, %v2039, %v2295
        %v2424 = vsel %vm2168, %v2040, %v2296
        %v2425 = vsel %vm2169, %v2041, %v2297
        %v2426 = vsel %vm2170, %v2042, %v2298
        %v2427 = vsel %vm2171, %v2043, %v2299
        %v2428 = vsel %vm2172, %v2044, %v2300
        %v2429 = vsel %vm2173, %v2045, %v2301
        %v2430 = vsel %vm2174, %v2046, %v2302
        %v2431 = vsel %vm2175, %v2047, %v2303
        %v2432 = vsel %vm2176, %v2048, %v2304
        %v2433 = vsel %vm2177, %v2049, %v2305
        %v2434 = vsel %vm2178, %v2050, %v2306
        %v2435 = vsel %vm2179, %v2051, %v2307
        %v2436 = vsel %vm2180, %v2052, %v2308
        %v2437 = vsel %vm2181, %v2053, %v2309
        %v2438 = vsel %vm2182, %v2054, %v2310
        %v2439 = vsel %vm2183, %v2055, %v2311
        %v2440 = vsel %vm2184, %v2056, %v2312
        %v2441 = vsel %vm2185, %v2057, %v2313
        %v2442 = vsel %vm2186, %v2058, %v2314
        %v2443 = vsel %vm2187, %v2059, %v2315
        %v2444 = vsel %vm2188, %v2060, %v2316
        %v2445 = vsel %vm2189, %v2061, %v2317
        %v2446 = vsel %vm2190, %v2062, %v2318
        %v2447 = vsel %vm2191, %v2063, %v2319
        %v2448 = vsel %vm2192, %v2064, %v2320
        %v2449 = vsel %vm2193, %v2065, %v2321
        %v2450 = vsel %vm2194, %v2066, %v2322
        %v2451 = vsel %vm2195, %v2067, %v2323
        %v2452 = vsel %vm2196, %v2068, %v2324
        %v2453 = vsel %vm2197, %v2069, %v2325
        %v2454 = vsel %vm2198, %v2070, %v2326
        %v2455 = vsel %vm2199, %v2071, %v2327
        %v2456 = vsel %vm2200, %v2072, %v2328
        %v2457 = vsel %vm2201, %v2073, %v2329
        %v2458 = vsel %vm2202, %v2074, %v2330
        %v2459 = vsel %vm2203, %v2075, %v2331
        %v2460 = vsel %vm2204, %v2076, %v2332
        %v2461 = vsel %vm2205, %v2077, %v2333
        %v2462 = vsel %vm2206, %v2078, %v2334
        %v2463 = vsel %vm2207, %v2079, %v2335
        %v2464 = vsel %vm2208, %v2080, %v2336
        %v2465 = vsel %vm2209, %v2081, %v2337
        %v2466 = vsel %vm2210, %v2082, %v2338
        %v2467 = vsel %vm2211, %v2083, %v2339
        %v2468 = vsel %vm2212, %v2084, %v2340
        %v2469 = vsel %vm2213, %v2085, %v2341
        %v2470 = vsel %vm2214, %v2086, %v2342
        %v2471 = vsel %vm2215, %v2087, %v2343
        %v2472 = vsel %vm2216, %v2088, %v2344
        %v2473 = vsel %vm2217, %v2089, %v2345
        %v2474 = vsel %vm2218, %v2090, %v2346
        %v2475 = vsel %vm2219, %v2091, %v2347
        %v2476 = vsel %vm2220, %v2092, %v2348
        %v2477 = vsel %vm2221, %v2093, %v2349
        %v2478 = vsel %vm2222, %v2094, %v2350
        %v2479 = vsel %vm2223, %v2095, %v2351
        %v2480 = vsel %vm2224, %v2096, %v2352
        %v2481 = vsel %vm2225, %v2097, %v2353
        %v2482 = vsel %vm2226, %v2098, %v2354
        %v2483 = vsel %vm2227, %v2099, %v2355
        %v2484 = vsel %vm2228, %v2100, %v2356
        %v2485 = vsel %vm2229, %v2101, %v2357
        %v2486 = vsel %vm2230, %v2102, %v2358
        %v2487 = vsel %vm2231, %v2103, %v2359
        %v2488 = vsel %vm2232, %v2104, %v2360
        %v2489 = vsel %vm2233, %v2105, %v2361
        %v2490 = vsel %vm2234, %v2106, %v2362
        %v2491 = vsel %vm2235, %v2107, %v2363
        %v2492 = vsel %vm2236, %v2108, %v2364
        %v2493 = vsel %vm2237, %v2109, %v2365
        %v2494 = vsel %vm2238, %v2110, %v2366
        %v2495 = vsel %vm2239, %v2111, %v2367
        %v2496 = vsel %vm2240, %v2112, %v2368
        %v2497 = vsel %vm2241, %v2113, %v2369
        %v2498 = vsel %vm2242, %v2114, %v2370
        %v2499 = vsel %vm2243, %v2115, %v2371
        %v2500 = vsel %vm2244, %v2116, %v2372
        %v2501 = vsel %vm2245, %v2117, %v2373
        %v2502 = vsel %vm2246, %v2118, %v2374
        %v2503 = vsel %vm2247, %v2119, %v2375
        %v2504 = vsel %vm2248, %v2120, %v2376
        %v2505 = vsel %vm2249, %v2121, %v2377
        %v2506 = vsel %vm2250, %v2122, %v2378
        %v2507 = vsel %vm2251, %v2123, %v2379
        %v2508 = vsel %vm2252, %v2124, %v2380
        %v2509 = vpack.c.bf16 %v2382, %v2381
        %v2510 = vpack.c.bf16 %v2384, %v2383
        %v2511 = vpack.c.bf16 %v2386, %v2385
        %v2512 = vpack.c.bf16 %v2388, %v2387
        %v2513 = vpack.c.bf16 %v2390, %v2389
        %v2514 = vpack.c.bf16 %v2392, %v2391
        %v2515 = vpack.c.bf16 %v2394, %v2393
        %v2516 = vpack.c.bf16 %v2396, %v2395
        %v2517 = vpack.c.bf16 %v2398, %v2397
        %v2518 = vpack.c.bf16 %v2400, %v2399
        %v2519 = vpack.c.bf16 %v2402, %v2401
        %v2520 = vpack.c.bf16 %v2404, %v2403
        %v2521 = vpack.c.bf16 %v2406, %v2405
        %v2522 = vpack.c.bf16 %v2408, %v2407
        %v2523 = vpack.c.bf16 %v2410, %v2409
        %v2524 = vpack.c.bf16 %v2412, %v2411
        %v2525 = vpack.c.bf16 %v2414, %v2413
        %v2526 = vpack.c.bf16 %v2416, %v2415
        %v2527 = vpack.c.bf16 %v2418, %v2417
        %v2528 = vpack.c.bf16 %v2420, %v2419
        %v2529 = vpack.c.bf16 %v2422, %v2421
        %v2530 = vpack.c.bf16 %v2424, %v2423
        %v2531 = vpack.c.bf16 %v2426, %v2425
        %v2532 = vpack.c.bf16 %v2428, %v2427
        %v2533 = vpack.c.bf16 %v2430, %v2429
        %v2534 = vpack.c.bf16 %v2432, %v2431
        %v2535 = vpack.c.bf16 %v2434, %v2433
        %v2536 = vpack.c.bf16 %v2436, %v2435
        %v2537 = vpack.c.bf16 %v2438, %v2437
        %v2538 = vpack.c.bf16 %v2440, %v2439
        %v2539 = vpack.c.bf16 %v2442, %v2441
        %v2540 = vpack.c.bf16 %v2444, %v2443
        %v2541 = vpack.c.bf16 %v2446, %v2445
        %v2542 = vpack.c.bf16 %v2448, %v2447
        %v2543 = vpack.c.bf16 %v2450, %v2449
        %v2544 = vpack.c.bf16 %v2452, %v2451
        %v2545 = vpack.c.bf16 %v2454, %v2453
        %v2546 = vpack.c.bf16 %v2456, %v2455
        %v2547 = vpack.c.bf16 %v2458, %v2457
        %v2548 = vpack.c.bf16 %v2460, %v2459
        %v2549 = vpack.c.bf16 %v2462, %v2461
        %v2550 = vpack.c.bf16 %v2464, %v2463
        %v2551 = vpack.c.bf16 %v2466, %v2465
        %v2552 = vpack.c.bf16 %v2468, %v2467
        %v2553 = vpack.c.bf16 %v2470, %v2469
        %v2554 = vpack.c.bf16 %v2472, %v2471
        %v2555 = vpack.c.bf16 %v2474, %v2473
        %v2556 = vpack.c.bf16 %v2476, %v2475
        %v2557 = vpack.c.bf16 %v2478, %v2477
        %v2558 = vpack.c.bf16 %v2480, %v2479
        %v2559 = vpack.c.bf16 %v2482, %v2481
        %v2560 = vpack.c.bf16 %v2484, %v2483
        %v2561 = vpack.c.bf16 %v2486, %v2485
        %v2562 = vpack.c.bf16 %v2488, %v2487
        %v2563 = vpack.c.bf16 %v2490, %v2489
        %v2564 = vpack.c.bf16 %v2492, %v2491
        %v2565 = vpack.c.bf16 %v2494, %v2493
        %v2566 = vpack.c.bf16 %v2496, %v2495
        %v2567 = vpack.c.bf16 %v2498, %v2497
        %v2568 = vpack.c.bf16 %v2500, %v2499
        %v2569 = vpack.c.bf16 %v2502, %v2501
        %v2570 = vpack.c.bf16 %v2504, %v2503
        %v2571 = vpack.c.bf16 %v2506, %v2505
        %v2572 = vpack.c.bf16 %v2508, %v2507
        %v2637 = vunpack.c.l.b16 %v2509
        %v2638 = vunpack.c.h.b16 %v2509
        %v2639 = vunpack.c.l.b16 %v2510
        %v2640 = vunpack.c.h.b16 %v2510
        %v2641 = vunpack.c.l.b16 %v2511
        %v2642 = vunpack.c.h.b16 %v2511
        %v2643 = vunpack.c.l.b16 %v2512
        %v2644 = vunpack.c.h.b16 %v2512
        %v2645 = vunpack.c.l.b16 %v2513
        %v2646 = vunpack.c.h.b16 %v2513
        %v2647 = vunpack.c.l.b16 %v2514
        %v2648 = vunpack.c.h.b16 %v2514
        %v2649 = vunpack.c.l.b16 %v2515
        %v2650 = vunpack.c.h.b16 %v2515
        %v2651 = vunpack.c.l.b16 %v2516
        %v2652 = vunpack.c.h.b16 %v2516
        %v2653 = vunpack.c.l.b16 %v2517
        %v2654 = vunpack.c.h.b16 %v2517
        %v2655 = vunpack.c.l.b16 %v2518
        %v2656 = vunpack.c.h.b16 %v2518
        %v2657 = vunpack.c.l.b16 %v2519
        %v2658 = vunpack.c.h.b16 %v2519
        %v2659 = vunpack.c.l.b16 %v2520
        %v2660 = vunpack.c.h.b16 %v2520
        %v2661 = vunpack.c.l.b16 %v2521
        %v2662 = vunpack.c.h.b16 %v2521
        %v2663 = vunpack.c.l.b16 %v2522
        %v2664 = vunpack.c.h.b16 %v2522
        %v2665 = vunpack.c.l.b16 %v2523
        %v2666 = vunpack.c.h.b16 %v2523
        %v2667 = vunpack.c.l.b16 %v2524
        %v2668 = vunpack.c.h.b16 %v2524
        %v2669 = vunpack.c.l.b16 %v2525
        %v2670 = vunpack.c.h.b16 %v2525
        %v2671 = vunpack.c.l.b16 %v2526
        %v2672 = vunpack.c.h.b16 %v2526
        %v2673 = vunpack.c.l.b16 %v2527
        %v2674 = vunpack.c.h.b16 %v2527
        %v2675 = vunpack.c.l.b16 %v2528
        %v2676 = vunpack.c.h.b16 %v2528
        %v2677 = vunpack.c.l.b16 %v2529
        %v2678 = vunpack.c.h.b16 %v2529
        %v2679 = vunpack.c.l.b16 %v2530
        %v2680 = vunpack.c.h.b16 %v2530
        %v2681 = vunpack.c.l.b16 %v2531
        %v2682 = vunpack.c.h.b16 %v2531
        %v2683 = vunpack.c.l.b16 %v2532
        %v2684 = vunpack.c.h.b16 %v2532
        %v2685 = vunpack.c.l.b16 %v2533
        %v2686 = vunpack.c.h.b16 %v2533
        %v2687 = vunpack.c.l.b16 %v2534
        %v2688 = vunpack.c.h.b16 %v2534
        %v2689 = vunpack.c.l.b16 %v2535
        %v2690 = vunpack.c.h.b16 %v2535
        %v2691 = vunpack.c.l.b16 %v2536
        %v2692 = vunpack.c.h.b16 %v2536
        %v2693 = vunpack.c.l.b16 %v2537
        %v2694 = vunpack.c.h.b16 %v2537
        %v2695 = vunpack.c.l.b16 %v2538
        %v2696 = vunpack.c.h.b16 %v2538
        %v2697 = vunpack.c.l.b16 %v2539
        %v2698 = vunpack.c.h.b16 %v2539
        %v2699 = vunpack.c.l.b16 %v2540
        %v2700 = vunpack.c.h.b16 %v2540
        %v2701 = vunpack.c.l.b16 %v2541
        %v2702 = vunpack.c.h.b16 %v2541
        %v2703 = vunpack.c.l.b16 %v2542
        %v2704 = vunpack.c.h.b16 %v2542
        %v2705 = vunpack.c.l.b16 %v2543
        %v2706 = vunpack.c.h.b16 %v2543
        %v2707 = vunpack.c.l.b16 %v2544
        %v2708 = vunpack.c.h.b16 %v2544
        %v2709 = vunpack.c.l.b16 %v2545
        %v2710 = vunpack.c.h.b16 %v2545
        %v2711 = vunpack.c.l.b16 %v2546
        %v2712 = vunpack.c.h.b16 %v2546
        %v2713 = vunpack.c.l.b16 %v2547
        %v2714 = vunpack.c.h.b16 %v2547
        %v2715 = vunpack.c.l.b16 %v2548
        %v2716 = vunpack.c.h.b16 %v2548
        %v2717 = vunpack.c.l.b16 %v2549
        %v2718 = vunpack.c.h.b16 %v2549
        %v2719 = vunpack.c.l.b16 %v2550
        %v2720 = vunpack.c.h.b16 %v2550
        %v2721 = vunpack.c.l.b16 %v2551
        %v2722 = vunpack.c.h.b16 %v2551
        %v2723 = vunpack.c.l.b16 %v2552
        %v2724 = vunpack.c.h.b16 %v2552
        %v2725 = vunpack.c.l.b16 %v2553
        %v2726 = vunpack.c.h.b16 %v2553
        %v2727 = vunpack.c.l.b16 %v2554
        %v2728 = vunpack.c.h.b16 %v2554
        %v2729 = vunpack.c.l.b16 %v2555
        %v2730 = vunpack.c.h.b16 %v2555
        %v2731 = vunpack.c.l.b16 %v2556
        %v2732 = vunpack.c.h.b16 %v2556
        %v2733 = vunpack.c.l.b16 %v2557
        %v2734 = vunpack.c.h.b16 %v2557
        %v2735 = vunpack.c.l.b16 %v2558
        %v2736 = vunpack.c.h.b16 %v2558
        %v2737 = vunpack.c.l.b16 %v2559
        %v2738 = vunpack.c.h.b16 %v2559
        %v2739 = vunpack.c.l.b16 %v2560
        %v2740 = vunpack.c.h.b16 %v2560
        %v2741 = vunpack.c.l.b16 %v2561
        %v2742 = vunpack.c.h.b16 %v2561
        %v2743 = vunpack.c.l.b16 %v2562
        %v2744 = vunpack.c.h.b16 %v2562
        %v2745 = vunpack.c.l.b16 %v2563
        %v2746 = vunpack.c.h.b16 %v2563
        %v2747 = vunpack.c.l.b16 %v2564
        %v2748 = vunpack.c.h.b16 %v2564
        %v2749 = vunpack.c.l.b16 %v2565
        %v2750 = vunpack.c.h.b16 %v2565
        %v2751 = vunpack.c.l.b16 %v2566
        %v2752 = vunpack.c.h.b16 %v2566
        %v2753 = vunpack.c.l.b16 %v2567
        %v2754 = vunpack.c.h.b16 %v2567
        %v2755 = vunpack.c.l.b16 %v2568
        %v2756 = vunpack.c.h.b16 %v2568
        %v2757 = vunpack.c.l.b16 %v2569
        %v2758 = vunpack.c.h.b16 %v2569
        %v2759 = vunpack.c.l.b16 %v2570
        %v2760 = vunpack.c.h.b16 %v2570
        %v2761 = vunpack.c.l.b16 %v2571
        %v2762 = vunpack.c.h.b16 %v2571
        %v2763 = vunpack.c.l.b16 %v2572
        %v2764 = vunpack.c.h.b16 %v2572
        %v2765 = vpack.c.b16 %v2637, %v2637
        %v2766 = vpack.c.b16 %v2638, %v2638
        %v2767 = vpack.c.b16 %v2639, %v2639
        %v2768 = vpack.c.b16 %v2640, %v2640
        %v2769 = vpack.c.b16 %v2641, %v2641
        %v2770 = vpack.c.b16 %v2642, %v2642
        %v2771 = vpack.c.b16 %v2643, %v2643
        %v2772 = vpack.c.b16 %v2644, %v2644
        %v2773 = vpack.c.b16 %v2645, %v2645
        %v2774 = vpack.c.b16 %v2646, %v2646
        %v2775 = vpack.c.b16 %v2647, %v2647
        %v2776 = vpack.c.b16 %v2648, %v2648
        %v2777 = vpack.c.b16 %v2649, %v2649
        %v2778 = vpack.c.b16 %v2650, %v2650
        %v2779 = vpack.c.b16 %v2651, %v2651
        %v2780 = vpack.c.b16 %v2652, %v2652
        %v2781 = vpack.c.b16 %v2653, %v2653
        %v2782 = vpack.c.b16 %v2654, %v2654
        %v2783 = vpack.c.b16 %v2655, %v2655
        %v2784 = vpack.c.b16 %v2656, %v2656
        %v2785 = vpack.c.b16 %v2657, %v2657
        %v2786 = vpack.c.b16 %v2658, %v2658
        %v2787 = vpack.c.b16 %v2659, %v2659
        %v2788 = vpack.c.b16 %v2660, %v2660
        %v2789 = vpack.c.b16 %v2661, %v2661
        %v2790 = vpack.c.b16 %v2662, %v2662
        %v2791 = vpack.c.b16 %v2663, %v2663
        %v2792 = vpack.c.b16 %v2664, %v2664
        %v2793 = vpack.c.b16 %v2665, %v2665
        %v2794 = vpack.c.b16 %v2666, %v2666
        %v2795 = vpack.c.b16 %v2667, %v2667
        %v2796 = vpack.c.b16 %v2668, %v2668
        %v2797 = vpack.c.b16 %v2669, %v2669
        %v2798 = vpack.c.b16 %v2670, %v2670
        %v2799 = vpack.c.b16 %v2671, %v2671
        %v2800 = vpack.c.b16 %v2672, %v2672
        %v2801 = vpack.c.b16 %v2673, %v2673
        %v2802 = vpack.c.b16 %v2674, %v2674
        %v2803 = vpack.c.b16 %v2675, %v2675
        %v2804 = vpack.c.b16 %v2676, %v2676
        %v2805 = vpack.c.b16 %v2677, %v2677
        %v2806 = vpack.c.b16 %v2678, %v2678
        %v2807 = vpack.c.b16 %v2679, %v2679
        %v2808 = vpack.c.b16 %v2680, %v2680
        %v2809 = vpack.c.b16 %v2681, %v2681
        %v2810 = vpack.c.b16 %v2682, %v2682
        %v2811 = vpack.c.b16 %v2683, %v2683
        %v2812 = vpack.c.b16 %v2684, %v2684
        %v2813 = vpack.c.b16 %v2685, %v2685
        %v2814 = vpack.c.b16 %v2686, %v2686
        %v2815 = vpack.c.b16 %v2687, %v2687
        %v2816 = vpack.c.b16 %v2688, %v2688
        %v2817 = vpack.c.b16 %v2689, %v2689
        %v2818 = vpack.c.b16 %v2690, %v2690
        %v2819 = vpack.c.b16 %v2691, %v2691
        %v2820 = vpack.c.b16 %v2692, %v2692
        %v2821 = vpack.c.b16 %v2693, %v2693
        %v2822 = vpack.c.b16 %v2694, %v2694
        %v2823 = vpack.c.b16 %v2695, %v2695
        %v2824 = vpack.c.b16 %v2696, %v2696
        %v2825 = vpack.c.b16 %v2697, %v2697
        %v2826 = vpack.c.b16 %v2698, %v2698
        %v2827 = vpack.c.b16 %v2699, %v2699
        %v2828 = vpack.c.b16 %v2700, %v2700
        %v2829 = vpack.c.b16 %v2701, %v2701
        %v2830 = vpack.c.b16 %v2702, %v2702
        %v2831 = vpack.c.b16 %v2703, %v2703
        %v2832 = vpack.c.b16 %v2704, %v2704
        %v2833 = vpack.c.b16 %v2705, %v2705
        %v2834 = vpack.c.b16 %v2706, %v2706
        %v2835 = vpack.c.b16 %v2707, %v2707
        %v2836 = vpack.c.b16 %v2708, %v2708
        %v2837 = vpack.c.b16 %v2709, %v2709
        %v2838 = vpack.c.b16 %v2710, %v2710
        %v2839 = vpack.c.b16 %v2711, %v2711
        %v2840 = vpack.c.b16 %v2712, %v2712
        %v2841 = vpack.c.b16 %v2713, %v2713
        %v2842 = vpack.c.b16 %v2714, %v2714
        %v2843 = vpack.c.b16 %v2715, %v2715
        %v2844 = vpack.c.b16 %v2716, %v2716
        %v2845 = vpack.c.b16 %v2717, %v2717
        %v2846 = vpack.c.b16 %v2718, %v2718
        %v2847 = vpack.c.b16 %v2719, %v2719
        %v2848 = vpack.c.b16 %v2720, %v2720
        %v2849 = vpack.c.b16 %v2721, %v2721
        %v2850 = vpack.c.b16 %v2722, %v2722
        %v2851 = vpack.c.b16 %v2723, %v2723
        %v2852 = vpack.c.b16 %v2724, %v2724
        %v2853 = vpack.c.b16 %v2725, %v2725
        %v2854 = vpack.c.b16 %v2726, %v2726
        %v2855 = vpack.c.b16 %v2727, %v2727
        %v2856 = vpack.c.b16 %v2728, %v2728
        %v2857 = vpack.c.b16 %v2729, %v2729
        %v2858 = vpack.c.b16 %v2730, %v2730
        %v2859 = vpack.c.b16 %v2731, %v2731
        %v2860 = vpack.c.b16 %v2732, %v2732
        %v2861 = vpack.c.b16 %v2733, %v2733
        %v2862 = vpack.c.b16 %v2734, %v2734
        %v2863 = vpack.c.b16 %v2735, %v2735
        %v2864 = vpack.c.b16 %v2736, %v2736
        %v2865 = vpack.c.b16 %v2737, %v2737
        %v2866 = vpack.c.b16 %v2738, %v2738
        %v2867 = vpack.c.b16 %v2739, %v2739
        %v2868 = vpack.c.b16 %v2740, %v2740
        %v2869 = vpack.c.b16 %v2741, %v2741
        %v2870 = vpack.c.b16 %v2742, %v2742
        %v2871 = vpack.c.b16 %v2743, %v2743
        %v2872 = vpack.c.b16 %v2744, %v2744
        %v2873 = vpack.c.b16 %v2745, %v2745
        %v2874 = vpack.c.b16 %v2746, %v2746
        %v2875 = vpack.c.b16 %v2747, %v2747
        %v2876 = vpack.c.b16 %v2748, %v2748
        %v2877 = vpack.c.b16 %v2749, %v2749
        %v2878 = vpack.c.b16 %v2750, %v2750
        %v2879 = vpack.c.b16 %v2751, %v2751
        %v2880 = vpack.c.b16 %v2752, %v2752
        %v2881 = vpack.c.b16 %v2753, %v2753
        %v2882 = vpack.c.b16 %v2754, %v2754
        %v2883 = vpack.c.b16 %v2755, %v2755
        %v2884 = vpack.c.b16 %v2756, %v2756
        %v2885 = vpack.c.b16 %v2757, %v2757
        %v2886 = vpack.c.b16 %v2758, %v2758
        %v2887 = vpack.c.b16 %v2759, %v2759
        %v2888 = vpack.c.b16 %v2760, %v2760
        %v2889 = vpack.c.b16 %v2761, %v2761
        %v2890 = vpack.c.b16 %v2762, %v2762
        %v2891 = vpack.c.b16 %v2763, %v2763
        %v2892 = vpack.c.b16 %v2764, %v2764
        %vm3021 = vcmask 60416
        %3022 = vst.msk [vmem:[%s217] sm:$0xf] %vm3021, %v2765
        %3023 = vst.msk [vmem:[%s217 + $0x4] sm:$0xf] %vm3021, %v2766
        %3024 = vst.msk [vmem:[%s217 + $0x8] sm:$0xf] %vm3021, %v2767
        %3025 = vst.msk [vmem:[%s217 + $0xc] sm:$0xf] %vm3021, %v2768
        %3026 = vst.msk [vmem:[%s217 + $0x10] sm:$0xf] %vm3021, %v2769
        %3027 = vst.msk [vmem:[%s217 + $0x14] sm:$0xf] %vm3021, %v2770
        %3028 = vst.msk [vmem:[%s217 + $0x18] sm:$0xf] %vm3021, %v2771
        %3029 = vst.msk [vmem:[%s217 + $0x1c] sm:$0xf] %vm3021, %v2772
        %3030 = vst.msk [vmem:[%s217 + $0x20] sm:$0xf] %vm3021, %v2773
        %3031 = vst.msk [vmem:[%s217 + $0x24] sm:$0xf] %vm3021, %v2774
        %3032 = vst.msk [vmem:[%s217 + $0x28] sm:$0xf] %vm3021, %v2775
        %3033 = vst.msk [vmem:[%s217 + $0x2c] sm:$0xf] %vm3021, %v2776
        %3034 = vst.msk [vmem:[%s217 + $0x30] sm:$0xf] %vm3021, %v2777
        %3035 = vst.msk [vmem:[%s217 + $0x34] sm:$0xf] %vm3021, %v2778
        %3036 = vst.msk [vmem:[%s217 + $0x38] sm:$0xf] %vm3021, %v2779
        %3037 = vst.msk [vmem:[%s217 + $0x3c] sm:$0xf] %vm3021, %v2780
        %3038 = vst.msk [vmem:[%s217 + $0x40] sm:$0xf] %vm3021, %v2781
        %3039 = vst.msk [vmem:[%s217 + $0x44] sm:$0xf] %vm3021, %v2782
        %3040 = vst.msk [vmem:[%s217 + $0x48] sm:$0xf] %vm3021, %v2783
        %3041 = vst.msk [vmem:[%s217 + $0x4c] sm:$0xf] %vm3021, %v2784
        %3042 = vst.msk [vmem:[%s217 + $0x50] sm:$0xf] %vm3021, %v2785
        %3043 = vst.msk [vmem:[%s217 + $0x54] sm:$0xf] %vm3021, %v2786
        %3044 = vst.msk [vmem:[%s217 + $0x58] sm:$0xf] %vm3021, %v2787
        %3045 = vst.msk [vmem:[%s217 + $0x5c] sm:$0xf] %vm3021, %v2788
        %3046 = vst.msk [vmem:[%s217 + $0x60] sm:$0xf] %vm3021, %v2789
        %3047 = vst.msk [vmem:[%s217 + $0x64] sm:$0xf] %vm3021, %v2790
        %3048 = vst.msk [vmem:[%s217 + $0x68] sm:$0xf] %vm3021, %v2791
        %3049 = vst.msk [vmem:[%s217 + $0x6c] sm:$0xf] %vm3021, %v2792
        %3050 = vst.msk [vmem:[%s217 + $0x70] sm:$0xf] %vm3021, %v2793
        %3051 = vst.msk [vmem:[%s217 + $0x74] sm:$0xf] %vm3021, %v2794
        %3052 = vst.msk [vmem:[%s217 + $0x78] sm:$0xf] %vm3021, %v2795
        %3053 = vst.msk [vmem:[%s217 + $0x7c] sm:$0xf] %vm3021, %v2796
        %3054 = vst.msk [vmem:[%s217 + $0x80] sm:$0xf] %vm3021, %v2797
        %3055 = vst.msk [vmem:[%s217 + $0x84] sm:$0xf] %vm3021, %v2798
        %3056 = vst.msk [vmem:[%s217 + $0x88] sm:$0xf] %vm3021, %v2799
        %3057 = vst.msk [vmem:[%s217 + $0x8c] sm:$0xf] %vm3021, %v2800
        %3058 = vst.msk [vmem:[%s217 + $0x90] sm:$0xf] %vm3021, %v2801
        %3059 = vst.msk [vmem:[%s217 + $0x94] sm:$0xf] %vm3021, %v2802
        %3060 = vst.msk [vmem:[%s217 + $0x98] sm:$0xf] %vm3021, %v2803
        %3061 = vst.msk [vmem:[%s217 + $0x9c] sm:$0xf] %vm3021, %v2804
        %3062 = vst.msk [vmem:[%s217 + $0xa0] sm:$0xf] %vm3021, %v2805
        %3063 = vst.msk [vmem:[%s217 + $0xa4] sm:$0xf] %vm3021, %v2806
        %3064 = vst.msk [vmem:[%s217 + $0xa8] sm:$0xf] %vm3021, %v2807
        %3065 = vst.msk [vmem:[%s217 + $0xac] sm:$0xf] %vm3021, %v2808
        %3066 = vst.msk [vmem:[%s217 + $0xb0] sm:$0xf] %vm3021, %v2809
        %3067 = vst.msk [vmem:[%s217 + $0xb4] sm:$0xf] %vm3021, %v2810
        %3068 = vst.msk [vmem:[%s217 + $0xb8] sm:$0xf] %vm3021, %v2811
        %3069 = vst.msk [vmem:[%s217 + $0xbc] sm:$0xf] %vm3021, %v2812
        %3070 = vst.msk [vmem:[%s217 + $0xc0] sm:$0xf] %vm3021, %v2813
        %3071 = vst.msk [vmem:[%s217 + $0xc4] sm:$0xf] %vm3021, %v2814
        %3072 = vst.msk [vmem:[%s217 + $0xc8] sm:$0xf] %vm3021, %v2815
        %3073 = vst.msk [vmem:[%s217 + $0xcc] sm:$0xf] %vm3021, %v2816
        %3074 = vst.msk [vmem:[%s217 + $0xd0] sm:$0xf] %vm3021, %v2817
        %3075 = vst.msk [vmem:[%s217 + $0xd4] sm:$0xf] %vm3021, %v2818
        %3076 = vst.msk [vmem:[%s217 + $0xd8] sm:$0xf] %vm3021, %v2819
        %3077 = vst.msk [vmem:[%s217 + $0xdc] sm:$0xf] %vm3021, %v2820
        %3078 = vst.msk [vmem:[%s217 + $0xe0] sm:$0xf] %vm3021, %v2821
        %3079 = vst.msk [vmem:[%s217 + $0xe4] sm:$0xf] %vm3021, %v2822
        %3080 = vst.msk [vmem:[%s217 + $0xe8] sm:$0xf] %vm3021, %v2823
        %3081 = vst.msk [vmem:[%s217 + $0xec] sm:$0xf] %vm3021, %v2824
        %3082 = vst.msk [vmem:[%s217 + $0xf0] sm:$0xf] %vm3021, %v2825
        %3083 = vst.msk [vmem:[%s217 + $0xf4] sm:$0xf] %vm3021, %v2826
        %3084 = vst.msk [vmem:[%s217 + $0xf8] sm:$0xf] %vm3021, %v2827
        %3085 = vst.msk [vmem:[%s217 + $0xfc] sm:$0xf] %vm3021, %v2828
        %3086 = vst.msk [vmem:[%s217 + $0x100] sm:$0xf] %vm3021, %v2829
        %3087 = vst.msk [vmem:[%s217 + $0x104] sm:$0xf] %vm3021, %v2830
        %3088 = vst.msk [vmem:[%s217 + $0x108] sm:$0xf] %vm3021, %v2831
        %3089 = vst.msk [vmem:[%s217 + $0x10c] sm:$0xf] %vm3021, %v2832
        %3090 = vst.msk [vmem:[%s217 + $0x110] sm:$0xf] %vm3021, %v2833
        %3091 = vst.msk [vmem:[%s217 + $0x114] sm:$0xf] %vm3021, %v2834
        %3092 = vst.msk [vmem:[%s217 + $0x118] sm:$0xf] %vm3021, %v2835
        %3093 = vst.msk [vmem:[%s217 + $0x11c] sm:$0xf] %vm3021, %v2836
        %3094 = vst.msk [vmem:[%s217 + $0x120] sm:$0xf] %vm3021, %v2837
        %3095 = vst.msk [vmem:[%s217 + $0x124] sm:$0xf] %vm3021, %v2838
        %3096 = vst.msk [vmem:[%s217 + $0x128] sm:$0xf] %vm3021, %v2839
        %3097 = vst.msk [vmem:[%s217 + $0x12c] sm:$0xf] %vm3021, %v2840
        %3098 = vst.msk [vmem:[%s217 + $0x130] sm:$0xf] %vm3021, %v2841
        %3099 = vst.msk [vmem:[%s217 + $0x134] sm:$0xf] %vm3021, %v2842
        %3100 = vst.msk [vmem:[%s217 + $0x138] sm:$0xf] %vm3021, %v2843
        %3101 = vst.msk [vmem:[%s217 + $0x13c] sm:$0xf] %vm3021, %v2844
        %3102 = vst.msk [vmem:[%s217 + $0x140] sm:$0xf] %vm3021, %v2845
        %3103 = vst.msk [vmem:[%s217 + $0x144] sm:$0xf] %vm3021, %v2846
        %3104 = vst.msk [vmem:[%s217 + $0x148] sm:$0xf] %vm3021, %v2847
        %3105 = vst.msk [vmem:[%s217 + $0x14c] sm:$0xf] %vm3021, %v2848
        %3106 = vst.msk [vmem:[%s217 + $0x150] sm:$0xf] %vm3021, %v2849
        %3107 = vst.msk [vmem:[%s217 + $0x154] sm:$0xf] %vm3021, %v2850
        %3108 = vst.msk [vmem:[%s217 + $0x158] sm:$0xf] %vm3021, %v2851
        %3109 = vst.msk [vmem:[%s217 + $0x15c] sm:$0xf] %vm3021, %v2852
        %3110 = vst.msk [vmem:[%s217 + $0x160] sm:$0xf] %vm3021, %v2853
        %3111 = vst.msk [vmem:[%s217 + $0x164] sm:$0xf] %vm3021, %v2854
        %3112 = vst.msk [vmem:[%s217 + $0x168] sm:$0xf] %vm3021, %v2855
        %3113 = vst.msk [vmem:[%s217 + $0x16c] sm:$0xf] %vm3021, %v2856
        %3114 = vst.msk [vmem:[%s217 + $0x170] sm:$0xf] %vm3021, %v2857
        %3115 = vst.msk [vmem:[%s217 + $0x174] sm:$0xf] %vm3021, %v2858
        %3116 = vst.msk [vmem:[%s217 + $0x178] sm:$0xf] %vm3021, %v2859
        %3117 = vst.msk [vmem:[%s217 + $0x17c] sm:$0xf] %vm3021, %v2860
        %3118 = vst.msk [vmem:[%s217 + $0x180] sm:$0xf] %vm3021, %v2861
        %3119 = vst.msk [vmem:[%s217 + $0x184] sm:$0xf] %vm3021, %v2862
        %3120 = vst.msk [vmem:[%s217 + $0x188] sm:$0xf] %vm3021, %v2863
        %3121 = vst.msk [vmem:[%s217 + $0x18c] sm:$0xf] %vm3021, %v2864
        %3122 = vst.msk [vmem:[%s217 + $0x190] sm:$0xf] %vm3021, %v2865
        %3123 = vst.msk [vmem:[%s217 + $0x194] sm:$0xf] %vm3021, %v2866
        %3124 = vst.msk [vmem:[%s217 + $0x198] sm:$0xf] %vm3021, %v2867
        %3125 = vst.msk [vmem:[%s217 + $0x19c] sm:$0xf] %vm3021, %v2868
        %3126 = vst.msk [vmem:[%s217 + $0x1a0] sm:$0xf] %vm3021, %v2869
        %3127 = vst.msk [vmem:[%s217 + $0x1a4] sm:$0xf] %vm3021, %v2870
        %3128 = vst.msk [vmem:[%s217 + $0x1a8] sm:$0xf] %vm3021, %v2871
        %3129 = vst.msk [vmem:[%s217 + $0x1ac] sm:$0xf] %vm3021, %v2872
        %3130 = vst.msk [vmem:[%s217 + $0x1b0] sm:$0xf] %vm3021, %v2873
        %3131 = vst.msk [vmem:[%s217 + $0x1b4] sm:$0xf] %vm3021, %v2874
        %3132 = vst.msk [vmem:[%s217 + $0x1b8] sm:$0xf] %vm3021, %v2875
        %3133 = vst.msk [vmem:[%s217 + $0x1bc] sm:$0xf] %vm3021, %v2876
        %3134 = vst.msk [vmem:[%s217 + $0x1c0] sm:$0xf] %vm3021, %v2877
        %3135 = vst.msk [vmem:[%s217 + $0x1c4] sm:$0xf] %vm3021, %v2878
        %3136 = vst.msk [vmem:[%s217 + $0x1c8] sm:$0xf] %vm3021, %v2879
        %3137 = vst.msk [vmem:[%s217 + $0x1cc] sm:$0xf] %vm3021, %v2880
        %3138 = vst.msk [vmem:[%s217 + $0x1d0] sm:$0xf] %vm3021, %v2881
        %3139 = vst.msk [vmem:[%s217 + $0x1d4] sm:$0xf] %vm3021, %v2882
        %3140 = vst.msk [vmem:[%s217 + $0x1d8] sm:$0xf] %vm3021, %v2883
        %3141 = vst.msk [vmem:[%s217 + $0x1dc] sm:$0xf] %vm3021, %v2884
        %3142 = vst.msk [vmem:[%s217 + $0x1e0] sm:$0xf] %vm3021, %v2885
        %3143 = vst.msk [vmem:[%s217 + $0x1e4] sm:$0xf] %vm3021, %v2886
        %3144 = vst.msk [vmem:[%s217 + $0x1e8] sm:$0xf] %vm3021, %v2887
        %3145 = vst.msk [vmem:[%s217 + $0x1ec] sm:$0xf] %vm3021, %v2888
        %3146 = vst.msk [vmem:[%s217 + $0x1f0] sm:$0xf] %vm3021, %v2889
        %3147 = vst.msk [vmem:[%s217 + $0x1f4] sm:$0xf] %vm3021, %v2890
        %3148 = vst.msk [vmem:[%s217 + $0x1f8] sm:$0xf] %vm3021, %v2891
        %3149 = vst.msk [vmem:[%s217 + $0x1fc] sm:$0xf] %vm3021, %v2892
      $region40: #{_lambda_.4} parent=31 // pred_fallthru
        _
      %s3150 = smul.u32 128, %s18
      %p3151 = scmp.lt.s32.totalorder %s3150, 255
      %s3152 = scalar_select %p3151, %s3150, 255
      %s3153 = smul.addr %s3152, 4
      %s3154 = scalar_lea.vmem %s3, %s3153
      // Predicated region
      $region41: #{_lambda_.4} parent=31 // pred_check
        %p3155 = pneg %p119
      $region42: #{_lambda_.4} parent=31 // pred_check_branch
        %3157 = sbr.rel (%p3155) target = $region44
      $region43: #{_lambda_.4} parent=31 // pred_region
        %s3158 = smul.u32 128, %s18
      $region44: #{_lambda_.4} parent=31 // pred_fallthru
        _
    $region32: #{_lambda_.4} parent=5 // pred_fallthru
      _
    %p3159 = scmp.le.s32.totalorder 2, %s9
    // Predicated region
    $region45: #{_lambda_.4} parent=5 // pred_check
      %p3160 = pneg %p3159
    $region46: #{_lambda_.4} parent=5 // pred_check_branch
      %3162 = sbr.rel (%p3160) target = $region48
    $region47: #{_lambda_.4} parent=5 // pred_region
      %s3163 = ssub.s32 %s9, 2
      // Predicated region
      $region49: #{_lambda_.4} parent=47 // pred_check
        %p3164 = pneg %p125
      $region50: #{_lambda_.4} parent=47 // pred_check_branch
        %3166 = sbr.rel (%p3164) target = $region52
      $region51: #{_lambda_.4} parent=47 // pred_region
        %s3167 = smul.u32 128, %s20
        %p3168 = scmp.lt.s32.totalorder %s3167, 255
        %s3169 = scalar_select %p3168, %s3167, 255
        %s3170 = smul.addr %s3169, 4
        %s3171 = scalar_lea.vmem %s3, %s3170
      $region52: #{_lambda_.4} parent=47 // pred_fallthru
        _
    $region48: #{_lambda_.4} parent=5 // pred_fallthru
      _
  $region6: #{_lambda_.4} parent=0 // loop_footer
    %s13 = sadd.s32 1, %s9
  $region7: #{_lambda_.4} parent=0 // loop_footer_branch
    %8 = sbr.rel target = $region3
  $region8: #{_lambda_.4} parent=0 // loop_exit
    _

// kernel: _lambda_.5
$region0: #{_lambda_.5}
  #allocation0 [shape = 'u32[]', space=smem, size = 0x4, offset = 0x4, fixed_abs, tag = 'smem constant byte address 0x4 - core index']
  #allocation1 [shape = 'u32[144,128]{1,0:T(1,128)}', space=vmem, size = 0x12000, scoped, tag = 'internal scratch']
  #allocation2 [shape = 'f32[256,16]{1,0:T(8,128)}', space=vmem, size = 0x20000, scoped, tag = 'scratch operand']
  %s0 = inlined_call_operand.vmem [shape: bf16[512,256], index: 0, kind: input, shape index: {}]
  %s1 = inlined_call_operand.vmem [shape: bf16[256,16], index: 1, kind: input, shape index: {}]
  %s2 = inlined_call_operand.vmem [shape: f32[1,16], index: 2, kind: input, shape index: {}]
  %s3 = inlined_call_operand.vmem [shape: bf16[512,16], index: 3, kind: output, shape index: {}]
  %s4 = sld [smem:[#allocation0]]
  $region53: #{_lambda_.5} parent=0
    _
  %s6 = ssub.s32 1, %s4
  %s7 = scalar_select 0, %s6, %s4
  loop: start=0, step=1, limit=4
  $region2: #{_lambda_.5} parent=0 // loop_pre_header
    _
  $region3: #{_lambda_.5} parent=0 // loop_header
    %s9 = sphi 0, %s13
    %p10 = scmp.ge.s32.totalorder %s9, 4
    %s16 = sphi 0, %s28
    %s17 = sphi 0, %s24
    %s18 = sphi 0, %s16
    %s19 = sphi 0, %s17
    %s20 = sphi 0, %s18
    %s21 = sphi 0, %s19
    %s33 = sphi 0, %s35
    %s36 = sphi 0, %s33
    %s37 = sphi 0, %s36
    %s53 = sphi 0, %s37
    %s59 = sphi 0, %s61
    %s62 = sphi 0, %s59
    %s63 = sphi 0, %s62
    %s79 = sphi 0, %s63
    %s83 = sphi 0, %s83
    %s85 = sphi 0, %s83
    %s86 = sphi 0, %s85
    %s100 = sphi 0, %s86
    %s106 = sphi 0, %s108
    %s109 = sphi 0, %s106
    %s110 = sphi 0, %s109
    %s126 = sphi 0, %s110
  $region4: #{_lambda_.5} parent=0 // loop_header_branch
    %12 = sbr.rel (%p10) target = $region8
  $region5: #{_lambda_.5} parent=0 // loop_body
    %s14 = ssub.s32 %s9, 1
    %s15 = ssub.s32 %s9, 2
    %s22 = sadd.s32 1, %s17
    %p23 = scmp.ge.s32.totalorder %s22, 1
    %s24 = scalar_select %p23, 0, %s22
    %s25 = sadd.s32 1, %s16
    %s26 = scalar_select %p23, %s25, %s16
    %p27 = scmp.ge.s32.totalorder %s26, 2
    %s28 = scalar_select %p27, 0, %s26
    %s29 = ssub.s32 %s16, %s28
    %s30 = ssub.s32 %s17, %s24
    %s31 = sor.u32 %s29, %s30
    %p32 = scmp.eq.s32.totalorder %s31, 0
    %s34 = sadd.s32 %s33, 1
    %s35 = scalar_select %p32, %s33, %s34
    %p38 = pneg %p32
    %p39 = scmp.eq.s32.totalorder %s9, 1
    %p40 = por %p38, %p39
    %p41 = scmp.ne.s32.totalorder %s33, %s36
    %p42 = scmp.eq.s32.totalorder %s9, 0
    %p43 = por %p41, %p42
    %p44 = scmp.ne.s32.totalorder %s33, %s36
    %p45 = scmp.eq.s32.totalorder %s14, 1
    %p46 = por %p44, %p45
    %p47 = scmp.ne.s32.totalorder %s36, %s37
    %p48 = scmp.eq.s32.totalorder %s14, 0
    %p49 = por %p47, %p48
    %p50 = scmp.ne.s32.totalorder %s36, %s37
    %p51 = scmp.eq.s32.totalorder %s15, 1
    %p52 = por %p50, %p51
    %p54 = scmp.ne.s32.totalorder %s37, %s53
    %p55 = scmp.eq.s32.totalorder %s15, 0
    %p56 = por %p54, %p55
    %s57 = ssub.s32 %s17, %s24
    %p58 = scmp.eq.s32.totalorder %s57, 0
    %s60 = sadd.s32 %s59, 1
    %s61 = scalar_select %p58, %s59, %s60
    %p64 = pneg %p58
    %p65 = scmp.eq.s32.totalorder %s9, 1
    %p66 = por %p64, %p65
    %p67 = scmp.ne.s32.totalorder %s59, %s62
    %p68 = scmp.eq.s32.totalorder %s9, 0
    %p69 = por %p67, %p68
    %p70 = scmp.ne.s32.totalorder %s59, %s62
    %p71 = scmp.eq.s32.totalorder %s14, 1
    %p72 = por %p70, %p71
    %p73 = scmp.ne.s32.totalorder %s62, %s63
    %p74 = scmp.eq.s32.totalorder %s14, 0
    %p75 = por %p73, %p74
    %p76 = scmp.ne.s32.totalorder %s62, %s63
    %p77 = scmp.eq.s32.totalorder %s15, 1
    %p78 = por %p76, %p77
    %p80 = scmp.ne.s32.totalorder %s63, %s79
    %p81 = scmp.eq.s32.totalorder %s15, 0
    %p82 = por %p80, %p81
    %s84 = sadd.s32 %s83, 1
    %p87 = scmp.eq.s32.totalorder %s9, 1
    %p88 = scmp.ne.s32.totalorder %s83, %s85
    %p89 = scmp.eq.s32.totalorder %s9, 0
    %p90 = por %p88, %p89
    %p91 = scmp.ne.s32.totalorder %s83, %s85
    %p92 = scmp.eq.s32.totalorder %s14, 1
    %p93 = por %p91, %p92
    %p94 = scmp.ne.s32.totalorder %s85, %s86
    %p95 = scmp.eq.s32.totalorder %s14, 0
    %p96 = por %p94, %p95
    %p97 = scmp.ne.s32.totalorder %s85, %s86
    %p98 = scmp.eq.s32.totalorder %s15, 1
    %p99 = por %p97, %p98
    %p101 = scmp.ne.s32.totalorder %s86, %s100
    %p102 = scmp.eq.s32.totalorder %s15, 0
    %p103 = por %p101, %p102
    %s104 = ssub.s32 %s16, %s28
    %p105 = scmp.eq.s32.totalorder %s104, 0
    %s107 = sadd.s32 %s106, 1
    %s108 = scalar_select %p105, %s106, %s107
    %p111 = pneg %p105
    %p112 = scmp.eq.s32.totalorder %s9, 1
    %p113 = por %p111, %p112
    %p114 = scmp.ne.s32.totalorder %s106, %s109
    %p115 = scmp.eq.s32.totalorder %s9, 0
    %p116 = por %p114, %p115
    %p117 = scmp.ne.s32.totalorder %s106, %s109
    %p118 = scmp.eq.s32.totalorder %s14, 1
    %p119 = por %p117, %p118
    %p120 = scmp.ne.s32.totalorder %s109, %s110
    %p121 = scmp.eq.s32.totalorder %s14, 0
    %p122 = por %p120, %p121
    %p123 = scmp.ne.s32.totalorder %s109, %s110
    %p124 = scmp.eq.s32.totalorder %s15, 1
    %p125 = por %p123, %p124
    %p127 = scmp.ne.s32.totalorder %s110, %s126
    %p128 = scmp.eq.s32.totalorder %s15, 0
    %p129 = por %p127, %p128
    %p130 = scmp.le.s32.totalorder 1, %s9
    %p131 = scmp.lt.s32.totalorder %s9, 3
    %p132 = pnand %p130, %p131
    %p133 = pneg %p132
    // Predicated region
    $region9: #{_lambda_.5} parent=5 // pred_check
      _
    $region10: #{_lambda_.5} parent=5 // pred_check_branch
      %135 = sbr.rel (%p132) target = $region12
    $region11: #{_lambda_.5} parent=5 // pred_region
      %s136 = ssub.s32 %s9, 1
      // Predicated region
      $region13: #{_lambda_.5} parent=11 // pred_check
        %p137 = pneg %p75
      $region14: #{_lambda_.5} parent=11 // pred_check_branch
        %139 = sbr.rel (%p137) target = $region16
      $region15: #{_lambda_.5} parent=11 // pred_region
        %s140 = smul.u32 32, %s19
        %p141 = scmp.lt.s32.totalorder %s140, 31
        %s142 = scalar_select %p141, %s140, 31
        %s143 = smul.addr %s142, 4
        %s144 = scalar_lea.vmem %s1, %s143
        %s145 = smul.u32 32, %s19
      $region16: #{_lambda_.5} parent=11 // pred_fallthru
        _
      // Predicated region
      $region17: #{_lambda_.5} parent=11 // pred_check
        %p146 = pneg %p96
      $region18: #{_lambda_.5} parent=11 // pred_check_branch
        %148 = sbr.rel (%p146) target = $region20
      $region19: #{_lambda_.5} parent=11 // pred_region
        _
      $region20: #{_lambda_.5} parent=11 // pred_fallthru
        _
    $region12: #{_lambda_.5} parent=5 // pred_fallthru
      _
    %p149 = scmp.lt.s32.totalorder %s9, 2
    // Predicated region
    $region21: #{_lambda_.5} parent=5 // pred_check
      %p150 = pneg %p149
    $region22: #{_lambda_.5} parent=5 // pred_check_branch
      %152 = sbr.rel (%p150) target = $region24
    $region23: #{_lambda_.5} parent=5 // pred_region
      // Predicated region
      $region25: #{_lambda_.5} parent=23 // pred_check
        %p153 = pneg %p43
      $region26: #{_lambda_.5} parent=23 // pred_check_branch
        %155 = sbr.rel (%p153) target = $region28
      $region27: #{_lambda_.5} parent=23 // pred_region
        %s156 = smul.u32 32, %s16
        %s157 = smul.u32 2, %s17
        %p158 = scmp.lt.s32.totalorder %s156, 63
        %s159 = scalar_select %p158, %s156, 63
        %p160 = scmp.lt.s32.totalorder %s157, 1
        %s161 = scalar_select %p160, %s157, 1
        %s162 = smul.addr %s159, 2
        %s163 = sadd.s32 %s161, %s162
        %s164 = smul.addr %s163, 4
        %s165 = scalar_lea.vmem %s0, %s164
        %s166 = smul.u32 32, %s16
        %s167 = smul.u32 2, %s17
      $region28: #{_lambda_.5} parent=23 // pred_fallthru
        _
    $region24: #{_lambda_.5} parent=5 // pred_fallthru
      _
    %p168 = scmp.le.s32.totalorder 1, %s9
    %p169 = scmp.lt.s32.totalorder %s9, 3
    %p170 = pnand %p168, %p169
    %p171 = pneg %p170
    // Predicated region
    $region29: #{_lambda_.5} parent=5 // pred_check
      _
    $region30: #{_lambda_.5} parent=5 // pred_check_branch
      %173 = sbr.rel (%p170) target = $region32
    $region31: #{_lambda_.5} parent=5 // pred_region
      %s174 = ssub.s32 %s9, 1
      %s175 = smul.u32 32, %s18
      %s176 = smul.u32 2, %s19
      %p177 = scmp.lt.s32.totalorder %s175, 63
      %s178 = scalar_select %p177, %s175, 63
      %p179 = scmp.lt.s32.totalorder %s176, 1
      %s180 = scalar_select %p179, %s176, 1
      %s181 = smul.addr %s178, 2
      %s182 = sadd.s32 %s180, %s181
      %s183 = smul.addr %s182, 4
      %s184 = scalar_lea.vmem %s0, %s183
      %p185 = pneg %p49
      %p186 = pneg %p46
      %s187 = smul.u32 32, %s19
      %p188 = scmp.lt.s32.totalorder %s187, 31
      %s189 = scalar_select %p188, %s187, 31
      %s190 = smul.addr %s189, 4
      %s191 = scalar_lea.vmem %s1, %s190
      %p192 = pneg %p75
      %p193 = pneg %p72
      %p194 = pneg %p96
      %p195 = pneg %p93
      %p196 = pneg %p122
      %p197 = pneg %p119
      %s198 = smul.u32 32, %s18
      %p199 = scmp.lt.s32.totalorder %s198, 63
      %s200 = scalar_select %p199, %s198, 63
      %s201 = smul.addr %s200, 4
      %s202 = scalar_lea.vmem %s3, %s201
      %s203 = smul.u32 32, %s18
      %s204 = smul.u32 2, %s19
      %p205 = scmp.lt.s32.totalorder %s203, 63
      %s206 = scalar_select %p205, %s203, 63
      %p207 = scmp.lt.s32.totalorder %s204, 1
      %s208 = scalar_select %p207, %s204, 1
      %s209 = smul.addr %s206, 2
      %s210 = sadd.s32 %s208, %s209
      %s211 = smul.addr %s210, 4
      %s212 = scalar_lea.vmem %s0, %s211
      %s213 = smul.u32 32, %s18
      %s214 = smul.u32 2, %s19
      %s215 = smul.u32 32, %s19
      %p216 = scmp.lt.s32.totalorder %s215, 31
      %s217 = scalar_select %p216, %s215, 31
      %s218 = smul.addr %s217, 4
      %s219 = scalar_lea.vmem %s1, %s218
      %s220 = smul.u32 32, %s19
      %s221 = smul.u32 32, %s18
      %p222 = scmp.lt.s32.totalorder %s221, 63
      %s223 = scalar_select %p222, %s221, 63
      %s224 = smul.addr %s223, 4
      %s225 = scalar_lea.vmem %s3, %s224
      %s226 = smul.u32 32, %s18
      %p228 = scmp.eq.s32.totalorder %s19, 0
      // Predicated region
      $region33: #{_lambda_.5} parent=31 // pred_check
        %p229 = pneg %p228
      $region34: #{_lambda_.5} parent=31 // pred_check_branch
        %231 = sbr.rel (%p229) target = $region36
      $region35: #{_lambda_.5} parent=31 // pred_region
        %vm232 = vcmask 130048
        %233 = vst.msk [vmem:[#allocation2] sm:$0xff] %vm232, 0.0
        %234 = vst.msk [vmem:[#allocation2 + $0x8] sm:$0xff] %vm232, 0.0
        %235 = vst.msk [vmem:[#allocation2 + $0x10] sm:$0xff] %vm232, 0.0
        %236 = vst.msk [vmem:[#allocation2 + $0x18] sm:$0xff] %vm232, 0.0
        %237 = vst.msk [vmem:[#allocation2 + $0x20] sm:$0xff] %vm232, 0.0
        %238 = vst.msk [vmem:[#allocation2 + $0x28] sm:$0xff] %vm232, 0.0
        %239 = vst.msk [vmem:[#allocation2 + $0x30] sm:$0xff] %vm232, 0.0
        %240 = vst.msk [vmem:[#allocation2 + $0x38] sm:$0xff] %vm232, 0.0
        %241 = vst.msk [vmem:[#allocation2 + $0x40] sm:$0xff] %vm232, 0.0
        %242 = vst.msk [vmem:[#allocation2 + $0x48] sm:$0xff] %vm232, 0.0
        %243 = vst.msk [vmem:[#allocation2 + $0x50] sm:$0xff] %vm232, 0.0
        %244 = vst.msk [vmem:[#allocation2 + $0x58] sm:$0xff] %vm232, 0.0
        %245 = vst.msk [vmem:[#allocation2 + $0x60] sm:$0xff] %vm232, 0.0
        %246 = vst.msk [vmem:[#allocation2 + $0x68] sm:$0xff] %vm232, 0.0
        %247 = vst.msk [vmem:[#allocation2 + $0x70] sm:$0xff] %vm232, 0.0
        %248 = vst.msk [vmem:[#allocation2 + $0x78] sm:$0xff] %vm232, 0.0
        %249 = vst.msk [vmem:[#allocation2 + $0x80] sm:$0xff] %vm232, 0.0
        %250 = vst.msk [vmem:[#allocation2 + $0x88] sm:$0xff] %vm232, 0.0
        %251 = vst.msk [vmem:[#allocation2 + $0x90] sm:$0xff] %vm232, 0.0
        %252 = vst.msk [vmem:[#allocation2 + $0x98] sm:$0xff] %vm232, 0.0
        %253 = vst.msk [vmem:[#allocation2 + $0xa0] sm:$0xff] %vm232, 0.0
        %254 = vst.msk [vmem:[#allocation2 + $0xa8] sm:$0xff] %vm232, 0.0
        %255 = vst.msk [vmem:[#allocation2 + $0xb0] sm:$0xff] %vm232, 0.0
        %256 = vst.msk [vmem:[#allocation2 + $0xb8] sm:$0xff] %vm232, 0.0
        %257 = vst.msk [vmem:[#allocation2 + $0xc0] sm:$0xff] %vm232, 0.0
        %258 = vst.msk [vmem:[#allocation2 + $0xc8] sm:$0xff] %vm232, 0.0
        %259 = vst.msk [vmem:[#allocation2 + $0xd0] sm:$0xff] %vm232, 0.0
        %260 = vst.msk [vmem:[#allocation2 + $0xd8] sm:$0xff] %vm232, 0.0
        %261 = vst.msk [vmem:[#allocation2 + $0xe0] sm:$0xff] %vm232, 0.0
        %262 = vst.msk [vmem:[#allocation2 + $0xe8] sm:$0xff] %vm232, 0.0
        %263 = vst.msk [vmem:[#allocation2 + $0xf0] sm:$0xff] %vm232, 0.0
        %264 = vst.msk [vmem:[#allocation2 + $0xf8] sm:$0xff] %vm232, 0.0
      $region36: #{_lambda_.5} parent=31 // pred_fallthru
        _
      %v265 = vld [vmem:[#allocation2] sm:$0xff]
      %v266 = vld [vmem:[#allocation2 + $0x8] sm:$0xff]
      %v267 = vld [vmem:[#allocation2 + $0x10] sm:$0xff]
      %v268 = vld [vmem:[#allocation2 + $0x18] sm:$0xff]
      %v269 = vld [vmem:[#allocation2 + $0x20] sm:$0xff]
      %v270 = vld [vmem:[#allocation2 + $0x28] sm:$0xff]
      %v271 = vld [vmem:[#allocation2 + $0x30] sm:$0xff]
      %v272 = vld [vmem:[#allocation2 + $0x38] sm:$0xff]
      %v273 = vld [vmem:[#allocation2 + $0x40] sm:$0xff]
      %v274 = vld [vmem:[#allocation2 + $0x48] sm:$0xff]
      %v275 = vld [vmem:[#allocation2 + $0x50] sm:$0xff]
      %v276 = vld [vmem:[#allocation2 + $0x58] sm:$0xff]
      %v277 = vld [vmem:[#allocation2 + $0x60] sm:$0xff]
      %v278 = vld [vmem:[#allocation2 + $0x68] sm:$0xff]
      %v279 = vld [vmem:[#allocation2 + $0x70] sm:$0xff]
      %v280 = vld [vmem:[#allocation2 + $0x78] sm:$0xff]
      %v281 = vld [vmem:[#allocation2 + $0x80] sm:$0xff]
      %v282 = vld [vmem:[#allocation2 + $0x88] sm:$0xff]
      %v283 = vld [vmem:[#allocation2 + $0x90] sm:$0xff]
      %v284 = vld [vmem:[#allocation2 + $0x98] sm:$0xff]
      %v285 = vld [vmem:[#allocation2 + $0xa0] sm:$0xff]
      %v286 = vld [vmem:[#allocation2 + $0xa8] sm:$0xff]
      %v287 = vld [vmem:[#allocation2 + $0xb0] sm:$0xff]
      %v288 = vld [vmem:[#allocation2 + $0xb8] sm:$0xff]
      %v289 = vld [vmem:[#allocation2 + $0xc0] sm:$0xff]
      %v290 = vld [vmem:[#allocation2 + $0xc8] sm:$0xff]
      %v291 = vld [vmem:[#allocation2 + $0xd0] sm:$0xff]
      %v292 = vld [vmem:[#allocation2 + $0xd8] sm:$0xff]
      %v293 = vld [vmem:[#allocation2 + $0xe0] sm:$0xff]
      %v294 = vld [vmem:[#allocation2 + $0xe8] sm:$0xff]
      %v295 = vld [vmem:[#allocation2 + $0xf0] sm:$0xff]
      %v296 = vld [vmem:[#allocation2 + $0xf8] sm:$0xff]
      %v297 = vld [vmem:[%s212] sm:$0xff]
      %v298 = vld [vmem:[%s212 + $0x8] sm:$0xff]
      %v299 = vld [vmem:[%s212 + $0x10] sm:$0xff]
      %v300 = vld [vmem:[%s212 + $0x18] sm:$0xff]
      %v301 = vld [vmem:[%s212 + $0x20] sm:$0xff]
      %v302 = vld [vmem:[%s212 + $0x28] sm:$0xff]
      %v303 = vld [vmem:[%s212 + $0x30] sm:$0xff]
      %v304 = vld [vmem:[%s212 + $0x38] sm:$0xff]
      %v305 = vld [vmem:[%s212 + $0x40] sm:$0xff]
      %v306 = vld [vmem:[%s212 + $0x48] sm:$0xff]
      %v307 = vld [vmem:[%s212 + $0x50] sm:$0xff]
      %v308 = vld [vmem:[%s212 + $0x58] sm:$0xff]
      %v309 = vld [vmem:[%s212 + $0x60] sm:$0xff]
      %v310 = vld [vmem:[%s212 + $0x68] sm:$0xff]
      %v311 = vld [vmem:[%s212 + $0x70] sm:$0xff]
      %v312 = vld [vmem:[%s212 + $0x78] sm:$0xff]
      %v313 = vld [vmem:[%s212 + $0x80] sm:$0xff]
      %v314 = vld [vmem:[%s212 + $0x88] sm:$0xff]
      %v315 = vld [vmem:[%s212 + $0x90] sm:$0xff]
      %v316 = vld [vmem:[%s212 + $0x98] sm:$0xff]
      %v317 = vld [vmem:[%s212 + $0xa0] sm:$0xff]
      %v318 = vld [vmem:[%s212 + $0xa8] sm:$0xff]
      %v319 = vld [vmem:[%s212 + $0xb0] sm:$0xff]
      %v320 = vld [vmem:[%s212 + $0xb8] sm:$0xff]
      %v321 = vld [vmem:[%s212 + $0xc0] sm:$0xff]
      %v322 = vld [vmem:[%s212 + $0xc8] sm:$0xff]
      %v323 = vld [vmem:[%s212 + $0xd0] sm:$0xff]
      %v324 = vld [vmem:[%s212 + $0xd8] sm:$0xff]
      %v325 = vld [vmem:[%s212 + $0xe0] sm:$0xff]
      %v326 = vld [vmem:[%s212 + $0xe8] sm:$0xff]
      %v327 = vld [vmem:[%s212 + $0xf0] sm:$0xff]
      %v328 = vld [vmem:[%s212 + $0xf8] sm:$0xff]
      %v329 = vld [vmem:[%s219] sm:$0xf]
      %v330 = vld [vmem:[%s219 + $0x4] sm:$0xf]
      %v331 = vld [vmem:[%s219 + $0x8] sm:$0xf]
      %v332 = vld [vmem:[%s219 + $0xc] sm:$0xf]
      %v333 = vld [vmem:[%s219 + $0x10] sm:$0xf]
      %v334 = vld [vmem:[%s219 + $0x14] sm:$0xf]
      %v335 = vld [vmem:[%s219 + $0x18] sm:$0xf]
      %v336 = vld [vmem:[%s219 + $0x1c] sm:$0xf]
      %v337 = vld [vmem:[%s219 + $0x20] sm:$0xf]
      %v338 = vld [vmem:[%s219 + $0x24] sm:$0xf]
      %v339 = vld [vmem:[%s219 + $0x28] sm:$0xf]
      %v340 = vld [vmem:[%s219 + $0x2c] sm:$0xf]
      %v341 = vld [vmem:[%s219 + $0x30] sm:$0xf]
      %v342 = vld [vmem:[%s219 + $0x34] sm:$0xf]
      %v343 = vld [vmem:[%s219 + $0x38] sm:$0xf]
      %v344 = vld [vmem:[%s219 + $0x3c] sm:$0xf]
      %v345 = vld [vmem:[%s219 + $0x40] sm:$0xf]
      %v346 = vld [vmem:[%s219 + $0x44] sm:$0xf]
      %v347 = vld [vmem:[%s219 + $0x48] sm:$0xf]
      %v348 = vld [vmem:[%s219 + $0x4c] sm:$0xf]
      %v349 = vld [vmem:[%s219 + $0x50] sm:$0xf]
      %v350 = vld [vmem:[%s219 + $0x54] sm:$0xf]
      %v351 = vld [vmem:[%s219 + $0x58] sm:$0xf]
      %v352 = vld [vmem:[%s219 + $0x5c] sm:$0xf]
      %v353 = vld [vmem:[%s219 + $0x60] sm:$0xf]
      %v354 = vld [vmem:[%s219 + $0x64] sm:$0xf]
      %v355 = vld [vmem:[%s219 + $0x68] sm:$0xf]
      %v356 = vld [vmem:[%s219 + $0x6c] sm:$0xf]
      %v357 = vld [vmem:[%s219 + $0x70] sm:$0xf]
      %v358 = vld [vmem:[%s219 + $0x74] sm:$0xf]
      %v359 = vld [vmem:[%s219 + $0x78] sm:$0xf]
      %v360 = vld [vmem:[%s219 + $0x7c] sm:$0xf]
      %v393 = vunpack.c.l.b16 %v297
      %v394 = vunpack.c.h.b16 %v297
      %v395 = vunpack.c.l.b16 %v298
      %v396 = vunpack.c.h.b16 %v298
      %v397 = vunpack.c.l.b16 %v299
      %v398 = vunpack.c.h.b16 %v299
      %v399 = vunpack.c.l.b16 %v300
      %v400 = vunpack.c.h.b16 %v300
      %v401 = vunpack.c.l.b16 %v301
      %v402 = vunpack.c.h.b16 %v301
      %v403 = vunpack.c.l.b16 %v302
      %v404 = vunpack.c.h.b16 %v302
      %v405 = vunpack.c.l.b16 %v303
      %v406 = vunpack.c.h.b16 %v303
      %v407 = vunpack.c.l.b16 %v304
      %v408 = vunpack.c.h.b16 %v304
      %v409 = vunpack.c.l.b16 %v305
      %v410 = vunpack.c.h.b16 %v305
      %v411 = vunpack.c.l.b16 %v306
      %v412 = vunpack.c.h.b16 %v306
      %v413 = vunpack.c.l.b16 %v307
      %v414 = vunpack.c.h.b16 %v307
      %v415 = vunpack.c.l.b16 %v308
      %v416 = vunpack.c.h.b16 %v308
      %v417 = vunpack.c.l.b16 %v309
      %v418 = vunpack.c.h.b16 %v309
      %v419 = vunpack.c.l.b16 %v310
      %v420 = vunpack.c.h.b16 %v310
      %v421 = vunpack.c.l.b16 %v311
      %v422 = vunpack.c.h.b16 %v311
      %v423 = vunpack.c.l.b16 %v312
      %v424 = vunpack.c.h.b16 %v312
      %v425 = vunpack.c.l.b16 %v313
      %v426 = vunpack.c.h.b16 %v313
      %v427 = vunpack.c.l.b16 %v314
      %v428 = vunpack.c.h.b16 %v314
      %v429 = vunpack.c.l.b16 %v315
      %v430 = vunpack.c.h.b16 %v315
      %v431 = vunpack.c.l.b16 %v316
      %v432 = vunpack.c.h.b16 %v316
      %v433 = vunpack.c.l.b16 %v317
      %v434 = vunpack.c.h.b16 %v317
      %v435 = vunpack.c.l.b16 %v318
      %v436 = vunpack.c.h.b16 %v318
      %v437 = vunpack.c.l.b16 %v319
      %v438 = vunpack.c.h.b16 %v319
      %v439 = vunpack.c.l.b16 %v320
      %v440 = vunpack.c.h.b16 %v320
      %v441 = vunpack.c.l.b16 %v321
      %v442 = vunpack.c.h.b16 %v321
      %v443 = vunpack.c.l.b16 %v322
      %v444 = vunpack.c.h.b16 %v322
      %v445 = vunpack.c.l.b16 %v323
      %v446 = vunpack.c.h.b16 %v323
      %v447 = vunpack.c.l.b16 %v324
      %v448 = vunpack.c.h.b16 %v324
      %v449 = vunpack.c.l.b16 %v325
      %v450 = vunpack.c.h.b16 %v325
      %v451 = vunpack.c.l.b16 %v326
      %v452 = vunpack.c.h.b16 %v326
      %v453 = vunpack.c.l.b16 %v327
      %v454 = vunpack.c.h.b16 %v327
      %v455 = vunpack.c.l.b16 %v328
      %v456 = vunpack.c.h.b16 %v328
      %v457 = vpack.c.b16 %v395, %v393
      %v458 = vpack.c.b16 %v396, %v394
      %v459 = vpack.c.b16 %v399, %v397
      %v460 = vpack.c.b16 %v400, %v398
      %v461 = vpack.c.b16 %v403, %v401
      %v462 = vpack.c.b16 %v404, %v402
      %v463 = vpack.c.b16 %v407, %v405
      %v464 = vpack.c.b16 %v408, %v406
      %v465 = vpack.c.b16 %v411, %v409
      %v466 = vpack.c.b16 %v412, %v410
      %v467 = vpack.c.b16 %v415, %v413
      %v468 = vpack.c.b16 %v416, %v414
      %v469 = vpack.c.b16 %v419, %v417
      %v470 = vpack.c.b16 %v420, %v418
      %v471 = vpack.c.b16 %v423, %v421
      %v472 = vpack.c.b16 %v424, %v422
      %v473 = vpack.c.b16 %v427, %v425
      %v474 = vpack.c.b16 %v428, %v426
      %v475 = vpack.c.b16 %v431, %v429
      %v476 = vpack.c.b16 %v432, %v430
      %v477 = vpack.c.b16 %v435, %v433
      %v478 = vpack.c.b16 %v436, %v434
      %v479 = vpack.c.b16 %v439, %v437
      %v480 = vpack.c.b16 %v440, %v438
      %v481 = vpack.c.b16 %v443, %v441
      %v482 = vpack.c.b16 %v444, %v442
      %v483 = vpack.c.b16 %v447, %v445
      %v484 = vpack.c.b16 %v448, %v446
      %v485 = vpack.c.b16 %v451, %v449
      %v486 = vpack.c.b16 %v452, %v450
      %v487 = vpack.c.b16 %v455, %v453
      %v488 = vpack.c.b16 %v456, %v454
      %v553 = vunpack.c.l.b16 %v329
      %v554 = vunpack.c.l.b16 %v330
      %v555 = vunpack.c.l.b16 %v331
      %v556 = vunpack.c.l.b16 %v332
      %v557 = vunpack.c.l.b16 %v333
      %v558 = vunpack.c.l.b16 %v334
      %v559 = vunpack.c.l.b16 %v335
      %v560 = vunpack.c.l.b16 %v336
      %v561 = vunpack.c.l.b16 %v337
      %v562 = vunpack.c.l.b16 %v338
      %v563 = vunpack.c.l.b16 %v339
      %v564 = vunpack.c.l.b16 %v340
      %v565 = vunpack.c.l.b16 %v341
      %v566 = vunpack.c.l.b16 %v342
      %v567 = vunpack.c.l.b16 %v343
      %v568 = vunpack.c.l.b16 %v344
      %v569 = vunpack.c.l.b16 %v345
      %v570 = vunpack.c.l.b16 %v346
      %v571 = vunpack.c.l.b16 %v347
      %v572 = vunpack.c.l.b16 %v348
      %v573 = vunpack.c.l.b16 %v349
      %v574 = vunpack.c.l.b16 %v350
      %v575 = vunpack.c.l.b16 %v351
      %v576 = vunpack.c.l.b16 %v352
      %v577 = vunpack.c.l.b16 %v353
      %v578 = vunpack.c.l.b16 %v354
      %v579 = vunpack.c.l.b16 %v355
      %v580 = vunpack.c.l.b16 %v356
      %v581 = vunpack.c.l.b16 %v357
      %v582 = vunpack.c.l.b16 %v358
      %v583 = vunpack.c.l.b16 %v359
      %v584 = vunpack.c.l.b16 %v360
      %v585 = vpack.c.b16 %v554, %v553
      %v586 = vpack.c.b16 %v556, %v555
      %v587 = vpack.c.b16 %v558, %v557
      %v588 = vpack.c.b16 %v560, %v559
      %v589 = vpack.c.b16 %v562, %v561
      %v590 = vpack.c.b16 %v564, %v563
      %v591 = vpack.c.b16 %v566, %v565
      %v592 = vpack.c.b16 %v568, %v567
      %v593 = vpack.c.b16 %v570, %v569
      %v594 = vpack.c.b16 %v572, %v571
      %v595 = vpack.c.b16 %v574, %v573
      %v596 = vpack.c.b16 %v576, %v575
      %v597 = vpack.c.b16 %v578, %v577
      %v598 = vpack.c.b16 %v580, %v579
      %v599 = vpack.c.b16 %v582, %v581
      %v600 = vpack.c.b16 %v584, %v583
      %617 = vmatprep.subr.bf16.mxu0 0
      %618 = vmatpush1.bf16.msra.mxu0 %v592
      %619 = vmatprep.subr.bf16.mxu0 0
      %620 = vmatpush1.bf16.msra.mxu0 %v591
      %621 = vmatprep.subr.bf16.mxu0 0
      %622 = vmatpush1.bf16.msra.mxu0 %v590
      %623 = vmatprep.subr.bf16.mxu0 0
      %624 = vmatpush1.bf16.msra.mxu0 %v589
      %625 = vmatprep.subr.bf16.mxu0 0
      %626 = vmatpush1.bf16.msra.mxu0 %v588
      %627 = vmatprep.subr.bf16.mxu0 0
      %628 = vmatpush1.bf16.msra.mxu0 %v587
      %629 = vmatprep.subr.bf16.mxu0 0
      %630 = vmatpush1.bf16.msra.mxu0 %v586
      %631 = vmatprep.subr.bf16.mxu0 0
      %632 = vmatpush1.bf16.msra.mxu0 %v585
      %633 = vmatprep.subr.bf16.mxu0 0
      %634 = vmatpush2.bf16.msra.mxu0 %v600
      %635 = vmatprep.subr.bf16.mxu0 0
      %636 = vmatpush2.bf16.msra.mxu0 %v599
      %637 = vmatprep.subr.bf16.mxu0 0
      %638 = vmatpush2.bf16.msra.mxu0 %v598
      %639 = vmatprep.subr.bf16.mxu0 0
      %640 = vmatpush2.bf16.msra.mxu0 %v597
      %641 = vmatprep.subr.bf16.mxu0 0
      %642 = vmatpush2.bf16.msra.mxu0 %v596
      %643 = vmatprep.subr.bf16.mxu0 0
      %644 = vmatpush2.bf16.msra.mxu0 %v595
      %645 = vmatprep.subr.bf16.mxu0 0
      %646 = vmatpush2.bf16.msra.mxu0 %v594
      %647 = vmatprep.subr.bf16.mxu0 0
      %648 = vmatpush2.bf16.msra.mxu0 %v593
      %649 = vmatprep.mubr.bf16.mxu0 %v458
      %650 = vmatmul.mubr.bf16.gmra.mxu0 %v457
      %v651 = vpop.f32.mrf.mxu0
      %v652 = vadd.f32 0.0, %v651
      %v653 = vpop.f32.mrf.mxu0
      %v654 = vpop.f32.mrf.mxu0
      %v655 = vadd.f32 0.0, %v654
      %v656 = vpop.f32.mrf.mxu0
      %657 = vmatprep.mubr.bf16.mxu0 %v460
      %658 = vmatmul.mubr.bf16.gmra.mxu0 %v459
      %v659 = vpop.f32.mrf.mxu0
      %v660 = vadd.f32 0.0, %v659
      %v661 = vpop.f32.mrf.mxu0
      %v662 = vpop.f32.mrf.mxu0
      %v663 = vadd.f32 0.0, %v662
      %v664 = vpop.f32.mrf.mxu0
      %665 = vmatprep.mubr.bf16.mxu0 %v462
      %666 = vmatmul.mubr.bf16.gmra.mxu0 %v461
      %v667 = vpop.f32.mrf.mxu0
      %v668 = vadd.f32 0.0, %v667
      %v669 = vpop.f32.mrf.mxu0
      %v670 = vpop.f32.mrf.mxu0
      %v671 = vadd.f32 0.0, %v670
      %v672 = vpop.f32.mrf.mxu0
      %673 = vmatprep.mubr.bf16.mxu0 %v464
      %674 = vmatmul.mubr.bf16.gmra.mxu0 %v463
      %v675 = vpop.f32.mrf.mxu0
      %v676 = vadd.f32 0.0, %v675
      %v677 = vpop.f32.mrf.mxu0
      %v678 = vpop.f32.mrf.mxu0
      %v679 = vadd.f32 0.0, %v678
      %v680 = vpop.f32.mrf.mxu0
      %681 = vmatprep.mubr.bf16.mxu0 %v466
      %682 = vmatmul.mubr.bf16.gmra.mxu0 %v465
      %v683 = vpop.f32.mrf.mxu0
      %v684 = vadd.f32 0.0, %v683
      %v685 = vpop.f32.mrf.mxu0
      %v686 = vpop.f32.mrf.mxu0
      %v687 = vadd.f32 0.0, %v686
      %v688 = vpop.f32.mrf.mxu0
      %689 = vmatprep.mubr.bf16.mxu0 %v468
      %690 = vmatmul.mubr.bf16.gmra.mxu0 %v467
      %v691 = vpop.f32.mrf.mxu0
      %v692 = vadd.f32 0.0, %v691
      %v693 = vpop.f32.mrf.mxu0
      %v694 = vpop.f32.mrf.mxu0
      %v695 = vadd.f32 0.0, %v694
      %v696 = vpop.f32.mrf.mxu0
      %697 = vmatprep.mubr.bf16.mxu0 %v470
      %698 = vmatmul.mubr.bf16.gmra.mxu0 %v469
      %v699 = vpop.f32.mrf.mxu0
      %v700 = vadd.f32 0.0, %v699
      %v701 = vpop.f32.mrf.mxu0
      %v702 = vpop.f32.mrf.mxu0
      %v703 = vadd.f32 0.0, %v702
      %v704 = vpop.f32.mrf.mxu0
      %705 = vmatprep.mubr.bf16.mxu0 %v472
      %706 = vmatmul.mubr.bf16.gmra.mxu0 %v471
      %v707 = vpop.f32.mrf.mxu0
      %v708 = vadd.f32 0.0, %v707
      %v709 = vpop.f32.mrf.mxu0
      %v710 = vpop.f32.mrf.mxu0
      %v711 = vadd.f32 0.0, %v710
      %v712 = vpop.f32.mrf.mxu0
      %713 = vmatprep.mubr.bf16.mxu0 %v474
      %714 = vmatmul.mubr.bf16.gmra.mxu0 %v473
      %v715 = vpop.f32.mrf.mxu0
      %v716 = vadd.f32 0.0, %v715
      %v717 = vpop.f32.mrf.mxu0
      %v718 = vpop.f32.mrf.mxu0
      %v719 = vadd.f32 0.0, %v718
      %v720 = vpop.f32.mrf.mxu0
      %721 = vmatprep.mubr.bf16.mxu0 %v476
      %722 = vmatmul.mubr.bf16.gmra.mxu0 %v475
      %v723 = vpop.f32.mrf.mxu0
      %v724 = vadd.f32 0.0, %v723
      %v725 = vpop.f32.mrf.mxu0
      %v726 = vpop.f32.mrf.mxu0
      %v727 = vadd.f32 0.0, %v726
      %v728 = vpop.f32.mrf.mxu0
      %729 = vmatprep.mubr.bf16.mxu0 %v478
      %730 = vmatmul.mubr.bf16.gmra.mxu0 %v477
      %v731 = vpop.f32.mrf.mxu0
      %v732 = vadd.f32 0.0, %v731
      %v733 = vpop.f32.mrf.mxu0
      %v734 = vpop.f32.mrf.mxu0
      %v735 = vadd.f32 0.0, %v734
      %v736 = vpop.f32.mrf.mxu0
      %737 = vmatprep.mubr.bf16.mxu0 %v480
      %738 = vmatmul.mubr.bf16.gmra.mxu0 %v479
      %v739 = vpop.f32.mrf.mxu0
      %v740 = vadd.f32 0.0, %v739
      %v741 = vpop.f32.mrf.mxu0
      %v742 = vpop.f32.mrf.mxu0
      %v743 = vadd.f32 0.0, %v742
      %v744 = vpop.f32.mrf.mxu0
      %745 = vmatprep.mubr.bf16.mxu0 %v482
      %746 = vmatmul.mubr.bf16.gmra.mxu0 %v481
      %v747 = vpop.f32.mrf.mxu0
      %v748 = vadd.f32 0.0, %v747
      %v749 = vpop.f32.mrf.mxu0
      %v750 = vpop.f32.mrf.mxu0
      %v751 = vadd.f32 0.0, %v750
      %v752 = vpop.f32.mrf.mxu0
      %753 = vmatprep.mubr.bf16.mxu0 %v484
      %754 = vmatmul.mubr.bf16.gmra.mxu0 %v483
      %v755 = vpop.f32.mrf.mxu0
      %v756 = vadd.f32 0.0, %v755
      %v757 = vpop.f32.mrf.mxu0
      %v758 = vpop.f32.mrf.mxu0
      %v759 = vadd.f32 0.0, %v758
      %v760 = vpop.f32.mrf.mxu0
      %761 = vmatprep.mubr.bf16.mxu0 %v486
      %762 = vmatmul.mubr.bf16.gmra.mxu0 %v485
      %v763 = vpop.f32.mrf.mxu0
      %v764 = vadd.f32 0.0, %v763
      %v765 = vpop.f32.mrf.mxu0
      %v766 = vpop.f32.mrf.mxu0
      %v767 = vadd.f32 0.0, %v766
      %v768 = vpop.f32.mrf.mxu0
      %769 = vmatprep.mubr.bf16.mxu0 %v488
      %770 = vmatmul.mubr.bf16.gmra.mxu0 %v487
      %v771 = vpop.f32.mrf.mxu0
      %v772 = vadd.f32 0.0, %v771
      %v773 = vpop.f32.mrf.mxu0
      %v774 = vpop.f32.mrf.mxu0
      %v775 = vadd.f32 0.0, %v774
      %v776 = vpop.f32.mrf.mxu0
      %777 = vdwg.mxu0
      %v778 = vadd.f32 %v265, %v652
      %v779 = vadd.f32 %v266, %v655
      %v780 = vadd.f32 %v267, %v660
      %v781 = vadd.f32 %v268, %v663
      %v782 = vadd.f32 %v269, %v668
      %v783 = vadd.f32 %v270, %v671
      %v784 = vadd.f32 %v271, %v676
      %v785 = vadd.f32 %v272, %v679
      %v786 = vadd.f32 %v273, %v684
      %v787 = vadd.f32 %v274, %v687
      %v788 = vadd.f32 %v275, %v692
      %v789 = vadd.f32 %v276, %v695
      %v790 = vadd.f32 %v277, %v700
      %v791 = vadd.f32 %v278, %v703
      %v792 = vadd.f32 %v279, %v708
      %v793 = vadd.f32 %v280, %v711
      %v794 = vadd.f32 %v281, %v716
      %v795 = vadd.f32 %v282, %v719
      %v796 = vadd.f32 %v283, %v724
      %v797 = vadd.f32 %v284, %v727
      %v798 = vadd.f32 %v285, %v732
      %v799 = vadd.f32 %v286, %v735
      %v800 = vadd.f32 %v287, %v740
      %v801 = vadd.f32 %v288, %v743
      %v802 = vadd.f32 %v289, %v748
      %v803 = vadd.f32 %v290, %v751
      %v804 = vadd.f32 %v291, %v756
      %v805 = vadd.f32 %v292, %v759
      %v806 = vadd.f32 %v293, %v764
      %v807 = vadd.f32 %v294, %v767
      %v808 = vadd.f32 %v295, %v772
      %v809 = vadd.f32 %v296, %v775
      %vm810 = vcmask 130048
      %811 = vst.msk [vmem:[#allocation2] sm:$0xff] %vm810, %v778
      %812 = vst.msk [vmem:[#allocation2 + $0x8] sm:$0xff] %vm810, %v779
      %813 = vst.msk [vmem:[#allocation2 + $0x10] sm:$0xff] %vm810, %v780
      %814 = vst.msk [vmem:[#allocation2 + $0x18] sm:$0xff] %vm810, %v781
      %815 = vst.msk [vmem:[#allocation2 + $0x20] sm:$0xff] %vm810, %v782
      %816 = vst.msk [vmem:[#allocation2 + $0x28] sm:$0xff] %vm810, %v783
      %817 = vst.msk [vmem:[#allocation2 + $0x30] sm:$0xff] %vm810, %v784
      %818 = vst.msk [vmem:[#allocation2 + $0x38] sm:$0xff] %vm810, %v785
      %819 = vst.msk [vmem:[#allocation2 + $0x40] sm:$0xff] %vm810, %v786
      %820 = vst.msk [vmem:[#allocation2 + $0x48] sm:$0xff] %vm810, %v787
      %821 = vst.msk [vmem:[#allocation2 + $0x50] sm:$0xff] %vm810, %v788
      %822 = vst.msk [vmem:[#allocation2 + $0x58] sm:$0xff] %vm810, %v789
      %823 = vst.msk [vmem:[#allocation2 + $0x60] sm:$0xff] %vm810, %v790
      %824 = vst.msk [vmem:[#allocation2 + $0x68] sm:$0xff] %vm810, %v791
      %825 = vst.msk [vmem:[#allocation2 + $0x70] sm:$0xff] %vm810, %v792
      %826 = vst.msk [vmem:[#allocation2 + $0x78] sm:$0xff] %vm810, %v793
      %827 = vst.msk [vmem:[#allocation2 + $0x80] sm:$0xff] %vm810, %v794
      %828 = vst.msk [vmem:[#allocation2 + $0x88] sm:$0xff] %vm810, %v795
      %829 = vst.msk [vmem:[#allocation2 + $0x90] sm:$0xff] %vm810, %v796
      %830 = vst.msk [vmem:[#allocation2 + $0x98] sm:$0xff] %vm810, %v797
      %831 = vst.msk [vmem:[#allocation2 + $0xa0] sm:$0xff] %vm810, %v798
      %832 = vst.msk [vmem:[#allocation2 + $0xa8] sm:$0xff] %vm810, %v799
      %833 = vst.msk [vmem:[#allocation2 + $0xb0] sm:$0xff] %vm810, %v800
      %834 = vst.msk [vmem:[#allocation2 + $0xb8] sm:$0xff] %vm810, %v801
      %835 = vst.msk [vmem:[#allocation2 + $0xc0] sm:$0xff] %vm810, %v802
      %836 = vst.msk [vmem:[#allocation2 + $0xc8] sm:$0xff] %vm810, %v803
      %837 = vst.msk [vmem:[#allocation2 + $0xd0] sm:$0xff] %vm810, %v804
      %838 = vst.msk [vmem:[#allocation2 + $0xd8] sm:$0xff] %vm810, %v805
      %839 = vst.msk [vmem:[#allocation2 + $0xe0] sm:$0xff] %vm810, %v806
      %840 = vst.msk [vmem:[#allocation2 + $0xe8] sm:$0xff] %vm810, %v807
      %841 = vst.msk [vmem:[#allocation2 + $0xf0] sm:$0xff] %vm810, %v808
      %842 = vst.msk [vmem:[#allocation2 + $0xf8] sm:$0xff] %vm810, %v809
      // Predicated region
      $region37: #{_lambda_.5} parent=31 // pred_check
        %p843 = pneg %p228
      $region38: #{_lambda_.5} parent=31 // pred_check_branch
        %845 = sbr.rel (%p843) target = $region40
      $region39: #{_lambda_.5} parent=31 // pred_region
        %v846 = vld [vmem:[#allocation2] sm:$0xff]
        %v847 = vld [vmem:[#allocation2 + $0x8] sm:$0xff]
        %v848 = vld [vmem:[#allocation2 + $0x10] sm:$0xff]
        %v849 = vld [vmem:[#allocation2 + $0x18] sm:$0xff]
        %v850 = vld [vmem:[#allocation2 + $0x20] sm:$0xff]
        %v851 = vld [vmem:[#allocation2 + $0x28] sm:$0xff]
        %v852 = vld [vmem:[#allocation2 + $0x30] sm:$0xff]
        %v853 = vld [vmem:[#allocation2 + $0x38] sm:$0xff]
        %v854 = vld [vmem:[#allocation2 + $0x40] sm:$0xff]
        %v855 = vld [vmem:[#allocation2 + $0x48] sm:$0xff]
        %v856 = vld [vmem:[#allocation2 + $0x50] sm:$0xff]
        %v857 = vld [vmem:[#allocation2 + $0x58] sm:$0xff]
        %v858 = vld [vmem:[#allocation2 + $0x60] sm:$0xff]
        %v859 = vld [vmem:[#allocation2 + $0x68] sm:$0xff]
        %v860 = vld [vmem:[#allocation2 + $0x70] sm:$0xff]
        %v861 = vld [vmem:[#allocation2 + $0x78] sm:$0xff]
        %v862 = vld [vmem:[#allocation2 + $0x80] sm:$0xff]
        %v863 = vld [vmem:[#allocation2 + $0x88] sm:$0xff]
        %v864 = vld [vmem:[#allocation2 + $0x90] sm:$0xff]
        %v865 = vld [vmem:[#allocation2 + $0x98] sm:$0xff]
        %v866 = vld [vmem:[#allocation2 + $0xa0] sm:$0xff]
        %v867 = vld [vmem:[#allocation2 + $0xa8] sm:$0xff]
        %v868 = vld [vmem:[#allocation2 + $0xb0] sm:$0xff]
        %v869 = vld [vmem:[#allocation2 + $0xb8] sm:$0xff]
        %v870 = vld [vmem:[#allocation2 + $0xc0] sm:$0xff]
        %v871 = vld [vmem:[#allocation2 + $0xc8] sm:$0xff]
        %v872 = vld [vmem:[#allocation2 + $0xd0] sm:$0xff]
        %v873 = vld [vmem:[#allocation2 + $0xd8] sm:$0xff]
        %v874 = vld [vmem:[#allocation2 + $0xe0] sm:$0xff]
        %v875 = vld [vmem:[#allocation2 + $0xe8] sm:$0xff]
        %v876 = vld [vmem:[#allocation2 + $0xf0] sm:$0xff]
        %v877 = vld [vmem:[#allocation2 + $0xf8] sm:$0xff]
        %v878 = vld [vmem:[%s2] sm:$0x1]
        %v880 = vlaneseq
        %v881 = vshrl.u32 %v880, 7
        %v882 = vsub.s32 0, %v881
        %v883 = vrot.slane %v878, %v882
        %v885 = vadd.f32 %v846, %v883
        %v886 = vadd.f32 %v847, %v883
        %v887 = vadd.f32 %v848, %v883
        %v888 = vadd.f32 %v849, %v883
        %v889 = vadd.f32 %v850, %v883
        %v890 = vadd.f32 %v851, %v883
        %v891 = vadd.f32 %v852, %v883
        %v892 = vadd.f32 %v853, %v883
        %v893 = vadd.f32 %v854, %v883
        %v894 = vadd.f32 %v855, %v883
        %v895 = vadd.f32 %v856, %v883
        %v896 = vadd.f32 %v857, %v883
        %v897 = vadd.f32 %v858, %v883
        %v898 = vadd.f32 %v859, %v883
        %v899 = vadd.f32 %v860, %v883
        %v900 = vadd.f32 %v861, %v883
        %v901 = vadd.f32 %v862, %v883
        %v902 = vadd.f32 %v863, %v883
        %v903 = vadd.f32 %v864, %v883
        %v904 = vadd.f32 %v865, %v883
        %v905 = vadd.f32 %v866, %v883
        %v906 = vadd.f32 %v867, %v883
        %v907 = vadd.f32 %v868, %v883
        %v908 = vadd.f32 %v869, %v883
        %v909 = vadd.f32 %v870, %v883
        %v910 = vadd.f32 %v871, %v883
        %v911 = vadd.f32 %v872, %v883
        %v912 = vadd.f32 %v873, %v883
        %v913 = vadd.f32 %v874, %v883
        %v914 = vadd.f32 %v875, %v883
        %v915 = vadd.f32 %v876, %v883
        %v916 = vadd.f32 %v877, %v883
        %vm917 = vcmp.ge.f32.partialorder %v885, 0.0
        %vm918 = vcmp.ge.f32.partialorder %v886, 0.0
        %vm919 = vcmp.ge.f32.partialorder %v887, 0.0
        %vm920 = vcmp.ge.f32.partialorder %v888, 0.0
        %vm921 = vcmp.ge.f32.partialorder %v889, 0.0
        %vm922 = vcmp.ge.f32.partialorder %v890, 0.0
        %vm923 = vcmp.ge.f32.partialorder %v891, 0.0
        %vm924 = vcmp.ge.f32.partialorder %v892, 0.0
        %vm925 = vcmp.ge.f32.partialorder %v893, 0.0
        %vm926 = vcmp.ge.f32.partialorder %v894, 0.0
        %vm927 = vcmp.ge.f32.partialorder %v895, 0.0
        %vm928 = vcmp.ge.f32.partialorder %v896, 0.0
        %vm929 = vcmp.ge.f32.partialorder %v897, 0.0
        %vm930 = vcmp.ge.f32.partialorder %v898, 0.0
        %vm931 = vcmp.ge.f32.partialorder %v899, 0.0
        %vm932 = vcmp.ge.f32.partialorder %v900, 0.0
        %vm933 = vcmp.ge.f32.partialorder %v901, 0.0
        %vm934 = vcmp.ge.f32.partialorder %v902, 0.0
        %vm935 = vcmp.ge.f32.partialorder %v903, 0.0
        %vm936 = vcmp.ge.f32.partialorder %v904, 0.0
        %vm937 = vcmp.ge.f32.partialorder %v905, 0.0
        %vm938 = vcmp.ge.f32.partialorder %v906, 0.0
        %vm939 = vcmp.ge.f32.partialorder %v907, 0.0
        %vm940 = vcmp.ge.f32.partialorder %v908, 0.0
        %vm941 = vcmp.ge.f32.partialorder %v909, 0.0
        %vm942 = vcmp.ge.f32.partialorder %v910, 0.0
        %vm943 = vcmp.ge.f32.partialorder %v911, 0.0
        %vm944 = vcmp.ge.f32.partialorder %v912, 0.0
        %vm945 = vcmp.ge.f32.partialorder %v913, 0.0
        %vm946 = vcmp.ge.f32.partialorder %v914, 0.0
        %vm947 = vcmp.ge.f32.partialorder %v915, 0.0
        %vm948 = vcmp.ge.f32.partialorder %v916, 0.0
        %v949 = vmul.f32 %v885, 0.2
        %v950 = vmul.f32 %v886, 0.2
        %v951 = vmul.f32 %v887, 0.2
        %v952 = vmul.f32 %v888, 0.2
        %v953 = vmul.f32 %v889, 0.2
        %v954 = vmul.f32 %v890, 0.2
        %v955 = vmul.f32 %v891, 0.2
        %v956 = vmul.f32 %v892, 0.2
        %v957 = vmul.f32 %v893, 0.2
        %v958 = vmul.f32 %v894, 0.2
        %v959 = vmul.f32 %v895, 0.2
        %v960 = vmul.f32 %v896, 0.2
        %v961 = vmul.f32 %v897, 0.2
        %v962 = vmul.f32 %v898, 0.2
        %v963 = vmul.f32 %v899, 0.2
        %v964 = vmul.f32 %v900, 0.2
        %v965 = vmul.f32 %v901, 0.2
        %v966 = vmul.f32 %v902, 0.2
        %v967 = vmul.f32 %v903, 0.2
        %v968 = vmul.f32 %v904, 0.2
        %v969 = vmul.f32 %v905, 0.2
        %v970 = vmul.f32 %v906, 0.2
        %v971 = vmul.f32 %v907, 0.2
        %v972 = vmul.f32 %v908, 0.2
        %v973 = vmul.f32 %v909, 0.2
        %v974 = vmul.f32 %v910, 0.2
        %v975 = vmul.f32 %v911, 0.2
        %v976 = vmul.f32 %v912, 0.2
        %v977 = vmul.f32 %v913, 0.2
        %v978 = vmul.f32 %v914, 0.2
        %v979 = vmul.f32 %v915, 0.2
        %v980 = vmul.f32 %v916, 0.2
        %v981 = vsel %vm917, %v885, %v949
        %v982 = vsel %vm918, %v886, %v950
        %v983 = vsel %vm919, %v887, %v951
        %v984 = vsel %vm920, %v888, %v952
        %v985 = vsel %vm921, %v889, %v953
        %v986 = vsel %vm922, %v890, %v954
        %v987 = vsel %vm923, %v891, %v955
        %v988 = vsel %vm924, %v892, %v956
        %v989 = vsel %vm925, %v893, %v957
        %v990 = vsel %vm926, %v894, %v958
        %v991 = vsel %vm927, %v895, %v959
        %v992 = vsel %vm928, %v896, %v960
        %v993 = vsel %vm929, %v897, %v961
        %v994 = vsel %vm930, %v898, %v962
        %v995 = vsel %vm931, %v899, %v963
        %v996 = vsel %vm932, %v900, %v964
        %v997 = vsel %vm933, %v901, %v965
        %v998 = vsel %vm934, %v902, %v966
        %v999 = vsel %vm935, %v903, %v967
        %v1000 = vsel %vm936, %v904, %v968
        %v1001 = vsel %vm937, %v905, %v969
        %v1002 = vsel %vm938, %v906, %v970
        %v1003 = vsel %vm939, %v907, %v971
        %v1004 = vsel %vm940, %v908, %v972
        %v1005 = vsel %vm941, %v909, %v973
        %v1006 = vsel %vm942, %v910, %v974
        %v1007 = vsel %vm943, %v911, %v975
        %v1008 = vsel %vm944, %v912, %v976
        %v1009 = vsel %vm945, %v913, %v977
        %v1010 = vsel %vm946, %v914, %v978
        %v1011 = vsel %vm947, %v915, %v979
        %v1012 = vsel %vm948, %v916, %v980
        %v1013 = vpack.c.bf16 %v982, %v981
        %v1014 = vpack.c.bf16 %v984, %v983
        %v1015 = vpack.c.bf16 %v986, %v985
        %v1016 = vpack.c.bf16 %v988, %v987
        %v1017 = vpack.c.bf16 %v990, %v989
        %v1018 = vpack.c.bf16 %v992, %v991
        %v1019 = vpack.c.bf16 %v994, %v993
        %v1020 = vpack.c.bf16 %v996, %v995
        %v1021 = vpack.c.bf16 %v998, %v997
        %v1022 = vpack.c.bf16 %v1000, %v999
        %v1023 = vpack.c.bf16 %v1002, %v1001
        %v1024 = vpack.c.bf16 %v1004, %v1003
        %v1025 = vpack.c.bf16 %v1006, %v1005
        %v1026 = vpack.c.bf16 %v1008, %v1007
        %v1027 = vpack.c.bf16 %v1010, %v1009
        %v1028 = vpack.c.bf16 %v1012, %v1011
        %v1045 = vunpack.c.l.b16 %v1013
        %v1046 = vunpack.c.h.b16 %v1013
        %v1047 = vunpack.c.l.b16 %v1014
        %v1048 = vunpack.c.h.b16 %v1014
        %v1049 = vunpack.c.l.b16 %v1015
        %v1050 = vunpack.c.h.b16 %v1015
        %v1051 = vunpack.c.l.b16 %v1016
        %v1052 = vunpack.c.h.b16 %v1016
        %v1053 = vunpack.c.l.b16 %v1017
        %v1054 = vunpack.c.h.b16 %v1017
        %v1055 = vunpack.c.l.b16 %v1018
        %v1056 = vunpack.c.h.b16 %v1018
        %v1057 = vunpack.c.l.b16 %v1019
        %v1058 = vunpack.c.h.b16 %v1019
        %v1059 = vunpack.c.l.b16 %v1020
        %v1060 = vunpack.c.h.b16 %v1020
        %v1061 = vunpack.c.l.b16 %v1021
        %v1062 = vunpack.c.h.b16 %v1021
        %v1063 = vunpack.c.l.b16 %v1022
        %v1064 = vunpack.c.h.b16 %v1022
        %v1065 = vunpack.c.l.b16 %v1023
        %v1066 = vunpack.c.h.b16 %v1023
        %v1067 = vunpack.c.l.b16 %v1024
        %v1068 = vunpack.c.h.b16 %v1024
        %v1069 = vunpack.c.l.b16 %v1025
        %v1070 = vunpack.c.h.b16 %v1025
        %v1071 = vunpack.c.l.b16 %v1026
        %v1072 = vunpack.c.h.b16 %v1026
        %v1073 = vunpack.c.l.b16 %v1027
        %v1074 = vunpack.c.h.b16 %v1027
        %v1075 = vunpack.c.l.b16 %v1028
        %v1076 = vunpack.c.h.b16 %v1028
        %v1077 = vpack.c.b16 %v1045, %v1045
        %v1078 = vpack.c.b16 %v1046, %v1046
        %v1079 = vpack.c.b16 %v1047, %v1047
        %v1080 = vpack.c.b16 %v1048, %v1048
        %v1081 = vpack.c.b16 %v1049, %v1049
        %v1082 = vpack.c.b16 %v1050, %v1050
        %v1083 = vpack.c.b16 %v1051, %v1051
        %v1084 = vpack.c.b16 %v1052, %v1052
        %v1085 = vpack.c.b16 %v1053, %v1053
        %v1086 = vpack.c.b16 %v1054, %v1054
        %v1087 = vpack.c.b16 %v1055, %v1055
        %v1088 = vpack.c.b16 %v1056, %v1056
        %v1089 = vpack.c.b16 %v1057, %v1057
        %v1090 = vpack.c.b16 %v1058, %v1058
        %v1091 = vpack.c.b16 %v1059, %v1059
        %v1092 = vpack.c.b16 %v1060, %v1060
        %v1093 = vpack.c.b16 %v1061, %v1061
        %v1094 = vpack.c.b16 %v1062, %v1062
        %v1095 = vpack.c.b16 %v1063, %v1063
        %v1096 = vpack.c.b16 %v1064, %v1064
        %v1097 = vpack.c.b16 %v1065, %v1065
        %v1098 = vpack.c.b16 %v1066, %v1066
        %v1099 = vpack.c.b16 %v1067, %v1067
        %v1100 = vpack.c.b16 %v1068, %v1068
        %v1101 = vpack.c.b16 %v1069, %v1069
        %v1102 = vpack.c.b16 %v1070, %v1070
        %v1103 = vpack.c.b16 %v1071, %v1071
        %v1104 = vpack.c.b16 %v1072, %v1072
        %v1105 = vpack.c.b16 %v1073, %v1073
        %v1106 = vpack.c.b16 %v1074, %v1074
        %v1107 = vpack.c.b16 %v1075, %v1075
        %v1108 = vpack.c.b16 %v1076, %v1076
        %vm1141 = vcmask 125952
        %1142 = vst.msk [vmem:[%s225] sm:$0xf] %vm1141, %v1077
        %1143 = vst.msk [vmem:[%s225 + $0x4] sm:$0xf] %vm1141, %v1078
        %1144 = vst.msk [vmem:[%s225 + $0x8] sm:$0xf] %vm1141, %v1079
        %1145 = vst.msk [vmem:[%s225 + $0xc] sm:$0xf] %vm1141, %v1080
        %1146 = vst.msk [vmem:[%s225 + $0x10] sm:$0xf] %vm1141, %v1081
        %1147 = vst.msk [vmem:[%s225 + $0x14] sm:$0xf] %vm1141, %v1082
        %1148 = vst.msk [vmem:[%s225 + $0x18] sm:$0xf] %vm1141, %v1083
        %1149 = vst.msk [vmem:[%s225 + $0x1c] sm:$0xf] %vm1141, %v1084
        %1150 = vst.msk [vmem:[%s225 + $0x20] sm:$0xf] %vm1141, %v1085
        %1151 = vst.msk [vmem:[%s225 + $0x24] sm:$0xf] %vm1141, %v1086
        %1152 = vst.msk [vmem:[%s225 + $0x28] sm:$0xf] %vm1141, %v1087
        %1153 = vst.msk [vmem:[%s225 + $0x2c] sm:$0xf] %vm1141, %v1088
        %1154 = vst.msk [vmem:[%s225 + $0x30] sm:$0xf] %vm1141, %v1089
        %1155 = vst.msk [vmem:[%s225 + $0x34] sm:$0xf] %vm1141, %v1090
        %1156 = vst.msk [vmem:[%s225 + $0x38] sm:$0xf] %vm1141, %v1091
        %1157 = vst.msk [vmem:[%s225 + $0x3c] sm:$0xf] %vm1141, %v1092
        %1158 = vst.msk [vmem:[%s225 + $0x40] sm:$0xf] %vm1141, %v1093
        %1159 = vst.msk [vmem:[%s225 + $0x44] sm:$0xf] %vm1141, %v1094
        %1160 = vst.msk [vmem:[%s225 + $0x48] sm:$0xf] %vm1141, %v1095
        %1161 = vst.msk [vmem:[%s225 + $0x4c] sm:$0xf] %vm1141, %v1096
        %1162 = vst.msk [vmem:[%s225 + $0x50] sm:$0xf] %vm1141, %v1097
        %1163 = vst.msk [vmem:[%s225 + $0x54] sm:$0xf] %vm1141, %v1098
        %1164 = vst.msk [vmem:[%s225 + $0x58] sm:$0xf] %vm1141, %v1099
        %1165 = vst.msk [vmem:[%s225 + $0x5c] sm:$0xf] %vm1141, %v1100
        %1166 = vst.msk [vmem:[%s225 + $0x60] sm:$0xf] %vm1141, %v1101
        %1167 = vst.msk [vmem:[%s225 + $0x64] sm:$0xf] %vm1141, %v1102
        %1168 = vst.msk [vmem:[%s225 + $0x68] sm:$0xf] %vm1141, %v1103
        %1169 = vst.msk [vmem:[%s225 + $0x6c] sm:$0xf] %vm1141, %v1104
        %1170 = vst.msk [vmem:[%s225 + $0x70] sm:$0xf] %vm1141, %v1105
        %1171 = vst.msk [vmem:[%s225 + $0x74] sm:$0xf] %vm1141, %v1106
        %1172 = vst.msk [vmem:[%s225 + $0x78] sm:$0xf] %vm1141, %v1107
        %1173 = vst.msk [vmem:[%s225 + $0x7c] sm:$0xf] %vm1141, %v1108
      $region40: #{_lambda_.5} parent=31 // pred_fallthru
        _
      %s1174 = smul.u32 32, %s18
      %p1175 = scmp.lt.s32.totalorder %s1174, 63
      %s1176 = scalar_select %p1175, %s1174, 63
      %s1177 = smul.addr %s1176, 4
      %s1178 = scalar_lea.vmem %s3, %s1177
      // Predicated region
      $region41: #{_lambda_.5} parent=31 // pred_check
        %p1179 = pneg %p119
      $region42: #{_lambda_.5} parent=31 // pred_check_branch
        %1181 = sbr.rel (%p1179) target = $region44
      $region43: #{_lambda_.5} parent=31 // pred_region
        %s1182 = smul.u32 32, %s18
      $region44: #{_lambda_.5} parent=31 // pred_fallthru
        _
    $region32: #{_lambda_.5} parent=5 // pred_fallthru
      _
    %p1183 = scmp.le.s32.totalorder 2, %s9
    // Predicated region
    $region45: #{_lambda_.5} parent=5 // pred_check
      %p1184 = pneg %p1183
    $region46: #{_lambda_.5} parent=5 // pred_check_branch
      %1186 = sbr.rel (%p1184) target = $region48
    $region47: #{_lambda_.5} parent=5 // pred_region
      %s1187 = ssub.s32 %s9, 2
      // Predicated region
      $region49: #{_lambda_.5} parent=47 // pred_check
        %p1188 = pneg %p125
      $region50: #{_lambda_.5} parent=47 // pred_check_branch
        %1190 = sbr.rel (%p1188) target = $region52
      $region51: #{_lambda_.5} parent=47 // pred_region
        %s1191 = smul.u32 32, %s20
        %p1192 = scmp.lt.s32.totalorder %s1191, 63
        %s1193 = scalar_select %p1192, %s1191, 63
        %s1194 = smul.addr %s1193, 4
        %s1195 = scalar_lea.vmem %s3, %s1194
      $region52: #{_lambda_.5} parent=47 // pred_fallthru
        _
    $region48: #{_lambda_.5} parent=5 // pred_fallthru
      _
  $region6: #{_lambda_.5} parent=0 // loop_footer
    %s13 = sadd.s32 1, %s9
  $region7: #{_lambda_.5} parent=0 // loop_footer_branch
    %8 = sbr.rel target = $region3
  $region8: #{_lambda_.5} parent=0 // loop_exit
    _

// kernel: _lambda_.6
$region0: #{_lambda_.6}
  #allocation0 [shape = 'u32[]', space=smem, size = 0x4, offset = 0x4, fixed_abs, tag = 'smem constant byte address 0x4 - core index']
  #allocation1 [shape = 'u32[144,128]{1,0:T(1,128)}', space=vmem, size = 0x12000, scoped, tag = 'internal scratch']
  #allocation2 [shape = 'f32[64,32]{1,0:T(8,128)}', space=vmem, size = 0x8000, scoped, tag = 'scratch operand']
  %s0 = inlined_call_operand.vmem [shape: bf16[128,512], index: 0, kind: input, shape index: {}]
  %s1 = inlined_call_operand.vmem [shape: bf16[512,32], index: 1, kind: input, shape index: {}]
  %s2 = inlined_call_operand.vmem [shape: f32[1,32], index: 2, kind: input, shape index: {}]
  %s3 = inlined_call_operand.vmem [shape: bf16[128,32], index: 3, kind: output, shape index: {}]
  %s4 = sld [smem:[#allocation0]]
  $region53: #{_lambda_.6} parent=0
    _
  %s6 = ssub.s32 1, %s4
  %s7 = scalar_select 0, %s6, %s4
  loop: start=0, step=1, limit=4
  $region2: #{_lambda_.6} parent=0 // loop_pre_header
    _
  $region3: #{_lambda_.6} parent=0 // loop_header
    %s9 = sphi 0, %s13
    %p10 = scmp.ge.s32.totalorder %s9, 4
    %s16 = sphi 0, %s28
    %s17 = sphi 0, %s24
    %s18 = sphi 0, %s16
    %s19 = sphi 0, %s17
    %s20 = sphi 0, %s18
    %s21 = sphi 0, %s19
    %s33 = sphi 0, %s35
    %s36 = sphi 0, %s33
    %s37 = sphi 0, %s36
    %s53 = sphi 0, %s37
    %s59 = sphi 0, %s61
    %s62 = sphi 0, %s59
    %s63 = sphi 0, %s62
    %s79 = sphi 0, %s63
    %s83 = sphi 0, %s83
    %s85 = sphi 0, %s83
    %s86 = sphi 0, %s85
    %s100 = sphi 0, %s86
    %s106 = sphi 0, %s108
    %s109 = sphi 0, %s106
    %s110 = sphi 0, %s109
    %s126 = sphi 0, %s110
  $region4: #{_lambda_.6} parent=0 // loop_header_branch
    %12 = sbr.rel (%p10) target = $region8
  $region5: #{_lambda_.6} parent=0 // loop_body
    %s14 = ssub.s32 %s9, 1
    %s15 = ssub.s32 %s9, 2
    %s22 = sadd.s32 1, %s17
    %p23 = scmp.ge.s32.totalorder %s22, 1
    %s24 = scalar_select %p23, 0, %s22
    %s25 = sadd.s32 1, %s16
    %s26 = scalar_select %p23, %s25, %s16
    %p27 = scmp.ge.s32.totalorder %s26, 2
    %s28 = scalar_select %p27, 0, %s26
    %s29 = ssub.s32 %s16, %s28
    %s30 = ssub.s32 %s17, %s24
    %s31 = sor.u32 %s29, %s30
    %p32 = scmp.eq.s32.totalorder %s31, 0
    %s34 = sadd.s32 %s33, 1
    %s35 = scalar_select %p32, %s33, %s34
    %p38 = pneg %p32
    %p39 = scmp.eq.s32.totalorder %s9, 1
    %p40 = por %p38, %p39
    %p41 = scmp.ne.s32.totalorder %s33, %s36
    %p42 = scmp.eq.s32.totalorder %s9, 0
    %p43 = por %p41, %p42
    %p44 = scmp.ne.s32.totalorder %s33, %s36
    %p45 = scmp.eq.s32.totalorder %s14, 1
    %p46 = por %p44, %p45
    %p47 = scmp.ne.s32.totalorder %s36, %s37
    %p48 = scmp.eq.s32.totalorder %s14, 0
    %p49 = por %p47, %p48
    %p50 = scmp.ne.s32.totalorder %s36, %s37
    %p51 = scmp.eq.s32.totalorder %s15, 1
    %p52 = por %p50, %p51
    %p54 = scmp.ne.s32.totalorder %s37, %s53
    %p55 = scmp.eq.s32.totalorder %s15, 0
    %p56 = por %p54, %p55
    %s57 = ssub.s32 %s17, %s24
    %p58 = scmp.eq.s32.totalorder %s57, 0
    %s60 = sadd.s32 %s59, 1
    %s61 = scalar_select %p58, %s59, %s60
    %p64 = pneg %p58
    %p65 = scmp.eq.s32.totalorder %s9, 1
    %p66 = por %p64, %p65
    %p67 = scmp.ne.s32.totalorder %s59, %s62
    %p68 = scmp.eq.s32.totalorder %s9, 0
    %p69 = por %p67, %p68
    %p70 = scmp.ne.s32.totalorder %s59, %s62
    %p71 = scmp.eq.s32.totalorder %s14, 1
    %p72 = por %p70, %p71
    %p73 = scmp.ne.s32.totalorder %s62, %s63
    %p74 = scmp.eq.s32.totalorder %s14, 0
    %p75 = por %p73, %p74
    %p76 = scmp.ne.s32.totalorder %s62, %s63
    %p77 = scmp.eq.s32.totalorder %s15, 1
    %p78 = por %p76, %p77
    %p80 = scmp.ne.s32.totalorder %s63, %s79
    %p81 = scmp.eq.s32.totalorder %s15, 0
    %p82 = por %p80, %p81
    %s84 = sadd.s32 %s83, 1
    %p87 = scmp.eq.s32.totalorder %s9, 1
    %p88 = scmp.ne.s32.totalorder %s83, %s85
    %p89 = scmp.eq.s32.totalorder %s9, 0
    %p90 = por %p88, %p89
    %p91 = scmp.ne.s32.totalorder %s83, %s85
    %p92 = scmp.eq.s32.totalorder %s14, 1
    %p93 = por %p91, %p92
    %p94 = scmp.ne.s32.totalorder %s85, %s86
    %p95 = scmp.eq.s32.totalorder %s14, 0
    %p96 = por %p94, %p95
    %p97 = scmp.ne.s32.totalorder %s85, %s86
    %p98 = scmp.eq.s32.totalorder %s15, 1
    %p99 = por %p97, %p98
    %p101 = scmp.ne.s32.totalorder %s86, %s100
    %p102 = scmp.eq.s32.totalorder %s15, 0
    %p103 = por %p101, %p102
    %s104 = ssub.s32 %s16, %s28
    %p105 = scmp.eq.s32.totalorder %s104, 0
    %s107 = sadd.s32 %s106, 1
    %s108 = scalar_select %p105, %s106, %s107
    %p111 = pneg %p105
    %p112 = scmp.eq.s32.totalorder %s9, 1
    %p113 = por %p111, %p112
    %p114 = scmp.ne.s32.totalorder %s106, %s109
    %p115 = scmp.eq.s32.totalorder %s9, 0
    %p116 = por %p114, %p115
    %p117 = scmp.ne.s32.totalorder %s106, %s109
    %p118 = scmp.eq.s32.totalorder %s14, 1
    %p119 = por %p117, %p118
    %p120 = scmp.ne.s32.totalorder %s109, %s110
    %p121 = scmp.eq.s32.totalorder %s14, 0
    %p122 = por %p120, %p121
    %p123 = scmp.ne.s32.totalorder %s109, %s110
    %p124 = scmp.eq.s32.totalorder %s15, 1
    %p125 = por %p123, %p124
    %p127 = scmp.ne.s32.totalorder %s110, %s126
    %p128 = scmp.eq.s32.totalorder %s15, 0
    %p129 = por %p127, %p128
    %p130 = scmp.le.s32.totalorder 1, %s9
    %p131 = scmp.lt.s32.totalorder %s9, 3
    %p132 = pnand %p130, %p131
    %p133 = pneg %p132
    // Predicated region
    $region9: #{_lambda_.6} parent=5 // pred_check
      _
    $region10: #{_lambda_.6} parent=5 // pred_check_branch
      %135 = sbr.rel (%p132) target = $region12
    $region11: #{_lambda_.6} parent=5 // pred_region
      %s136 = ssub.s32 %s9, 1
      // Predicated region
      $region13: #{_lambda_.6} parent=11 // pred_check
        %p137 = pneg %p75
      $region14: #{_lambda_.6} parent=11 // pred_check_branch
        %139 = sbr.rel (%p137) target = $region16
      $region15: #{_lambda_.6} parent=11 // pred_region
        %s140 = smul.u32 64, %s19
        %p141 = scmp.lt.s32.totalorder %s140, 63
        %s142 = scalar_select %p141, %s140, 63
        %s143 = smul.addr %s142, 4
        %s144 = scalar_lea.vmem %s1, %s143
        %s145 = smul.u32 64, %s19
      $region16: #{_lambda_.6} parent=11 // pred_fallthru
        _
      // Predicated region
      $region17: #{_lambda_.6} parent=11 // pred_check
        %p146 = pneg %p96
      $region18: #{_lambda_.6} parent=11 // pred_check_branch
        %148 = sbr.rel (%p146) target = $region20
      $region19: #{_lambda_.6} parent=11 // pred_region
        _
      $region20: #{_lambda_.6} parent=11 // pred_fallthru
        _
    $region12: #{_lambda_.6} parent=5 // pred_fallthru
      _
    %p149 = scmp.lt.s32.totalorder %s9, 2
    // Predicated region
    $region21: #{_lambda_.6} parent=5 // pred_check
      %p150 = pneg %p149
    $region22: #{_lambda_.6} parent=5 // pred_check_branch
      %152 = sbr.rel (%p150) target = $region24
    $region23: #{_lambda_.6} parent=5 // pred_region
      // Predicated region
      $region25: #{_lambda_.6} parent=23 // pred_check
        %p153 = pneg %p43
      $region26: #{_lambda_.6} parent=23 // pred_check_branch
        %155 = sbr.rel (%p153) target = $region28
      $region27: #{_lambda_.6} parent=23 // pred_region
        %s156 = smul.u32 8, %s16
        %s157 = smul.u32 4, %s17
        %p158 = scmp.lt.s32.totalorder %s156, 15
        %s159 = scalar_select %p158, %s156, 15
        %p160 = scmp.lt.s32.totalorder %s157, 3
        %s161 = scalar_select %p160, %s157, 3
        %s162 = smul.addr %s159, 4
        %s163 = sadd.s32 %s161, %s162
        %s164 = smul.addr %s163, 4
        %s165 = scalar_lea.vmem %s0, %s164
        %s166 = smul.u32 8, %s16
        %s167 = smul.u32 4, %s17
      $region28: #{_lambda_.6} parent=23 // pred_fallthru
        _
    $region24: #{_lambda_.6} parent=5 // pred_fallthru
      _
    %p168 = scmp.le.s32.totalorder 1, %s9
    %p169 = scmp.lt.s32.totalorder %s9, 3
    %p170 = pnand %p168, %p169
    %p171 = pneg %p170
    // Predicated region
    $region29: #{_lambda_.6} parent=5 // pred_check
      _
    $region30: #{_lambda_.6} parent=5 // pred_check_branch
      %173 = sbr.rel (%p170) target = $region32
    $region31: #{_lambda_.6} parent=5 // pred_region
      %s174 = ssub.s32 %s9, 1
      %s175 = smul.u32 8, %s18
      %s176 = smul.u32 4, %s19
      %p177 = scmp.lt.s32.totalorder %s175, 15
      %s178 = scalar_select %p177, %s175, 15
      %p179 = scmp.lt.s32.totalorder %s176, 3
      %s180 = scalar_select %p179, %s176, 3
      %s181 = smul.addr %s178, 4
      %s182 = sadd.s32 %s180, %s181
      %s183 = smul.addr %s182, 4
      %s184 = scalar_lea.vmem %s0, %s183
      %p185 = pneg %p49
      %p186 = pneg %p46
      %s187 = smul.u32 64, %s19
      %p188 = scmp.lt.s32.totalorder %s187, 63
      %s189 = scalar_select %p188, %s187, 63
      %s190 = smul.addr %s189, 4
      %s191 = scalar_lea.vmem %s1, %s190
      %p192 = pneg %p75
      %p193 = pneg %p72
      %p194 = pneg %p96
      %p195 = pneg %p93
      %p196 = pneg %p122
      %p197 = pneg %p119
      %s198 = smul.u32 8, %s18
      %p199 = scmp.lt.s32.totalorder %s198, 15
      %s200 = scalar_select %p199, %s198, 15
      %s201 = smul.addr %s200, 4
      %s202 = scalar_lea.vmem %s3, %s201
      %s203 = smul.u32 8, %s18
      %s204 = smul.u32 4, %s19
      %p205 = scmp.lt.s32.totalorder %s203, 15
      %s206 = scalar_select %p205, %s203, 15
      %p207 = scmp.lt.s32.totalorder %s204, 3
      %s208 = scalar_select %p207, %s204, 3
      %s209 = smul.addr %s206, 4
      %s210 = sadd.s32 %s208, %s209
      %s211 = smul.addr %s210, 4
      %s212 = scalar_lea.vmem %s0, %s211
      %s213 = smul.u32 8, %s18
      %s214 = smul.u32 4, %s19
      %s215 = smul.u32 64, %s19
      %p216 = scmp.lt.s32.totalorder %s215, 63
      %s217 = scalar_select %p216, %s215, 63
      %s218 = smul.addr %s217, 4
      %s219 = scalar_lea.vmem %s1, %s218
      %s220 = smul.u32 64, %s19
      %s221 = smul.u32 8, %s18
      %p222 = scmp.lt.s32.totalorder %s221, 15
      %s223 = scalar_select %p222, %s221, 15
      %s224 = smul.addr %s223, 4
      %s225 = scalar_lea.vmem %s3, %s224
      %s226 = smul.u32 8, %s18
      %p228 = scmp.eq.s32.totalorder %s19, 0
      // Predicated region
      $region33: #{_lambda_.6} parent=31 // pred_check
        %p229 = pneg %p228
      $region34: #{_lambda_.6} parent=31 // pred_check_branch
        %231 = sbr.rel (%p229) target = $region36
      $region35: #{_lambda_.6} parent=31 // pred_region
        %vm232 = vcmask 261120
        %233 = vst.msk [vmem:[#allocation2] sm:$0xff] %vm232, 0.0
        %234 = vst.msk [vmem:[#allocation2 + $0x8] sm:$0xff] %vm232, 0.0
        %235 = vst.msk [vmem:[#allocation2 + $0x10] sm:$0xff] %vm232, 0.0
        %236 = vst.msk [vmem:[#allocation2 + $0x18] sm:$0xff] %vm232, 0.0
        %237 = vst.msk [vmem:[#allocation2 + $0x20] sm:$0xff] %vm232, 0.0
        %238 = vst.msk [vmem:[#allocation2 + $0x28] sm:$0xff] %vm232, 0.0
        %239 = vst.msk [vmem:[#allocation2 + $0x30] sm:$0xff] %vm232, 0.0
        %240 = vst.msk [vmem:[#allocation2 + $0x38] sm:$0xff] %vm232, 0.0
      $region36: #{_lambda_.6} parent=31 // pred_fallthru
        _
      %v241 = vld [vmem:[#allocation2] sm:$0xff]
      %v242 = vld [vmem:[#allocation2 + $0x8] sm:$0xff]
      %v243 = vld [vmem:[#allocation2 + $0x10] sm:$0xff]
      %v244 = vld [vmem:[#allocation2 + $0x18] sm:$0xff]
      %v245 = vld [vmem:[#allocation2 + $0x20] sm:$0xff]
      %v246 = vld [vmem:[#allocation2 + $0x28] sm:$0xff]
      %v247 = vld [vmem:[#allocation2 + $0x30] sm:$0xff]
      %v248 = vld [vmem:[#allocation2 + $0x38] sm:$0xff]
      %v249 = vld [vmem:[%s212] sm:$0xff]
      %v250 = vld [vmem:[%s212 + $0x8] sm:$0xff]
      %v251 = vld [vmem:[%s212 + $0x10] sm:$0xff]
      %v252 = vld [vmem:[%s212 + $0x18] sm:$0xff]
      %v253 = vld [vmem:[%s212 + $0x20] sm:$0xff]
      %v254 = vld [vmem:[%s212 + $0x28] sm:$0xff]
      %v255 = vld [vmem:[%s212 + $0x30] sm:$0xff]
      %v256 = vld [vmem:[%s212 + $0x38] sm:$0xff]
      %v257 = vld [vmem:[%s212 + $0x40] sm:$0xff]
      %v258 = vld [vmem:[%s212 + $0x48] sm:$0xff]
      %v259 = vld [vmem:[%s212 + $0x50] sm:$0xff]
      %v260 = vld [vmem:[%s212 + $0x58] sm:$0xff]
      %v261 = vld [vmem:[%s212 + $0x60] sm:$0xff]
      %v262 = vld [vmem:[%s212 + $0x68] sm:$0xff]
      %v263 = vld [vmem:[%s212 + $0x70] sm:$0xff]
      %v264 = vld [vmem:[%s212 + $0x78] sm:$0xff]
      %v265 = vld [vmem:[%s219] sm:$0xf]
      %v266 = vld [vmem:[%s219 + $0x4] sm:$0xf]
      %v267 = vld [vmem:[%s219 + $0x8] sm:$0xf]
      %v268 = vld [vmem:[%s219 + $0xc] sm:$0xf]
      %v269 = vld [vmem:[%s219 + $0x10] sm:$0xf]
      %v270 = vld [vmem:[%s219 + $0x14] sm:$0xf]
      %v271 = vld [vmem:[%s219 + $0x18] sm:$0xf]
      %v272 = vld [vmem:[%s219 + $0x1c] sm:$0xf]
      %v273 = vld [vmem:[%s219 + $0x20] sm:$0xf]
      %v274 = vld [vmem:[%s219 + $0x24] sm:$0xf]
      %v275 = vld [vmem:[%s219 + $0x28] sm:$0xf]
      %v276 = vld [vmem:[%s219 + $0x2c] sm:$0xf]
      %v277 = vld [vmem:[%s219 + $0x30] sm:$0xf]
      %v278 = vld [vmem:[%s219 + $0x34] sm:$0xf]
      %v279 = vld [vmem:[%s219 + $0x38] sm:$0xf]
      %v280 = vld [vmem:[%s219 + $0x3c] sm:$0xf]
      %v281 = vld [vmem:[%s219 + $0x40] sm:$0xf]
      %v282 = vld [vmem:[%s219 + $0x44] sm:$0xf]
      %v283 = vld [vmem:[%s219 + $0x48] sm:$0xf]
      %v284 = vld [vmem:[%s219 + $0x4c] sm:$0xf]
      %v285 = vld [vmem:[%s219 + $0x50] sm:$0xf]
      %v286 = vld [vmem:[%s219 + $0x54] sm:$0xf]
      %v287 = vld [vmem:[%s219 + $0x58] sm:$0xf]
      %v288 = vld [vmem:[%s219 + $0x5c] sm:$0xf]
      %v289 = vld [vmem:[%s219 + $0x60] sm:$0xf]
      %v290 = vld [vmem:[%s219 + $0x64] sm:$0xf]
      %v291 = vld [vmem:[%s219 + $0x68] sm:$0xf]
      %v292 = vld [vmem:[%s219 + $0x6c] sm:$0xf]
      %v293 = vld [vmem:[%s219 + $0x70] sm:$0xf]
      %v294 = vld [vmem:[%s219 + $0x74] sm:$0xf]
      %v295 = vld [vmem:[%s219 + $0x78] sm:$0xf]
      %v296 = vld [vmem:[%s219 + $0x7c] sm:$0xf]
      %v297 = vld [vmem:[%s219 + $0x80] sm:$0xf]
      %v298 = vld [vmem:[%s219 + $0x84] sm:$0xf]
      %v299 = vld [vmem:[%s219 + $0x88] sm:$0xf]
      %v300 = vld [vmem:[%s219 + $0x8c] sm:$0xf]
      %v301 = vld [vmem:[%s219 + $0x90] sm:$0xf]
      %v302 = vld [vmem:[%s219 + $0x94] sm:$0xf]
      %v303 = vld [vmem:[%s219 + $0x98] sm:$0xf]
      %v304 = vld [vmem:[%s219 + $0x9c] sm:$0xf]
      %v305 = vld [vmem:[%s219 + $0xa0] sm:$0xf]
      %v306 = vld [vmem:[%s219 + $0xa4] sm:$0xf]
      %v307 = vld [vmem:[%s219 + $0xa8] sm:$0xf]
      %v308 = vld [vmem:[%s219 + $0xac] sm:$0xf]
      %v309 = vld [vmem:[%s219 + $0xb0] sm:$0xf]
      %v310 = vld [vmem:[%s219 + $0xb4] sm:$0xf]
      %v311 = vld [vmem:[%s219 + $0xb8] sm:$0xf]
      %v312 = vld [vmem:[%s219 + $0xbc] sm:$0xf]
      %v313 = vld [vmem:[%s219 + $0xc0] sm:$0xf]
      %v314 = vld [vmem:[%s219 + $0xc4] sm:$0xf]
      %v315 = vld [vmem:[%s219 + $0xc8] sm:$0xf]
      %v316 = vld [vmem:[%s219 + $0xcc] sm:$0xf]
      %v317 = vld [vmem:[%s219 + $0xd0] sm:$0xf]
      %v318 = vld [vmem:[%s219 + $0xd4] sm:$0xf]
      %v319 = vld [vmem:[%s219 + $0xd8] sm:$0xf]
      %v320 = vld [vmem:[%s219 + $0xdc] sm:$0xf]
      %v321 = vld [vmem:[%s219 + $0xe0] sm:$0xf]
      %v322 = vld [vmem:[%s219 + $0xe4] sm:$0xf]
      %v323 = vld [vmem:[%s219 + $0xe8] sm:$0xf]
      %v324 = vld [vmem:[%s219 + $0xec] sm:$0xf]
      %v325 = vld [vmem:[%s219 + $0xf0] sm:$0xf]
      %v326 = vld [vmem:[%s219 + $0xf4] sm:$0xf]
      %v327 = vld [vmem:[%s219 + $0xf8] sm:$0xf]
      %v328 = vld [vmem:[%s219 + $0xfc] sm:$0xf]
      %v345 = vunpack.c.l.b16 %v249
      %v346 = vunpack.c.h.b16 %v249
      %v347 = vunpack.c.l.b16 %v250
      %v348 = vunpack.c.h.b16 %v250
      %v349 = vunpack.c.l.b16 %v251
      %v350 = vunpack.c.h.b16 %v251
      %v351 = vunpack.c.l.b16 %v252
      %v352 = vunpack.c.h.b16 %v252
      %v353 = vunpack.c.l.b16 %v253
      %v354 = vunpack.c.h.b16 %v253
      %v355 = vunpack.c.l.b16 %v254
      %v356 = vunpack.c.h.b16 %v254
      %v357 = vunpack.c.l.b16 %v255
      %v358 = vunpack.c.h.b16 %v255
      %v359 = vunpack.c.l.b16 %v256
      %v360 = vunpack.c.h.b16 %v256
      %v361 = vunpack.c.l.b16 %v257
      %v362 = vunpack.c.h.b16 %v257
      %v363 = vunpack.c.l.b16 %v258
      %v364 = vunpack.c.h.b16 %v258
      %v365 = vunpack.c.l.b16 %v259
      %v366 = vunpack.c.h.b16 %v259
      %v367 = vunpack.c.l.b16 %v260
      %v368 = vunpack.c.h.b16 %v260
      %v369 = vunpack.c.l.b16 %v261
      %v370 = vunpack.c.h.b16 %v261
      %v371 = vunpack.c.l.b16 %v262
      %v372 = vunpack.c.h.b16 %v262
      %v373 = vunpack.c.l.b16 %v263
      %v374 = vunpack.c.h.b16 %v263
      %v375 = vunpack.c.l.b16 %v264
      %v376 = vunpack.c.h.b16 %v264
      %v377 = vpack.c.b16 %v349, %v345
      %v378 = vpack.c.b16 %v350, %v346
      %v379 = vpack.c.b16 %v351, %v347
      %v380 = vpack.c.b16 %v352, %v348
      %v381 = vpack.c.b16 %v357, %v353
      %v382 = vpack.c.b16 %v358, %v354
      %v383 = vpack.c.b16 %v359, %v355
      %v384 = vpack.c.b16 %v360, %v356
      %v385 = vpack.c.b16 %v365, %v361
      %v386 = vpack.c.b16 %v366, %v362
      %v387 = vpack.c.b16 %v367, %v363
      %v388 = vpack.c.b16 %v368, %v364
      %v389 = vpack.c.b16 %v373, %v369
      %v390 = vpack.c.b16 %v374, %v370
      %v391 = vpack.c.b16 %v375, %v371
      %v392 = vpack.c.b16 %v376, %v372
      %v473 = vunpack.c.l.b16 %v265
      %v474 = vunpack.c.l.b16 %v266
      %v475 = vunpack.c.l.b16 %v267
      %v476 = vunpack.c.l.b16 %v268
      %v477 = vunpack.c.l.b16 %v269
      %v478 = vunpack.c.l.b16 %v270
      %v479 = vunpack.c.l.b16 %v271
      %v480 = vunpack.c.l.b16 %v272
      %v481 = vunpack.c.l.b16 %v273
      %v482 = vunpack.c.l.b16 %v274
      %v483 = vunpack.c.l.b16 %v275
      %v484 = vunpack.c.l.b16 %v276
      %v485 = vunpack.c.l.b16 %v277
      %v486 = vunpack.c.l.b16 %v278
      %v487 = vunpack.c.l.b16 %v279
      %v488 = vunpack.c.l.b16 %v280
      %v489 = vunpack.c.l.b16 %v281
      %v490 = vunpack.c.l.b16 %v282
      %v491 = vunpack.c.l.b16 %v283
      %v492 = vunpack.c.l.b16 %v284
      %v493 = vunpack.c.l.b16 %v285
      %v494 = vunpack.c.l.b16 %v286
      %v495 = vunpack.c.l.b16 %v287
      %v496 = vunpack.c.l.b16 %v288
      %v497 = vunpack.c.l.b16 %v289
      %v498 = vunpack.c.l.b16 %v290
      %v499 = vunpack.c.l.b16 %v291
      %v500 = vunpack.c.l.b16 %v292
      %v501 = vunpack.c.l.b16 %v293
      %v502 = vunpack.c.l.b16 %v294
      %v503 = vunpack.c.l.b16 %v295
      %v504 = vunpack.c.l.b16 %v296
      %v505 = vunpack.c.l.b16 %v297
      %v506 = vunpack.c.l.b16 %v298
      %v507 = vunpack.c.l.b16 %v299
      %v508 = vunpack.c.l.b16 %v300
      %v509 = vunpack.c.l.b16 %v301
      %v510 = vunpack.c.l.b16 %v302
      %v511 = vunpack.c.l.b16 %v303
      %v512 = vunpack.c.l.b16 %v304
      %v513 = vunpack.c.l.b16 %v305
      %v514 = vunpack.c.l.b16 %v306
      %v515 = vunpack.c.l.b16 %v307
      %v516 = vunpack.c.l.b16 %v308
      %v517 = vunpack.c.l.b16 %v309
      %v518 = vunpack.c.l.b16 %v310
      %v519 = vunpack.c.l.b16 %v311
      %v520 = vunpack.c.l.b16 %v312
      %v521 = vunpack.c.l.b16 %v313
      %v522 = vunpack.c.l.b16 %v314
      %v523 = vunpack.c.l.b16 %v315
      %v524 = vunpack.c.l.b16 %v316
      %v525 = vunpack.c.l.b16 %v317
      %v526 = vunpack.c.l.b16 %v318
      %v527 = vunpack.c.l.b16 %v319
      %v528 = vunpack.c.l.b16 %v320
      %v529 = vunpack.c.l.b16 %v321
      %v530 = vunpack.c.l.b16 %v322
      %v531 = vunpack.c.l.b16 %v323
      %v532 = vunpack.c.l.b16 %v324
      %v533 = vunpack.c.l.b16 %v325
      %v534 = vunpack.c.l.b16 %v326
      %v535 = vunpack.c.l.b16 %v327
      %v536 = vunpack.c.l.b16 %v328
      %v537 = vpack.c.b16 %v474, %v473
      %v538 = vpack.c.b16 %v476, %v475
      %v539 = vpack.c.b16 %v478, %v477
      %v540 = vpack.c.b16 %v480, %v479
      %v541 = vpack.c.b16 %v482, %v481
      %v542 = vpack.c.b16 %v484, %v483
      %v543 = vpack.c.b16 %v486, %v485
      %v544 = vpack.c.b16 %v488, %v487
      %v545 = vpack.c.b16 %v490, %v489
      %v546 = vpack.c.b16 %v492, %v491
      %v547 = vpack.c.b16 %v494, %v493
      %v548 = vpack.c.b16 %v496, %v495
      %v549 = vpack.c.b16 %v498, %v497
      %v550 = vpack.c.b16 %v500, %v499
      %v551 = vpack.c.b16 %v502, %v501
      %v552 = vpack.c.b16 %v504, %v503
      %v553 = vpack.c.b16 %v506, %v505
      %v554 = vpack.c.b16 %v508, %v507
      %v555 = vpack.c.b16 %v510, %v509
      %v556 = vpack.c.b16 %v512, %v511
      %v557 = vpack.c.b16 %v514, %v513
      %v558 = vpack.c.b16 %v516, %v515
      %v559 = vpack.c.b16 %v518, %v517
      %v560 = vpack.c.b16 %v520, %v519
      %v561 = vpack.c.b16 %v522, %v521
      %v562 = vpack.c.b16 %v524, %v523
      %v563 = vpack.c.b16 %v526, %v525
      %v564 = vpack.c.b16 %v528, %v527
      %v565 = vpack.c.b16 %v530, %v529
      %v566 = vpack.c.b16 %v532, %v531
      %v567 = vpack.c.b16 %v534, %v533
      %v568 = vpack.c.b16 %v536, %v535
      %601 = vmatprep.subr.bf16.mxu0 0
      %602 = vmatpush1.bf16.msra.mxu0 %v544
      %603 = vmatprep.subr.bf16.mxu0 0
      %604 = vmatpush1.bf16.msra.mxu0 %v543
      %605 = vmatprep.subr.bf16.mxu0 0
      %606 = vmatpush1.bf16.msra.mxu0 %v542
      %607 = vmatprep.subr.bf16.mxu0 0
      %608 = vmatpush1.bf16.msra.mxu0 %v541
      %609 = vmatprep.subr.bf16.mxu0 0
      %610 = vmatpush1.bf16.msra.mxu0 %v540
      %611 = vmatprep.subr.bf16.mxu0 0
      %612 = vmatpush1.bf16.msra.mxu0 %v539
      %613 = vmatprep.subr.bf16.mxu0 0
      %614 = vmatpush1.bf16.msra.mxu0 %v538
      %615 = vmatprep.subr.bf16.mxu0 0
      %616 = vmatpush1.bf16.msra.mxu0 %v537
      %617 = vmatprep.subr.bf16.mxu0 0
      %618 = vmatpush2.bf16.msra.mxu0 %v552
      %619 = vmatprep.subr.bf16.mxu0 0
      %620 = vmatpush2.bf16.msra.mxu0 %v551
      %621 = vmatprep.subr.bf16.mxu0 0
      %622 = vmatpush2.bf16.msra.mxu0 %v550
      %623 = vmatprep.subr.bf16.mxu0 0
      %624 = vmatpush2.bf16.msra.mxu0 %v549
      %625 = vmatprep.subr.bf16.mxu0 0
      %626 = vmatpush2.bf16.msra.mxu0 %v548
      %627 = vmatprep.subr.bf16.mxu0 0
      %628 = vmatpush2.bf16.msra.mxu0 %v547
      %629 = vmatprep.subr.bf16.mxu0 0
      %630 = vmatpush2.bf16.msra.mxu0 %v546
      %631 = vmatprep.subr.bf16.mxu0 0
      %632 = vmatpush2.bf16.msra.mxu0 %v545
      %633 = vmatprep.mubr.bf16.mxu0 %v378
      %634 = vmatmul.mubr.bf16.gmra.mxu0 %v377
      %v635 = vpop.f32.mrf.mxu0
      %v636 = vadd.f32 0.0, %v635
      %v637 = vpop.f32.mrf.mxu0
      %v638 = vpop.f32.mrf.mxu0
      %v639 = vadd.f32 0.0, %v638
      %v640 = vpop.f32.mrf.mxu0
      %641 = vmatprep.mubr.bf16.mxu0 %v382
      %642 = vmatmul.mubr.bf16.gmra.mxu0 %v381
      %v643 = vpop.f32.mrf.mxu0
      %v644 = vadd.f32 0.0, %v643
      %v645 = vpop.f32.mrf.mxu0
      %v646 = vpop.f32.mrf.mxu0
      %v647 = vadd.f32 0.0, %v646
      %v648 = vpop.f32.mrf.mxu0
      %649 = vmatprep.mubr.bf16.mxu0 %v386
      %650 = vmatmul.mubr.bf16.gmra.mxu0 %v385
      %v651 = vpop.f32.mrf.mxu0
      %v652 = vadd.f32 0.0, %v651
      %v653 = vpop.f32.mrf.mxu0
      %v654 = vpop.f32.mrf.mxu0
      %v655 = vadd.f32 0.0, %v654
      %v656 = vpop.f32.mrf.mxu0
      %657 = vmatprep.mubr.bf16.mxu0 %v390
      %658 = vmatmul.mubr.bf16.gmra.mxu0 %v389
      %v659 = vpop.f32.mrf.mxu0
      %v660 = vadd.f32 0.0, %v659
      %v661 = vpop.f32.mrf.mxu0
      %v662 = vpop.f32.mrf.mxu0
      %v663 = vadd.f32 0.0, %v662
      %v664 = vpop.f32.mrf.mxu0
      %665 = vdwg.mxu0
      %666 = vmatprep.subr.bf16.mxu0 0
      %667 = vmatpush1.bf16.msra.mxu0 %v560
      %668 = vmatprep.subr.bf16.mxu0 0
      %669 = vmatpush1.bf16.msra.mxu0 %v559
      %670 = vmatprep.subr.bf16.mxu0 0
      %671 = vmatpush1.bf16.msra.mxu0 %v558
      %672 = vmatprep.subr.bf16.mxu0 0
      %673 = vmatpush1.bf16.msra.mxu0 %v557
      %674 = vmatprep.subr.bf16.mxu0 0
      %675 = vmatpush1.bf16.msra.mxu0 %v556
      %676 = vmatprep.subr.bf16.mxu0 0
      %677 = vmatpush1.bf16.msra.mxu0 %v555
      %678 = vmatprep.subr.bf16.mxu0 0
      %679 = vmatpush1.bf16.msra.mxu0 %v554
      %680 = vmatprep.subr.bf16.mxu0 0
      %681 = vmatpush1.bf16.msra.mxu0 %v553
      %682 = vmatprep.subr.bf16.mxu0 0
      %683 = vmatpush2.bf16.msra.mxu0 %v568
      %684 = vmatprep.subr.bf16.mxu0 0
      %685 = vmatpush2.bf16.msra.mxu0 %v567
      %686 = vmatprep.subr.bf16.mxu0 0
      %687 = vmatpush2.bf16.msra.mxu0 %v566
      %688 = vmatprep.subr.bf16.mxu0 0
      %689 = vmatpush2.bf16.msra.mxu0 %v565
      %690 = vmatprep.subr.bf16.mxu0 0
      %691 = vmatpush2.bf16.msra.mxu0 %v564
      %692 = vmatprep.subr.bf16.mxu0 0
      %693 = vmatpush2.bf16.msra.mxu0 %v563
      %694 = vmatprep.subr.bf16.mxu0 0
      %695 = vmatpush2.bf16.msra.mxu0 %v562
      %696 = vmatprep.subr.bf16.mxu0 0
      %697 = vmatpush2.bf16.msra.mxu0 %v561
      %698 = vmatprep.mubr.bf16.mxu0 %v380
      %699 = vmatmul.mubr.bf16.gmra.mxu0 %v379
      %v700 = vpop.f32.mrf.mxu0
      %v701 = vadd.f32 %v636, %v700
      %v702 = vpop.f32.mrf.mxu0
      %v703 = vpop.f32.mrf.mxu0
      %v704 = vadd.f32 %v639, %v703
      %v705 = vpop.f32.mrf.mxu0
      %706 = vmatprep.mubr.bf16.mxu0 %v384
      %707 = vmatmul.mubr.bf16.gmra.mxu0 %v383
      %v708 = vpop.f32.mrf.mxu0
      %v709 = vadd.f32 %v644, %v708
      %v710 = vpop.f32.mrf.mxu0
      %v711 = vpop.f32.mrf.mxu0
      %v712 = vadd.f32 %v647, %v711
      %v713 = vpop.f32.mrf.mxu0
      %714 = vmatprep.mubr.bf16.mxu0 %v388
      %715 = vmatmul.mubr.bf16.gmra.mxu0 %v387
      %v716 = vpop.f32.mrf.mxu0
      %v717 = vadd.f32 %v652, %v716
      %v718 = vpop.f32.mrf.mxu0
      %v719 = vpop.f32.mrf.mxu0
      %v720 = vadd.f32 %v655, %v719
      %v721 = vpop.f32.mrf.mxu0
      %722 = vmatprep.mubr.bf16.mxu0 %v392
      %723 = vmatmul.mubr.bf16.gmra.mxu0 %v391
      %v724 = vpop.f32.mrf.mxu0
      %v725 = vadd.f32 %v660, %v724
      %v726 = vpop.f32.mrf.mxu0
      %v727 = vpop.f32.mrf.mxu0
      %v728 = vadd.f32 %v663, %v727
      %v729 = vpop.f32.mrf.mxu0
      %730 = vdwg.mxu0
      %v731 = vadd.f32 %v241, %v701
      %v732 = vadd.f32 %v242, %v704
      %v733 = vadd.f32 %v243, %v709
      %v734 = vadd.f32 %v244, %v712
      %v735 = vadd.f32 %v245, %v717
      %v736 = vadd.f32 %v246, %v720
      %v737 = vadd.f32 %v247, %v725
      %v738 = vadd.f32 %v248, %v728
      %vm739 = vcmask 261120
      %740 = vst.msk [vmem:[#allocation2] sm:$0xff] %vm739, %v731
      %741 = vst.msk [vmem:[#allocation2 + $0x8] sm:$0xff] %vm739, %v732
      %742 = vst.msk [vmem:[#allocation2 + $0x10] sm:$0xff] %vm739, %v733
      %743 = vst.msk [vmem:[#allocation2 + $0x18] sm:$0xff] %vm739, %v734
      %744 = vst.msk [vmem:[#allocation2 + $0x20] sm:$0xff] %vm739, %v735
      %745 = vst.msk [vmem:[#allocation2 + $0x28] sm:$0xff] %vm739, %v736
      %746 = vst.msk [vmem:[#allocation2 + $0x30] sm:$0xff] %vm739, %v737
      %747 = vst.msk [vmem:[#allocation2 + $0x38] sm:$0xff] %vm739, %v738
      // Predicated region
      $region37: #{_lambda_.6} parent=31 // pred_check
        %p748 = pneg %p228
      $region38: #{_lambda_.6} parent=31 // pred_check_branch
        %750 = sbr.rel (%p748) target = $region40
      $region39: #{_lambda_.6} parent=31 // pred_region
        %v751 = vld [vmem:[#allocation2] sm:$0xff]
        %v752 = vld [vmem:[#allocation2 + $0x8] sm:$0xff]
        %v753 = vld [vmem:[#allocation2 + $0x10] sm:$0xff]
        %v754 = vld [vmem:[#allocation2 + $0x18] sm:$0xff]
        %v755 = vld [vmem:[#allocation2 + $0x20] sm:$0xff]
        %v756 = vld [vmem:[#allocation2 + $0x28] sm:$0xff]
        %v757 = vld [vmem:[#allocation2 + $0x30] sm:$0xff]
        %v758 = vld [vmem:[#allocation2 + $0x38] sm:$0xff]
        %v759 = vld [vmem:[%s2] sm:$0x1]
        %v761 = vlaneseq
        %v762 = vshrl.u32 %v761, 7
        %v763 = vsub.s32 0, %v762
        %v764 = vrot.slane %v759, %v763
        %v766 = vadd.f32 %v751, %v764
        %v767 = vadd.f32 %v752, %v764
        %v768 = vadd.f32 %v753, %v764
        %v769 = vadd.f32 %v754, %v764
        %v770 = vadd.f32 %v755, %v764
        %v771 = vadd.f32 %v756, %v764
        %v772 = vadd.f32 %v757, %v764
        %v773 = vadd.f32 %v758, %v764
        %vm774 = vcmp.ge.f32.partialorder %v766, 0.0
        %vm775 = vcmp.ge.f32.partialorder %v767, 0.0
        %vm776 = vcmp.ge.f32.partialorder %v768, 0.0
        %vm777 = vcmp.ge.f32.partialorder %v769, 0.0
        %vm778 = vcmp.ge.f32.partialorder %v770, 0.0
        %vm779 = vcmp.ge.f32.partialorder %v771, 0.0
        %vm780 = vcmp.ge.f32.partialorder %v772, 0.0
        %vm781 = vcmp.ge.f32.partialorder %v773, 0.0
        %v782 = vmul.f32 %v766, 0.2
        %v783 = vmul.f32 %v767, 0.2
        %v784 = vmul.f32 %v768, 0.2
        %v785 = vmul.f32 %v769, 0.2
        %v786 = vmul.f32 %v770, 0.2
        %v787 = vmul.f32 %v771, 0.2
        %v788 = vmul.f32 %v772, 0.2
        %v789 = vmul.f32 %v773, 0.2
        %v790 = vsel %vm774, %v766, %v782
        %v791 = vsel %vm775, %v767, %v783
        %v792 = vsel %vm776, %v768, %v784
        %v793 = vsel %vm777, %v769, %v785
        %v794 = vsel %vm778, %v770, %v786
        %v795 = vsel %vm779, %v771, %v787
        %v796 = vsel %vm780, %v772, %v788
        %v797 = vsel %vm781, %v773, %v789
        %v798 = vpack.c.bf16 %v791, %v790
        %v799 = vpack.c.bf16 %v793, %v792
        %v800 = vpack.c.bf16 %v795, %v794
        %v801 = vpack.c.bf16 %v797, %v796
        %v806 = vunpack.c.l.b16 %v798
        %v807 = vunpack.c.h.b16 %v798
        %v808 = vunpack.c.l.b16 %v799
        %v809 = vunpack.c.h.b16 %v799
        %v810 = vunpack.c.l.b16 %v800
        %v811 = vunpack.c.h.b16 %v800
        %v812 = vunpack.c.l.b16 %v801
        %v813 = vunpack.c.h.b16 %v801
        %v814 = vpack.c.b16 %v806, %v806
        %v815 = vpack.c.b16 %v807, %v807
        %v816 = vpack.c.b16 %v808, %v808
        %v817 = vpack.c.b16 %v809, %v809
        %v818 = vpack.c.b16 %v810, %v810
        %v819 = vpack.c.b16 %v811, %v811
        %v820 = vpack.c.b16 %v812, %v812
        %v821 = vpack.c.b16 %v813, %v813
        %vm830 = vcmask 257024
        %831 = vst.msk [vmem:[%s225] sm:$0xf] %vm830, %v814
        %832 = vst.msk [vmem:[%s225 + $0x4] sm:$0xf] %vm830, %v815
        %833 = vst.msk [vmem:[%s225 + $0x8] sm:$0xf] %vm830, %v816
        %834 = vst.msk [vmem:[%s225 + $0xc] sm:$0xf] %vm830, %v817
        %835 = vst.msk [vmem:[%s225 + $0x10] sm:$0xf] %vm830, %v818
        %836 = vst.msk [vmem:[%s225 + $0x14] sm:$0xf] %vm830, %v819
        %837 = vst.msk [vmem:[%s225 + $0x18] sm:$0xf] %vm830, %v820
        %838 = vst.msk [vmem:[%s225 + $0x1c] sm:$0xf] %vm830, %v821
      $region40: #{_lambda_.6} parent=31 // pred_fallthru
        _
      %s839 = smul.u32 8, %s18
      %p840 = scmp.lt.s32.totalorder %s839, 15
      %s841 = scalar_select %p840, %s839, 15
      %s842 = smul.addr %s841, 4
      %s843 = scalar_lea.vmem %s3, %s842
      // Predicated region
      $region41: #{_lambda_.6} parent=31 // pred_check
        %p844 = pneg %p119
      $region42: #{_lambda_.6} parent=31 // pred_check_branch
        %846 = sbr.rel (%p844) target = $region44
      $region43: #{_lambda_.6} parent=31 // pred_region
        %s847 = smul.u32 8, %s18
      $region44: #{_lambda_.6} parent=31 // pred_fallthru
        _
    $region32: #{_lambda_.6} parent=5 // pred_fallthru
      _
    %p848 = scmp.le.s32.totalorder 2, %s9
    // Predicated region
    $region45: #{_lambda_.6} parent=5 // pred_check
      %p849 = pneg %p848
    $region46: #{_lambda_.6} parent=5 // pred_check_branch
      %851 = sbr.rel (%p849) target = $region48
    $region47: #{_lambda_.6} parent=5 // pred_region
      %s852 = ssub.s32 %s9, 2
      // Predicated region
      $region49: #{_lambda_.6} parent=47 // pred_check
        %p853 = pneg %p125
      $region50: #{_lambda_.6} parent=47 // pred_check_branch
        %855 = sbr.rel (%p853) target = $region52
      $region51: #{_lambda_.6} parent=47 // pred_region
        %s856 = smul.u32 8, %s20
        %p857 = scmp.lt.s32.totalorder %s856, 15
        %s858 = scalar_select %p857, %s856, 15
        %s859 = smul.addr %s858, 4
        %s860 = scalar_lea.vmem %s3, %s859
      $region52: #{_lambda_.6} parent=47 // pred_fallthru
        _
    $region48: #{_lambda_.6} parent=5 // pred_fallthru
      _
  $region6: #{_lambda_.6} parent=0 // loop_footer
    %s13 = sadd.s32 1, %s9
  $region7: #{_lambda_.6} parent=0 // loop_footer_branch
    %8 = sbr.rel target = $region3
  $region8: #{_lambda_.6} parent=0 // loop_exit
    _

// kernel: _lambda_.7
$region0: #{_lambda_.7}
  #allocation0 [shape = 'u32[]', space=smem, size = 0x4, offset = 0x4, fixed_abs, tag = 'smem constant byte address 0x4 - core index']
  #allocation1 [shape = 'u32[144,128]{1,0:T(1,128)}', space=vmem, size = 0x12000, scoped, tag = 'internal scratch']
  #allocation2 [shape = 'f32[1,1]{1,0:T(1,128)S(1)}', space=vmem, size = 0x200, scoped, tag = 'scoped memory for _lambda_.7']
  %s0 = inlined_call_operand.vmem [shape: bf16[32,896], index: 0, kind: input, shape index: {}]
  %s1 = inlined_call_operand.vmem [shape: bf16[896,64], index: 1, kind: input, shape index: {}]
  %s2 = inlined_call_operand.vmem [shape: f32[1,64], index: 2, kind: input, shape index: {}]
  %s3 = inlined_call_operand.vmem [shape: f32[32,64], index: 3, kind: input, shape index: {}]
  %s4 = inlined_call_operand.<no memory space> [shape: f32[1,1], index: 4, kind: input, shape index: {}]
  %s5 = inlined_call_operand.vmem [shape: f32[2,1], index: 5, kind: output, shape index: {}]
  %s6 = sld [smem:[#allocation0]]
  $region30: #{_lambda_.7} parent=0
    _
  %s8 = ssub.s32 1, %s6
  %s9 = scalar_select 0, %s8, %s6
  %v10 = vstv %s4
  %11 = vst [vmem:[#allocation2] sm:$0x1] %v10
  // Predicated region
  $region2: #{_lambda_.7} parent=0 // pred_check
    _
  $region3: #{_lambda_.7} parent=0 // pred_check_branch
    %13 = sbr.rel (0) target = $region5
  $region4: #{_lambda_.7} parent=0 // pred_region
    _
  $region5: #{_lambda_.7} parent=0 // pred_fallthru
    _
  // Predicated region
  $region6: #{_lambda_.7} parent=0 // pred_check
    _
  $region7: #{_lambda_.7} parent=0 // pred_check_branch
    %15 = sbr.rel (0) target = $region9
  $region8: #{_lambda_.7} parent=0 // pred_region
    _
  $region9: #{_lambda_.7} parent=0 // pred_fallthru
    _
  // Predicated region
  $region10: #{_lambda_.7} parent=0 // pred_check
    _
  $region11: #{_lambda_.7} parent=0 // pred_check_branch
    %17 = sbr.rel (0) target = $region13
  $region12: #{_lambda_.7} parent=0 // pred_region
    _
  $region13: #{_lambda_.7} parent=0 // pred_fallthru
    _
  // Predicated region
  $region14: #{_lambda_.7} parent=0 // pred_check
    _
  $region15: #{_lambda_.7} parent=0 // pred_check_branch
    %19 = sbr.rel (0) target = $region17
  $region16: #{_lambda_.7} parent=0 // pred_region
    _
  $region17: #{_lambda_.7} parent=0 // pred_fallthru
    _
  // Predicated region
  $region18: #{_lambda_.7} parent=0 // pred_check
    _
  $region19: #{_lambda_.7} parent=0 // pred_check_branch
    %21 = sbr.rel (0) target = $region21
  $region20: #{_lambda_.7} parent=0 // pred_region
    _
  $region21: #{_lambda_.7} parent=0 // pred_fallthru
    _
  %v23 = vld [vmem:[%s0] sm:$0xff]
  %v24 = vld [vmem:[%s0 + $0x8] sm:$0xff]
  %v25 = vld [vmem:[%s0 + $0x10] sm:$0xff]
  %v26 = vld [vmem:[%s0 + $0x18] sm:$0xf]
  %v27 = vld [vmem:[%s0 + $0x1c] sm:$0xff]
  %v28 = vld [vmem:[%s0 + $0x24] sm:$0xff]
  %v29 = vld [vmem:[%s0 + $0x2c] sm:$0xff]
  %v30 = vld [vmem:[%s0 + $0x34] sm:$0xf]
  %v31 = vld [vmem:[%s0 + $0x38] sm:$0xff]
  %v32 = vld [vmem:[%s0 + $0x40] sm:$0xff]
  %v33 = vld [vmem:[%s0 + $0x48] sm:$0xff]
  %v34 = vld [vmem:[%s0 + $0x50] sm:$0xf]
  %v35 = vld [vmem:[%s0 + $0x54] sm:$0xff]
  %v36 = vld [vmem:[%s0 + $0x5c] sm:$0xff]
  %v37 = vld [vmem:[%s0 + $0x64] sm:$0xff]
  %v38 = vld [vmem:[%s0 + $0x6c] sm:$0xf]
  %v39 = vld [vmem:[%s1] sm:$0xf]
  %v40 = vld [vmem:[%s1 + $0x4] sm:$0xf]
  %v41 = vld [vmem:[%s1 + $0x8] sm:$0xf]
  %v42 = vld [vmem:[%s1 + $0xc] sm:$0xf]
  %v43 = vld [vmem:[%s1 + $0x10] sm:$0xf]
  %v44 = vld [vmem:[%s1 + $0x14] sm:$0xf]
  %v45 = vld [vmem:[%s1 + $0x18] sm:$0xf]
  %v46 = vld [vmem:[%s1 + $0x1c] sm:$0xf]
  %v47 = vld [vmem:[%s1 + $0x20] sm:$0xf]
  %v48 = vld [vmem:[%s1 + $0x24] sm:$0xf]
  %v49 = vld [vmem:[%s1 + $0x28] sm:$0xf]
  %v50 = vld [vmem:[%s1 + $0x2c] sm:$0xf]
  %v51 = vld [vmem:[%s1 + $0x30] sm:$0xf]
  %v52 = vld [vmem:[%s1 + $0x34] sm:$0xf]
  %v53 = vld [vmem:[%s1 + $0x38] sm:$0xf]
  %v54 = vld [vmem:[%s1 + $0x3c] sm:$0xf]
  %v55 = vld [vmem:[%s1 + $0x40] sm:$0xf]
  %v56 = vld [vmem:[%s1 + $0x44] sm:$0xf]
  %v57 = vld [vmem:[%s1 + $0x48] sm:$0xf]
  %v58 = vld [vmem:[%s1 + $0x4c] sm:$0xf]
  %v59 = vld [vmem:[%s1 + $0x50] sm:$0xf]
  %v60 = vld [vmem:[%s1 + $0x54] sm:$0xf]
  %v61 = vld [vmem:[%s1 + $0x58] sm:$0xf]
  %v62 = vld [vmem:[%s1 + $0x5c] sm:$0xf]
  %v63 = vld [vmem:[%s1 + $0x60] sm:$0xf]
  %v64 = vld [vmem:[%s1 + $0x64] sm:$0xf]
  %v65 = vld [vmem:[%s1 + $0x68] sm:$0xf]
  %v66 = vld [vmem:[%s1 + $0x6c] sm:$0xf]
  %v67 = vld [vmem:[%s1 + $0x70] sm:$0xf]
  %v68 = vld [vmem:[%s1 + $0x74] sm:$0xf]
  %v69 = vld [vmem:[%s1 + $0x78] sm:$0xf]
  %v70 = vld [vmem:[%s1 + $0x7c] sm:$0xf]
  %v71 = vld [vmem:[%s1 + $0x80] sm:$0xf]
  %v72 = vld [vmem:[%s1 + $0x84] sm:$0xf]
  %v73 = vld [vmem:[%s1 + $0x88] sm:$0xf]
  %v74 = vld [vmem:[%s1 + $0x8c] sm:$0xf]
  %v75 = vld [vmem:[%s1 + $0x90] sm:$0xf]
  %v76 = vld [vmem:[%s1 + $0x94] sm:$0xf]
  %v77 = vld [vmem:[%s1 + $0x98] sm:$0xf]
  %v78 = vld [vmem:[%s1 + $0x9c] sm:$0xf]
  %v79 = vld [vmem:[%s1 + $0xa0] sm:$0xf]
  %v80 = vld [vmem:[%s1 + $0xa4] sm:$0xf]
  %v81 = vld [vmem:[%s1 + $0xa8] sm:$0xf]
  %v82 = vld [vmem:[%s1 + $0xac] sm:$0xf]
  %v83 = vld [vmem:[%s1 + $0xb0] sm:$0xf]
  %v84 = vld [vmem:[%s1 + $0xb4] sm:$0xf]
  %v85 = vld [vmem:[%s1 + $0xb8] sm:$0xf]
  %v86 = vld [vmem:[%s1 + $0xbc] sm:$0xf]
  %v87 = vld [vmem:[%s1 + $0xc0] sm:$0xf]
  %v88 = vld [vmem:[%s1 + $0xc4] sm:$0xf]
  %v89 = vld [vmem:[%s1 + $0xc8] sm:$0xf]
  %v90 = vld [vmem:[%s1 + $0xcc] sm:$0xf]
  %v91 = vld [vmem:[%s1 + $0xd0] sm:$0xf]
  %v92 = vld [vmem:[%s1 + $0xd4] sm:$0xf]
  %v93 = vld [vmem:[%s1 + $0xd8] sm:$0xf]
  %v94 = vld [vmem:[%s1 + $0xdc] sm:$0xf]
  %v95 = vld [vmem:[%s1 + $0xe0] sm:$0xf]
  %v96 = vld [vmem:[%s1 + $0xe4] sm:$0xf]
  %v97 = vld [vmem:[%s1 + $0xe8] sm:$0xf]
  %v98 = vld [vmem:[%s1 + $0xec] sm:$0xf]
  %v99 = vld [vmem:[%s1 + $0xf0] sm:$0xf]
  %v100 = vld [vmem:[%s1 + $0xf4] sm:$0xf]
  %v101 = vld [vmem:[%s1 + $0xf8] sm:$0xf]
  %v102 = vld [vmem:[%s1 + $0xfc] sm:$0xf]
  %v103 = vld [vmem:[%s1 + $0x100] sm:$0xf]
  %v104 = vld [vmem:[%s1 + $0x104] sm:$0xf]
  %v105 = vld [vmem:[%s1 + $0x108] sm:$0xf]
  %v106 = vld [vmem:[%s1 + $0x10c] sm:$0xf]
  %v107 = vld [vmem:[%s1 + $0x110] sm:$0xf]
  %v108 = vld [vmem:[%s1 + $0x114] sm:$0xf]
  %v109 = vld [vmem:[%s1 + $0x118] sm:$0xf]
  %v110 = vld [vmem:[%s1 + $0x11c] sm:$0xf]
  %v111 = vld [vmem:[%s1 + $0x120] sm:$0xf]
  %v112 = vld [vmem:[%s1 + $0x124] sm:$0xf]
  %v113 = vld [vmem:[%s1 + $0x128] sm:$0xf]
  %v114 = vld [vmem:[%s1 + $0x12c] sm:$0xf]
  %v115 = vld [vmem:[%s1 + $0x130] sm:$0xf]
  %v116 = vld [vmem:[%s1 + $0x134] sm:$0xf]
  %v117 = vld [vmem:[%s1 + $0x138] sm:$0xf]
  %v118 = vld [vmem:[%s1 + $0x13c] sm:$0xf]
  %v119 = vld [vmem:[%s1 + $0x140] sm:$0xf]
  %v120 = vld [vmem:[%s1 + $0x144] sm:$0xf]
  %v121 = vld [vmem:[%s1 + $0x148] sm:$0xf]
  %v122 = vld [vmem:[%s1 + $0x14c] sm:$0xf]
  %v123 = vld [vmem:[%s1 + $0x150] sm:$0xf]
  %v124 = vld [vmem:[%s1 + $0x154] sm:$0xf]
  %v125 = vld [vmem:[%s1 + $0x158] sm:$0xf]
  %v126 = vld [vmem:[%s1 + $0x15c] sm:$0xf]
  %v127 = vld [vmem:[%s1 + $0x160] sm:$0xf]
  %v128 = vld [vmem:[%s1 + $0x164] sm:$0xf]
  %v129 = vld [vmem:[%s1 + $0x168] sm:$0xf]
  %v130 = vld [vmem:[%s1 + $0x16c] sm:$0xf]
  %v131 = vld [vmem:[%s1 + $0x170] sm:$0xf]
  %v132 = vld [vmem:[%s1 + $0x174] sm:$0xf]
  %v133 = vld [vmem:[%s1 + $0x178] sm:$0xf]
  %v134 = vld [vmem:[%s1 + $0x17c] sm:$0xf]
  %v135 = vld [vmem:[%s1 + $0x180] sm:$0xf]
  %v136 = vld [vmem:[%s1 + $0x184] sm:$0xf]
  %v137 = vld [vmem:[%s1 + $0x188] sm:$0xf]
  %v138 = vld [vmem:[%s1 + $0x18c] sm:$0xf]
  %v139 = vld [vmem:[%s1 + $0x190] sm:$0xf]
  %v140 = vld [vmem:[%s1 + $0x194] sm:$0xf]
  %v141 = vld [vmem:[%s1 + $0x198] sm:$0xf]
  %v142 = vld [vmem:[%s1 + $0x19c] sm:$0xf]
  %v143 = vld [vmem:[%s1 + $0x1a0] sm:$0xf]
  %v144 = vld [vmem:[%s1 + $0x1a4] sm:$0xf]
  %v145 = vld [vmem:[%s1 + $0x1a8] sm:$0xf]
  %v146 = vld [vmem:[%s1 + $0x1ac] sm:$0xf]
  %v147 = vld [vmem:[%s1 + $0x1b0] sm:$0xf]
  %v148 = vld [vmem:[%s1 + $0x1b4] sm:$0xf]
  %v149 = vld [vmem:[%s1 + $0x1b8] sm:$0xf]
  %v150 = vld [vmem:[%s1 + $0x1bc] sm:$0xf]
  %v151 = vld [vmem:[%s2] sm:$0x1]
  %v153 = vlaneseq
  %v154 = vshrl.u32 %v153, 7
  %v155 = vsub.s32 0, %v154
  %v156 = vrot.slane %v151, %v155
  %v174 = vunpack.c.l.b16 %v23
  %v175 = vunpack.c.h.b16 %v23
  %v176 = vunpack.c.l.b16 %v24
  %v177 = vunpack.c.h.b16 %v24
  %v178 = vunpack.c.l.b16 %v25
  %v179 = vunpack.c.h.b16 %v25
  %v180 = vunpack.c.l.b16 %v26
  %v181 = vunpack.c.l.b16 %v27
  %v182 = vunpack.c.h.b16 %v27
  %v183 = vunpack.c.l.b16 %v28
  %v184 = vunpack.c.h.b16 %v28
  %v185 = vunpack.c.l.b16 %v29
  %v186 = vunpack.c.h.b16 %v29
  %v187 = vunpack.c.l.b16 %v30
  %v188 = vunpack.c.l.b16 %v31
  %v189 = vunpack.c.h.b16 %v31
  %v190 = vunpack.c.l.b16 %v32
  %v191 = vunpack.c.h.b16 %v32
  %v192 = vunpack.c.l.b16 %v33
  %v193 = vunpack.c.h.b16 %v33
  %v194 = vunpack.c.l.b16 %v34
  %v195 = vunpack.c.l.b16 %v35
  %v196 = vunpack.c.h.b16 %v35
  %v197 = vunpack.c.l.b16 %v36
  %v198 = vunpack.c.h.b16 %v36
  %v199 = vunpack.c.l.b16 %v37
  %v200 = vunpack.c.h.b16 %v37
  %v201 = vunpack.c.l.b16 %v38
  %v202 = vpack.c.b16 %v181, %v174
  %v203 = vpack.c.b16 %v182, %v175
  %v204 = vpack.c.b16 %v183, %v176
  %v205 = vpack.c.b16 %v184, %v177
  %v206 = vpack.c.b16 %v185, %v178
  %v207 = vpack.c.b16 %v186, %v179
  %v208 = vpack.c.b16 %v187, %v180
  %v209 = vpack.c.b16 %v195, %v188
  %v210 = vpack.c.b16 %v196, %v189
  %v211 = vpack.c.b16 %v197, %v190
  %v212 = vpack.c.b16 %v198, %v191
  %v213 = vpack.c.b16 %v199, %v192
  %v214 = vpack.c.b16 %v200, %v193
  %v215 = vpack.c.b16 %v201, %v194
  %v342 = vunpack.c.l.b16 %v39
  %v343 = vunpack.c.l.b16 %v40
  %v344 = vunpack.c.l.b16 %v41
  %v345 = vunpack.c.l.b16 %v42
  %v346 = vunpack.c.l.b16 %v43
  %v347 = vunpack.c.l.b16 %v44
  %v348 = vunpack.c.l.b16 %v45
  %v349 = vunpack.c.l.b16 %v46
  %v350 = vunpack.c.l.b16 %v47
  %v351 = vunpack.c.l.b16 %v48
  %v352 = vunpack.c.l.b16 %v49
  %v353 = vunpack.c.l.b16 %v50
  %v354 = vunpack.c.l.b16 %v51
  %v355 = vunpack.c.l.b16 %v52
  %v356 = vunpack.c.l.b16 %v53
  %v357 = vunpack.c.l.b16 %v54
  %v358 = vunpack.c.l.b16 %v55
  %v359 = vunpack.c.l.b16 %v56
  %v360 = vunpack.c.l.b16 %v57
  %v361 = vunpack.c.l.b16 %v58
  %v362 = vunpack.c.l.b16 %v59
  %v363 = vunpack.c.l.b16 %v60
  %v364 = vunpack.c.l.b16 %v61
  %v365 = vunpack.c.l.b16 %v62
  %v366 = vunpack.c.l.b16 %v63
  %v367 = vunpack.c.l.b16 %v64
  %v368 = vunpack.c.l.b16 %v65
  %v369 = vunpack.c.l.b16 %v66
  %v370 = vunpack.c.l.b16 %v67
  %v371 = vunpack.c.l.b16 %v68
  %v372 = vunpack.c.l.b16 %v69
  %v373 = vunpack.c.l.b16 %v70
  %v374 = vunpack.c.l.b16 %v71
  %v375 = vunpack.c.l.b16 %v72
  %v376 = vunpack.c.l.b16 %v73
  %v377 = vunpack.c.l.b16 %v74
  %v378 = vunpack.c.l.b16 %v75
  %v379 = vunpack.c.l.b16 %v76
  %v380 = vunpack.c.l.b16 %v77
  %v381 = vunpack.c.l.b16 %v78
  %v382 = vunpack.c.l.b16 %v79
  %v383 = vunpack.c.l.b16 %v80
  %v384 = vunpack.c.l.b16 %v81
  %v385 = vunpack.c.l.b16 %v82
  %v386 = vunpack.c.l.b16 %v83
  %v387 = vunpack.c.l.b16 %v84
  %v388 = vunpack.c.l.b16 %v85
  %v389 = vunpack.c.l.b16 %v86
  %v390 = vunpack.c.l.b16 %v87
  %v391 = vunpack.c.l.b16 %v88
  %v392 = vunpack.c.l.b16 %v89
  %v393 = vunpack.c.l.b16 %v90
  %v394 = vunpack.c.l.b16 %v91
  %v395 = vunpack.c.l.b16 %v92
  %v396 = vunpack.c.l.b16 %v93
  %v397 = vunpack.c.l.b16 %v94
  %v398 = vunpack.c.l.b16 %v95
  %v399 = vunpack.c.l.b16 %v96
  %v400 = vunpack.c.l.b16 %v97
  %v401 = vunpack.c.l.b16 %v98
  %v402 = vunpack.c.l.b16 %v99
  %v403 = vunpack.c.l.b16 %v100
  %v404 = vunpack.c.l.b16 %v101
  %v405 = vunpack.c.l.b16 %v102
  %v406 = vunpack.c.l.b16 %v103
  %v407 = vunpack.c.l.b16 %v104
  %v408 = vunpack.c.l.b16 %v105
  %v409 = vunpack.c.l.b16 %v106
  %v410 = vunpack.c.l.b16 %v107
  %v411 = vunpack.c.l.b16 %v108
  %v412 = vunpack.c.l.b16 %v109
  %v413 = vunpack.c.l.b16 %v110
  %v414 = vunpack.c.l.b16 %v111
  %v415 = vunpack.c.l.b16 %v112
  %v416 = vunpack.c.l.b16 %v113
  %v417 = vunpack.c.l.b16 %v114
  %v418 = vunpack.c.l.b16 %v115
  %v419 = vunpack.c.l.b16 %v116
  %v420 = vunpack.c.l.b16 %v117
  %v421 = vunpack.c.l.b16 %v118
  %v422 = vunpack.c.l.b16 %v119
  %v423 = vunpack.c.l.b16 %v120
  %v424 = vunpack.c.l.b16 %v121
  %v425 = vunpack.c.l.b16 %v122
  %v426 = vunpack.c.l.b16 %v123
  %v427 = vunpack.c.l.b16 %v124
  %v428 = vunpack.c.l.b16 %v125
  %v429 = vunpack.c.l.b16 %v126
  %v430 = vunpack.c.l.b16 %v127
  %v431 = vunpack.c.l.b16 %v128
  %v432 = vunpack.c.l.b16 %v129
  %v433 = vunpack.c.l.b16 %v130
  %v434 = vunpack.c.l.b16 %v131
  %v435 = vunpack.c.l.b16 %v132
  %v436 = vunpack.c.l.b16 %v133
  %v437 = vunpack.c.l.b16 %v134
  %v438 = vunpack.c.l.b16 %v135
  %v439 = vunpack.c.l.b16 %v136
  %v440 = vunpack.c.l.b16 %v137
  %v441 = vunpack.c.l.b16 %v138
  %v442 = vunpack.c.l.b16 %v139
  %v443 = vunpack.c.l.b16 %v140
  %v444 = vunpack.c.l.b16 %v141
  %v445 = vunpack.c.l.b16 %v142
  %v446 = vunpack.c.l.b16 %v143
  %v447 = vunpack.c.l.b16 %v144
  %v448 = vunpack.c.l.b16 %v145
  %v449 = vunpack.c.l.b16 %v146
  %v450 = vunpack.c.l.b16 %v147
  %v451 = vunpack.c.l.b16 %v148
  %v452 = vunpack.c.l.b16 %v149
  %v453 = vunpack.c.l.b16 %v150
  %v454 = vpack.c.b16 %v343, %v342
  %v455 = vpack.c.b16 %v345, %v344
  %v456 = vpack.c.b16 %v347, %v346
  %v457 = vpack.c.b16 %v349, %v348
  %v458 = vpack.c.b16 %v351, %v350
  %v459 = vpack.c.b16 %v353, %v352
  %v460 = vpack.c.b16 %v355, %v354
  %v461 = vpack.c.b16 %v357, %v356
  %v462 = vpack.c.b16 %v359, %v358
  %v463 = vpack.c.b16 %v361, %v360
  %v464 = vpack.c.b16 %v363, %v362
  %v465 = vpack.c.b16 %v365, %v364
  %v466 = vpack.c.b16 %v367, %v366
  %v467 = vpack.c.b16 %v369, %v368
  %v468 = vpack.c.b16 %v371, %v370
  %v469 = vpack.c.b16 %v373, %v372
  %v470 = vpack.c.b16 %v375, %v374
  %v471 = vpack.c.b16 %v377, %v376
  %v472 = vpack.c.b16 %v379, %v378
  %v473 = vpack.c.b16 %v381, %v380
  %v474 = vpack.c.b16 %v383, %v382
  %v475 = vpack.c.b16 %v385, %v384
  %v476 = vpack.c.b16 %v387, %v386
  %v477 = vpack.c.b16 %v389, %v388
  %v478 = vpack.c.b16 %v391, %v390
  %v479 = vpack.c.b16 %v393, %v392
  %v480 = vpack.c.b16 %v395, %v394
  %v481 = vpack.c.b16 %v397, %v396
  %v482 = vpack.c.b16 %v399, %v398
  %v483 = vpack.c.b16 %v401, %v400
  %v484 = vpack.c.b16 %v403, %v402
  %v485 = vpack.c.b16 %v405, %v404
  %v486 = vpack.c.b16 %v407, %v406
  %v487 = vpack.c.b16 %v409, %v408
  %v488 = vpack.c.b16 %v411, %v410
  %v489 = vpack.c.b16 %v413, %v412
  %v490 = vpack.c.b16 %v415, %v414
  %v491 = vpack.c.b16 %v417, %v416
  %v492 = vpack.c.b16 %v419, %v418
  %v493 = vpack.c.b16 %v421, %v420
  %v494 = vpack.c.b16 %v423, %v422
  %v495 = vpack.c.b16 %v425, %v424
  %v496 = vpack.c.b16 %v427, %v426
  %v497 = vpack.c.b16 %v429, %v428
  %v498 = vpack.c.b16 %v431, %v430
  %v499 = vpack.c.b16 %v433, %v432
  %v500 = vpack.c.b16 %v435, %v434
  %v501 = vpack.c.b16 %v437, %v436
  %v502 = vpack.c.b16 %v439, %v438
  %v503 = vpack.c.b16 %v441, %v440
  %v504 = vpack.c.b16 %v443, %v442
  %v505 = vpack.c.b16 %v445, %v444
  %v506 = vpack.c.b16 %v447, %v446
  %v507 = vpack.c.b16 %v449, %v448
  %v508 = vpack.c.b16 %v451, %v450
  %v509 = vpack.c.b16 %v453, %v452
  %566 = vmatprep.subr.bf16.mxu0 0
  %567 = vmatpush1.bf16.msra.mxu0 %v461
  %568 = vmatprep.subr.bf16.mxu0 0
  %569 = vmatpush1.bf16.msra.mxu0 %v460
  %570 = vmatprep.subr.bf16.mxu0 0
  %571 = vmatpush1.bf16.msra.mxu0 %v459
  %572 = vmatprep.subr.bf16.mxu0 0
  %573 = vmatpush1.bf16.msra.mxu0 %v458
  %574 = vmatprep.subr.bf16.mxu0 0
  %575 = vmatpush1.bf16.msra.mxu0 %v457
  %576 = vmatprep.subr.bf16.mxu0 0
  %577 = vmatpush1.bf16.msra.mxu0 %v456
  %578 = vmatprep.subr.bf16.mxu0 0
  %579 = vmatpush1.bf16.msra.mxu0 %v455
  %580 = vmatprep.subr.bf16.mxu0 0
  %581 = vmatpush1.bf16.msra.mxu0 %v454
  %582 = vmatprep.subr.bf16.mxu0 0
  %583 = vmatpush2.bf16.msra.mxu0 %v469
  %584 = vmatprep.subr.bf16.mxu0 0
  %585 = vmatpush2.bf16.msra.mxu0 %v468
  %586 = vmatprep.subr.bf16.mxu0 0
  %587 = vmatpush2.bf16.msra.mxu0 %v467
  %588 = vmatprep.subr.bf16.mxu0 0
  %589 = vmatpush2.bf16.msra.mxu0 %v466
  %590 = vmatprep.subr.bf16.mxu0 0
  %591 = vmatpush2.bf16.msra.mxu0 %v465
  %592 = vmatprep.subr.bf16.mxu0 0
  %593 = vmatpush2.bf16.msra.mxu0 %v464
  %594 = vmatprep.subr.bf16.mxu0 0
  %595 = vmatpush2.bf16.msra.mxu0 %v463
  %596 = vmatprep.subr.bf16.mxu0 0
  %597 = vmatpush2.bf16.msra.mxu0 %v462
  %598 = vmatprep.mubr.bf16.mxu0 %v203
  %599 = vmatmul.mubr.bf16.gmra.mxu0 %v202
  %v600 = vpop.f32.mrf.mxu0
  %v601 = vadd.f32 %v156, %v600
  %v602 = vpop.f32.mrf.mxu0
  %v603 = vpop.f32.mrf.mxu0
  %v604 = vadd.f32 %v156, %v603
  %v605 = vpop.f32.mrf.mxu0
  %606 = vmatprep.mubr.bf16.mxu0 %v210
  %607 = vmatmul.mubr.bf16.gmra.mxu0 %v209
  %v608 = vpop.f32.mrf.mxu0
  %v609 = vadd.f32 %v156, %v608
  %v610 = vpop.f32.mrf.mxu0
  %v611 = vpop.f32.mrf.mxu0
  %v612 = vadd.f32 %v156, %v611
  %v613 = vpop.f32.mrf.mxu0
  %614 = vdwg.mxu0
  %615 = vmatprep.subr.bf16.mxu0 0
  %616 = vmatpush1.bf16.msra.mxu0 %v477
  %617 = vmatprep.subr.bf16.mxu0 0
  %618 = vmatpush1.bf16.msra.mxu0 %v476
  %619 = vmatprep.subr.bf16.mxu0 0
  %620 = vmatpush1.bf16.msra.mxu0 %v475
  %621 = vmatprep.subr.bf16.mxu0 0
  %622 = vmatpush1.bf16.msra.mxu0 %v474
  %623 = vmatprep.subr.bf16.mxu0 0
  %624 = vmatpush1.bf16.msra.mxu0 %v473
  %625 = vmatprep.subr.bf16.mxu0 0
  %626 = vmatpush1.bf16.msra.mxu0 %v472
  %627 = vmatprep.subr.bf16.mxu0 0
  %628 = vmatpush1.bf16.msra.mxu0 %v471
  %629 = vmatprep.subr.bf16.mxu0 0
  %630 = vmatpush1.bf16.msra.mxu0 %v470
  %631 = vmatprep.subr.bf16.mxu0 0
  %632 = vmatpush2.bf16.msra.mxu0 %v485
  %633 = vmatprep.subr.bf16.mxu0 0
  %634 = vmatpush2.bf16.msra.mxu0 %v484
  %635 = vmatprep.subr.bf16.mxu0 0
  %636 = vmatpush2.bf16.msra.mxu0 %v483
  %637 = vmatprep.subr.bf16.mxu0 0
  %638 = vmatpush2.bf16.msra.mxu0 %v482
  %639 = vmatprep.subr.bf16.mxu0 0
  %640 = vmatpush2.bf16.msra.mxu0 %v481
  %641 = vmatprep.subr.bf16.mxu0 0
  %642 = vmatpush2.bf16.msra.mxu0 %v480
  %643 = vmatprep.subr.bf16.mxu0 0
  %644 = vmatpush2.bf16.msra.mxu0 %v479
  %645 = vmatprep.subr.bf16.mxu0 0
  %646 = vmatpush2.bf16.msra.mxu0 %v478
  %647 = vmatprep.mubr.bf16.mxu0 %v205
  %648 = vmatmul.mubr.bf16.gmra.mxu0 %v204
  %v649 = vpop.f32.mrf.mxu0
  %v650 = vadd.f32 %v601, %v649
  %v651 = vpop.f32.mrf.mxu0
  %v652 = vpop.f32.mrf.mxu0
  %v653 = vadd.f32 %v604, %v652
  %v654 = vpop.f32.mrf.mxu0
  %655 = vmatprep.mubr.bf16.mxu0 %v212
  %656 = vmatmul.mubr.bf16.gmra.mxu0 %v211
  %v657 = vpop.f32.mrf.mxu0
  %v658 = vadd.f32 %v609, %v657
  %v659 = vpop.f32.mrf.mxu0
  %v660 = vpop.f32.mrf.mxu0
  %v661 = vadd.f32 %v612, %v660
  %v662 = vpop.f32.mrf.mxu0
  %663 = vdwg.mxu0
  %664 = vmatprep.subr.bf16.mxu0 0
  %665 = vmatpush1.bf16.msra.mxu0 %v493
  %666 = vmatprep.subr.bf16.mxu0 0
  %667 = vmatpush1.bf16.msra.mxu0 %v492
  %668 = vmatprep.subr.bf16.mxu0 0
  %669 = vmatpush1.bf16.msra.mxu0 %v491
  %670 = vmatprep.subr.bf16.mxu0 0
  %671 = vmatpush1.bf16.msra.mxu0 %v490
  %672 = vmatprep.subr.bf16.mxu0 0
  %673 = vmatpush1.bf16.msra.mxu0 %v489
  %674 = vmatprep.subr.bf16.mxu0 0
  %675 = vmatpush1.bf16.msra.mxu0 %v488
  %676 = vmatprep.subr.bf16.mxu0 0
  %677 = vmatpush1.bf16.msra.mxu0 %v487
  %678 = vmatprep.subr.bf16.mxu0 0
  %679 = vmatpush1.bf16.msra.mxu0 %v486
  %680 = vmatprep.subr.bf16.mxu0 0
  %681 = vmatpush2.bf16.msra.mxu0 %v501
  %682 = vmatprep.subr.bf16.mxu0 0
  %683 = vmatpush2.bf16.msra.mxu0 %v500
  %684 = vmatprep.subr.bf16.mxu0 0
  %685 = vmatpush2.bf16.msra.mxu0 %v499
  %686 = vmatprep.subr.bf16.mxu0 0
  %687 = vmatpush2.bf16.msra.mxu0 %v498
  %688 = vmatprep.subr.bf16.mxu0 0
  %689 = vmatpush2.bf16.msra.mxu0 %v497
  %690 = vmatprep.subr.bf16.mxu0 0
  %691 = vmatpush2.bf16.msra.mxu0 %v496
  %692 = vmatprep.subr.bf16.mxu0 0
  %693 = vmatpush2.bf16.msra.mxu0 %v495
  %694 = vmatprep.subr.bf16.mxu0 0
  %695 = vmatpush2.bf16.msra.mxu0 %v494
  %696 = vmatprep.mubr.bf16.mxu0 %v207
  %697 = vmatmul.mubr.bf16.gmra.mxu0 %v206
  %v698 = vpop.f32.mrf.mxu0
  %v699 = vadd.f32 %v650, %v698
  %v700 = vpop.f32.mrf.mxu0
  %v701 = vpop.f32.mrf.mxu0
  %v702 = vadd.f32 %v653, %v701
  %v703 = vpop.f32.mrf.mxu0
  %704 = vmatprep.mubr.bf16.mxu0 %v214
  %705 = vmatmul.mubr.bf16.gmra.mxu0 %v213
  %v706 = vpop.f32.mrf.mxu0
  %v707 = vadd.f32 %v658, %v706
  %v708 = vpop.f32.mrf.mxu0
  %v709 = vpop.f32.mrf.mxu0
  %v710 = vadd.f32 %v661, %v709
  %v711 = vpop.f32.mrf.mxu0
  %712 = vdwg.mxu0
  %713 = vmatprep.subr.bf16.mxu0 0
  %714 = vmatpush1.bf16.msra.mxu0 %v509
  %715 = vmatprep.subr.bf16.mxu0 0
  %716 = vmatpush1.bf16.msra.mxu0 %v508
  %717 = vmatprep.subr.bf16.mxu0 0
  %718 = vmatpush1.bf16.msra.mxu0 %v507
  %719 = vmatprep.subr.bf16.mxu0 0
  %720 = vmatpush1.bf16.msra.mxu0 %v506
  %721 = vmatprep.subr.bf16.mxu0 0
  %722 = vmatpush1.bf16.msra.mxu0 %v505
  %723 = vmatprep.subr.bf16.mxu0 0
  %724 = vmatpush1.bf16.msra.mxu0 %v504
  %725 = vmatprep.subr.bf16.mxu0 0
  %726 = vmatpush1.bf16.msra.mxu0 %v503
  %727 = vmatprep.subr.bf16.mxu0 0
  %728 = vmatpush1.bf16.msra.mxu0 %v502
  %729 = vmatprep.subr.bf16.mxu0 0
  %730 = vmatpush2.bf16.msra.mxu0 0
  %731 = vmatprep.subr.bf16.mxu0 0
  %732 = vmatpush2.bf16.msra.mxu0 0
  %733 = vmatprep.subr.bf16.mxu0 0
  %734 = vmatpush2.bf16.msra.mxu0 0
  %735 = vmatprep.subr.bf16.mxu0 0
  %736 = vmatpush2.bf16.msra.mxu0 0
  %737 = vmatprep.subr.bf16.mxu0 0
  %738 = vmatpush2.bf16.msra.mxu0 0
  %739 = vmatprep.subr.bf16.mxu0 0
  %740 = vmatpush2.bf16.msra.mxu0 0
  %741 = vmatprep.subr.bf16.mxu0 0
  %742 = vmatpush2.bf16.msra.mxu0 0
  %743 = vmatprep.subr.bf16.mxu0 0
  %744 = vmatpush2.bf16.msra.mxu0 0
  %745 = vmatprep.mubr.bf16.mxu0 0
  %746 = vmatmul.mubr.bf16.gmra.mxu0 %v208
  %v747 = vpop.f32.mrf.mxu0
  %v748 = vadd.f32 %v699, %v747
  %v749 = vpop.f32.mrf.mxu0
  %v750 = vpop.f32.mrf.mxu0
  %v751 = vadd.f32 %v702, %v750
  %v752 = vpop.f32.mrf.mxu0
  %753 = vmatprep.mubr.bf16.mxu0 0
  %754 = vmatmul.mubr.bf16.gmra.mxu0 %v215
  %v755 = vpop.f32.mrf.mxu0
  %v756 = vadd.f32 %v707, %v755
  %v757 = vpop.f32.mrf.mxu0
  %v758 = vpop.f32.mrf.mxu0
  %v759 = vadd.f32 %v710, %v758
  %v760 = vpop.f32.mrf.mxu0
  %761 = vdwg.mxu0
  %vm762 = vcmp.ge.f32.partialorder %v748, 0.0
  %vm763 = vcmp.ge.f32.partialorder %v751, 0.0
  %vm764 = vcmp.ge.f32.partialorder %v756, 0.0
  %vm765 = vcmp.ge.f32.partialorder %v759, 0.0
  %v766 = vmul.f32 %v748, 0.2
  %v767 = vmul.f32 %v751, 0.2
  %v768 = vmul.f32 %v756, 0.2
  %v769 = vmul.f32 %v759, 0.2
  %v770 = vsel %vm762, %v748, %v766
  %v771 = vsel %vm763, %v751, %v767
  %v772 = vsel %vm764, %v756, %v768
  %v773 = vsel %vm765, %v759, %v769
  %v774 = vld [vmem:[%s3] sm:$0xff]
  %v775 = vld [vmem:[%s3 + $0x8] sm:$0xff]
  %v776 = vld [vmem:[%s3 + $0x10] sm:$0xff]
  %v777 = vld [vmem:[%s3 + $0x18] sm:$0xff]
  %v778 = vmul.f32 %v770, %v774
  %v779 = vmul.f32 %v771, %v775
  %v780 = vmul.f32 %v772, %v776
  %v781 = vmul.f32 %v773, %v777
  %vm782 = vcmask 523264
  %v783 = vsel %vm782, %v778, 0.0
  %784 = vadd.xlane.f32.xlu0 %v783
  %v785 = vpop.xlane.xlu0 %784
  %v786 = vsel %vm782, %v779, 0.0
  %787 = vadd.xlane.f32.xlu0 %v786
  %v788 = vpop.xlane.xlu0 %787
  %v789 = vsel %vm782, %v780, 0.0
  %790 = vadd.xlane.f32.xlu0 %v789
  %v791 = vpop.xlane.xlu0 %790
  %v792 = vsel %vm782, %v781, 0.0
  %793 = vadd.xlane.f32.xlu0 %v792
  %v794 = vpop.xlane.xlu0 %793
  %v799 = vlaneseq
  %v800 = vand.u32 %v799, 127
  %v801 = vlaneseq
  %v802 = vshrl.u32 %v801, 7
  %v803 = vsub.s32 %v800, %v802
  %v804 = vrot.slane %v785, %v803
  %v805 = vadd.s32 %v800, 4294967288
  %v806 = vlaneseq
  %v807 = vshrl.u32 %v806, 7
  %v808 = vsub.s32 %v805, %v807
  %v809 = vrot.slane %v788, %v808
  %vm810 = vcmask 130112
  %v811 = vsel %vm810, %v809, %v804
  %v812 = vlaneseq
  %v813 = vshrl.u32 %v812, 7
  %v814 = vsub.s32 %v800, %v813
  %v815 = vrot.slane %v791, %v814
  %v816 = vlaneseq
  %v817 = vshrl.u32 %v816, 7
  %v818 = vsub.s32 %v805, %v817
  %v819 = vrot.slane %v794, %v818
  %v820 = vsel %vm810, %v819, %v815
  %vm821 = vcmask 1041409
  %v822 = vsel %vm821, %v820, %v811
  %vm824 = vcmask 123904
  %v825 = vsel %vm824, %v822, 0.0
  %826 = vadd.xlane.f32.xlu0 %v825
  %v827 = vpop.xlane.xlu0 %826
  %v828 = vld [vmem:[#allocation2] sm:$0x1]
  %v830 = vlaneseq
  %v831 = vshrl.u32 %v830, 7
  %v832 = vsub.s32 0, %v831
  %v833 = vrot.slane %v828, %v832
  %v835 = vadd.f32 %v827, %v833
  %v836 = vand.u32 2147483647, %v835
  %v837 = vsub.f32 0.0, %v836
  %v838 = vmul.f32 %v837, 1.442695
  %v839 = vpow.pop %v838
  %vm840 = vcmp.ge.f32.partialorder %v835, 0.0
  %v841 = vadd.f32 %v839, 1.0
  %v842 = vrcp.pop %v841
  %v843 = vmul.f32 1.0, %v842
  %v844 = vmul.f32 %v839, %v842
  %v845 = vsel %vm840, %v843, %v844
  %vm846 = vcmask 1024
  %847 = vst.msk [vmem:[%s5] sm:$0x3] %vm846, %v845
  // Predicated region
  $region22: #{_lambda_.7} parent=0 // pred_check
    _
  $region23: #{_lambda_.7} parent=0 // pred_check_branch
    %849 = sbr.rel (0) target = $region25
  $region24: #{_lambda_.7} parent=0 // pred_region
    _
  $region25: #{_lambda_.7} parent=0 // pred_fallthru
    _
  // Predicated region
  $region26: #{_lambda_.7} parent=0 // pred_check
    _
  $region27: #{_lambda_.7} parent=0 // pred_check_branch
    %851 = sbr.rel (0) target = $region29
  $region28: #{_lambda_.7} parent=0 // pred_region
    _
  $region29: #{_lambda_.7} parent=0 // pred_fallthru
    _

</llo_original>
